<compile_context>
chip_gen: v7x
topology: tpu7x:2x2x1
jax: 0.10.0
libtpu: 0.0.40
codegen_flags: <defaults>
</compile_context>

<pallas_src>
import functools
import numpy as np
import jax
import jax.numpy as jnp
from jax.experimental import pallas as pl
from jax.experimental.pallas import tpu as pltpu

# ---------------- config (small synthetic shapes) -----------------
B = 2            # batch
Z_DIM = 32       # latent dim (real EG3D: 512)
C_DIM = 16       # camera conditioning dim (real EG3D: 25)
W_DIM = 32       # style dim
NUM_WS = 3       # number of per-layer styles
C0 = 8           # const-input channels
C1 = 16          # feature channels
H = W = 16       # image resolution
HW = H * W
CLIP_DIM = 32    # synthetic CLIP embedding dim
POOL_Q = (H // 4) * (W // 4)           # 16 pooled positions per channel
FEAT_DIM = 3 * POOL_Q                  # pooled CLIP feature size = 48
LRELU_SLOPE = 0.2
LRELU_GAIN = float(np.sqrt(2.0))
NOISE_STRENGTH = 0.1


# =============================== Pallas kernel ================================

def _lrelu(x):
    return jnp.where(x >= 0.0, x, LRELU_SLOPE * x) * LRELU_GAIN


def _bdot(a, b):
    """bf16 MXU matmul with f32 accumulation (weights are stored bf16 at init)."""
    return jnp.dot(a.astype(jnp.bfloat16), b.astype(jnp.bfloat16),
                   preferred_element_type=jnp.float32)


def _fused_zssgan_kernel(
        # grid-invariant latents / mapping params (frozen generator's mapping)
        z_ref, c_ref, wlat_ref,
        cw_ref, cb_ref, f0z_ref, f0c_ref, f0b_ref, f1w_ref, f1b_ref, wavg_ref,
        # per-branch synthesis params (leading branch axis blocked to 1)
        const_ref,
        a0w_ref, a0b_ref, c0w_ref, c0b_ref,
        a1w_ref, a1b_ref, c1w_ref, c1b_ref,
        arw_ref, arb_ref, rw_ref, rb_ref,
        noise_ref,
        # grid-invariant CLIP params (pool matrix + 2 models)
        pool_ref, p0w_ref, p0b_ref, t0_ref, p1w_ref, p1b_ref, t1_ref,
        # outputs
        img_ref, loss_ref,
        # scratch (persists across the 2 grid steps)
        emb_sc,
        *, use_mapping, use_noise, truncation, noise_strength, model_weights):
    """grid=(2,): step 0 = frozen branch, step 1 = trainable branch + loss."""
    f32 = jnp.float32
    g = pl.program_id(0)
    bsz = z_ref.shape[1]
    hw = const_ref.shape[2]

    # ---------- mapping MLP: (z, c) -> w, channel-major (W_DIM, B) ----------
    if use_mapping:
        z = z_ref[...]                                                  # (Z_DIM, B)
        z = z * jax.lax.rsqrt(jnp.mean(z * z, axis=0, keepdims=True) + 1e-8)
        ce = _bdot(cw_ref[...], c_ref[...]) + cb_ref[...]               # (W_DIM, B)
        ce = ce * jax.lax.rsqrt(jnp.mean(ce * ce, axis=0, keepdims=True) + 1e-8)
        h = _bdot(f0z_ref[...], z) + _bdot(f0c_ref[...], ce) + f0b_ref[...]
        h = _lrelu(h)
        wv = _bdot(f1w_ref[...], h) + f1b_ref[...]
        wv = _lrelu(wv)
        wa = wavg_ref[...]
        wv = wa + truncation * (wv - wa)          # truncation psi (0.7, as in style())
        w0 = w1 = w2 = wv
    else:
        wl = wlat_ref[...]                        # (NUM_WS, W_DIM, B)
        w0, w1, w2 = wl[0], wl[1], wl[2]

    # ---------- per-layer style affines for the whole batch ----------
    a0w = a0w_ref[0]; a1w = a1w_ref[0]; arw = arw_ref[0]
    c0w = c0w_ref[0]; c1w = c1w_ref[0]; rw = rw_ref[0]
    s0 = _bdot(a0w, w0) + a0b_ref[0]              # (C0, B)
    s1 = _bdot(a1w, w1) + a1b_ref[0]              # (C1, B)
    s2 = _bdot(arw, w2) + arb_ref[0]              # (C1, B)

    # demod: d[o,b] = rsqrt(sum_i W[o,i]^2 s[i,b]^2 + eps)  (kept f32; tiny dot)
    c0wf = c0w.astype(f32); c1wf = c1w.astype(f32)
    d0 = jax.lax.rsqrt(jnp.dot(c0wf * c0wf, s0 * s0,
                               preferred_element_type=f32) + 1e-8)      # (C1, B)
    d1 = jax.lax.rsqrt(jnp.dot(c1wf * c1wf, s1 * s1,
                               preferred_element_type=f32) + 1e-8)      # (C1, B)

    # ---------- lane-batched synthesis: ONE dot per layer over (C, B*HW) ----------
    def lane_cat(cols):                           # [(C,1)]*B -> (C, B*HW)
        return jnp.concatenate(
            [jnp.broadcast_to(col, (col.shape[0], hw)) for col in cols], axis=1)

    scat0 = lane_cat([s0[:, b:b + 1] for b in range(bsz)])
    dcat0 = lane_cat([d0[:, b:b + 1] for b in range(bsz)])
    scat1 = lane_cat([s1[:, b:b + 1] for b in range(bsz)])
    dcat1 = lane_cat([d1[:, b:b + 1] for b in range(bsz)])
    scat2 = lane_cat([s2[:, b:b + 1] for b in range(bsz)])
    cst2 = jnp.concatenate([const_ref[0]] * bsz, axis=1)                # (C0, B*HW)

    nz = noise_ref[0]                                                   # (2, B*HW)

    # conv0: modulate, 1x1 conv, demodulate, per-pixel noise, leaky-relu
    y = _bdot(c0w, cst2 * scat0)                                        # (C1, B*HW)
    y = y * dcat0 + c0b_ref[0]
    if use_noise:
        y = y + noise_strength * nz[0:1, :]
    x = _lrelu(y)
    # conv1
    y = _bdot(c1w, x * scat1)                                           # (C1, B*HW)
    y = y * dcat1 + c1b_ref[0]
    if use_noise:
        y = y + noise_strength * nz[1:2, :]
    x = _lrelu(y)
    # toRGB: modulated, no demodulation / noise / activation
    rgb = _bdot(rw, x * scat2) + rb_ref[0]                              # (3, B*HW)

    # write the image block (channel-major -> reshapes straight to NCHW outside)
    for b in range(bsz):
        img_ref[0, b] = rgb[:, b * hw:(b + 1) * hw]

    # ---------- fused CLIP features: 4x4 pool + flatten as one matmul ----------
    rows = []
    for b in range(bsz):
        rows.append(jnp.concatenate(
            [rgb[ch:ch + 1, b * hw:(b + 1) * hw] for ch in range(3)], axis=1))
    img_rows = jnp.concatenate(rows, axis=0)                            # (B, 3*HW)
    feats = _bdot(img_rows, pool_ref[...])                              # (B, FEAT_DIM)

    def embed(pw_ref, pb_ref):
        e = _bdot(feats, pw_ref[...]) + pb_ref[...]                     # (B, CLIP_DIM)
        return e * jax.lax.rsqrt(jnp.sum(e * e, axis=-1, keepdims=True) + 1e-8)

    e0 = embed(p0w_ref, p0b_ref)
    e1 = embed(p1w_ref, p1b_ref)

    @pl.when(g == 0)                              # frozen branch: stash embeddings
    def _():
        emb_sc[0] = e0
        emb_sc[1] = e1
        loss_ref[...] = jnp.zeros_like(loss_ref)

    @pl.when(g == pl.num_programs(0) - 1)         # trainable branch: directional loss
    def _():
        total = jnp.zeros((1, 1), f32)
        for m, (et, t_ref, mw) in enumerate(((e0, t0_ref, model_weights[0]),
                                             (e1, t1_ref, model_weights[1]))):
            ef = emb_sc[m]                        # frozen-branch embedding (B, CLIP_DIM)
            d = et - ef
            d = d * jax.lax.rsqrt(jnp.sum(d * d, axis=-1, keepdims=True) + 1e-8)
            cos = jnp.sum(d * t_ref[...], axis=-1, keepdims=True)       # (B, 1)
            total = total + mw * jnp.mean(1.0 - cos, keepdims=True)     # (1, 1)
        loss_ref[...] = total


def pallas_zssgan_forward(z_cm, c_cm, wlat_cm, noise, map_consts, synth_consts,
                          pool_big, clip_consts, *, use_mapping, use_noise,
                          truncation, model_weights):
    """ONE fused pallas_call: mapping + both synthesis branches + CLIP loss."""
    bsz = z_cm.shape[1]

    def const_spec(a):
        nd = a.ndim
        return pl.BlockSpec(a.shape, lambda g, _n=nd: (0,) * _n)

    def branch_spec(a):
        nd = a.ndim
        return pl.BlockSpec((1,) + a.shape[1:],
                            lambda g, _n=nd: (g,) + (0,) * (_n - 1))

    invariant = (z_cm, c_cm, wlat_cm) + tuple(map_consts)
    per_branch = tuple(synth_consts) + (noise,)
    clip_all = (pool_big,) + tuple(clip_consts)

    in_specs = ([const_spec(a) for a in invariant]
                + [branch_spec(a) for a in per_branch]
                + [const_spec(a) for a in clip_all])

    out_shape = (jax.ShapeDtypeStruct((2, bsz, 3, HW), jnp.float32),
                 jax.ShapeDtypeStruct((1, 1), jnp.float32))
    out_specs = (pl.BlockSpec((1, bsz, 3, HW), lambda g: (g, 0, 0, 0)),
                 pl.BlockSpec((1, 1), lambda g: (0, 0)))

    imgs_cm, loss = pl.pallas_call(
        functools.partial(_fused_zssgan_kernel,
                          use_mapping=bool(use_mapping),
                          use_noise=bool(use_noise),
                          truncation=float(truncation),
                          noise_strength=NOISE_STRENGTH,
                          model_weights=tuple(float(w) for w in model_weights)),
        grid=(2,),
        out_shape=out_shape,
        in_specs=in_specs,
        out_specs=out_specs,
        scratch_shapes=[pltpu.VMEM((2, bsz, CLIP_DIM), jnp.float32)],
        # The branch axis carries frozen-branch CLIP embeddings (VMEM scratch) into
        # step 1 and revisits the loss block, so it must be sequential ("arbitrary").
        # On v7x, CORE_PARALLEL would conflict with this fusion -> we keep fusion.
        compiler_params=pltpu.CompilerParams(dimension_semantics=("arbitrary",)),
    )(*invariant, *per_branch, *clip_all)
    return imgs_cm, loss


# =============================== parameter init ===============================

def _init_generator_params(key, scale=0.1):
    ks = iter(jax.random.split(key, 24))

    def rnd(shape, s=scale):
        return (s * jax.random.normal(next(ks), shape)).astype(jnp.float32)

    return {
        # mapping network
        "c_w": rnd((C_DIM, W_DIM)), "c_b": jnp.zeros((1, W_DIM), jnp.float32),
        "fc0_w": rnd((Z_DIM + W_DIM, W_DIM)), "fc0_b": jnp.zeros((1, W_DIM), jnp.float32),
        "fc1_w": rnd((W_DIM, W_DIM)), "fc1_b": jnp.zeros((1, W_DIM), jnp.float32),
        "w_avg": rnd((1, W_DIM)),
        # synthesis network
        "const": rnd((HW, C0)),
        "aff0_w": rnd((W_DIM, C0)), "aff0_b": jnp.ones((1, C0), jnp.float32),
        "conv0_w": rnd((C0, C1)), "conv0_b": jnp.zeros((1, C1), jnp.float32),
        "aff1_w": rnd((W_DIM, C1)), "aff1_b": jnp.ones((1, C1), jnp.float32),
        "conv1_w": rnd((C1, C1)), "conv1_b": jnp.zeros((1, C1), jnp.float32),
        "affrgb_w": rnd((W_DIM, C1)), "affrgb_b": jnp.ones((1, C1), jnp.float32),
        "rgb_w": rnd((C1, 3)), "rgb_b": jnp.zeros((1, 3), jnp.float32),
    }


def _init_clip_params(key):
    k0, k1, k2 = jax.random.split(key, 3)
    return {
        "proj_w": (0.1 * jax.random.normal(k0, (FEAT_DIM, CLIP_DIM))).astype(jnp.float32),
        "proj_b": jnp.zeros((1, CLIP_DIM), jnp.float32),
        "src": jax.random.normal(k1, (1, CLIP_DIM), dtype=jnp.float32),  # source text emb
        "tgt": jax.random.normal(k2, (1, CLIP_DIM), dtype=jnp.float32),  # target text emb
    }


def _make_pool_matrix():
    """Block-diagonal (3*HW, FEAT_DIM) matrix: 4x4 average pool + channel-major flatten.

    Feature ordering matches img.reshape(B,3,H//4,4,W//4,4).mean((3,5)).reshape(B,-1).
    """
    pool = np.zeros((HW, POOL_Q), np.float32)
    for h in range(H):
        for w in range(W):
            pool[h * W + w, (h // 4) * (W // 4) + (w // 4)] = 1.0 / 16.0
    big = np.zeros((3 * HW, FEAT_DIM), np.float32)
    for ch in range(3):
        big[ch * HW:(ch + 1) * HW, ch * POOL_Q:(ch + 1) * POOL_Q] = pool
    return jnp.asarray(big, dtype=jnp.bfloat16)


# =============================== ZSSGAN model =================================

# order of the stacked (frozen, trainable) synthesis params fed to the fused kernel
_SYNTH_NAMES = ("const", "aff0_w", "aff0_b", "conv0_w", "conv0_b",
                "aff1_w", "aff1_b", "conv1_w", "conv1_b",
                "affrgb_w", "affrgb_b", "rgb_w", "rgb_b")
# weight matrices stored bf16 (MXU-native); biases / const stay f32
_SYNTH_BF16 = {"aff0_w", "conv0_w", "aff1_w", "conv1_w", "affrgb_w", "rgb_w"}


class ZSSGANPallas:
    """Synthetic ZSSGAN (EG3D) forward: frozen + trainable generator + CLIP loss."""

    def __init__(self, key):
        kf, kt, kc0, kc1 = jax.random.split(key, 4)
        self.frozen = _init_generator_params(kf)
        # trainable generator starts from the same checkpoint, slightly perturbed
        self.trainable = {
            k: v + 0.01 * jax.random.normal(jax.random.fold_in(kt, i), v.shape,
                                            dtype=jnp.float32)
            for i, (k, v) in enumerate(self.frozen.items())
        }
        self.clip_models = ["ViT-B/32", "ViT-B/16"]
        self.clip_model_weights = {"ViT-B/32": 1.0, "ViT-B/16": 0.5}
        self.clip_params = {"ViT-B/32": _init_clip_params(kc0),
                            "ViT-B/16": _init_clip_params(kc1)}
        # canonical front camera (cal_canonical_c): identity extrinsics, flattened
        self.c_front = jnp.eye(4, dtype=jnp.float32).reshape(1, C_DIM)

        bf = jnp.bfloat16
        fz = self.frozen
        # Mapping constants (frozen generator only), channel-major, bf16 weights.
        self._map_consts = (
            fz["c_w"].T.astype(bf),                 # (W_DIM, C_DIM)
            fz["c_b"].T,                            # (W_DIM, 1)
            fz["fc0_w"][:Z_DIM, :].T.astype(bf),    # (W_DIM, Z_DIM)   (z half)
            fz["fc0_w"][Z_DIM:, :].T.astype(bf),    # (W_DIM, W_DIM)   (c-emb half)
            fz["fc0_b"].T,                          # (W_DIM, 1)
            fz["fc1_w"].T.astype(bf),               # (W_DIM, W_DIM)
            fz["fc1_b"].T,                          # (W_DIM, 1)
            fz["w_avg"].T,                          # (W_DIM, 1)
        )

        # Stacked (frozen, trainable) synthesis params, pre-transposed to channel-major
        # (weights (Cout, Cin) bf16, biases (C, 1) f32, const (C0, HW) f32).
        def stk(name):
            a = jnp.stack([self.frozen[name].T, self.trainable[name].T])
            return a.astype(bf) if name in _SYNTH_BF16 else a
        self._synth_consts = tuple(stk(n) for n in _SYNTH_NAMES)

        # CLIP constants: pooling matrix, bf16 projections, pre-normalized text dirs.
        self._pool_big = _make_pool_matrix()

        def clip_consts(p):
            tdir = (p["tgt"] - p["src"]).astype(jnp.float32)
            tdir = tdir * jax.lax.rsqrt(jnp.sum(tdir * tdir, axis=-1, keepdims=True) + 1e-8)
            return (p["proj_w"].astype(bf), p["proj_b"], tdir)
        self._clip_consts = (clip_consts(self.clip_params["ViT-B/32"])
                             + clip_consts(self.clip_params["ViT-B/16"]))

    # ---- ZSSGAN.forward ----
    def forward(self, styles, labels=None, truncation=1, input_is_latent=False,
                randomize_noise=True, noise_key=None):
        z = styles[0] if isinstance(styles, (list, tuple)) else styles
        bsz = z.shape[0]
        c = labels if labels is not None else self.c_front
        c = jnp.broadcast_to(c, (bsz, C_DIM))                 # c.repeat(B, 1)
        if noise_key is None:
            noise_key = jax.random.PRNGKey(1)

        # TODO(synk): training-time determine_opt_layers() (inner torch-SGD loop that
        # selects which layers get gradients) does not change forward outputs; omitted.
        if input_is_latent:
            wlat_cm = jnp.transpose(z.astype(jnp.float32), (1, 2, 0))   # (NUM_WS, W_DIM, B)
            z_cm = jnp.zeros((Z_DIM, bsz), jnp.float32)
        else:
            # NOTE: like the PyTorch code, the mapping uses its own psi=0.7 default;
            # the forward() `truncation` argument is ignored by the EG3D synthesis path.
            wlat_cm = jnp.zeros((NUM_WS, W_DIM, bsz), jnp.float32)
            z_cm = jnp.transpose(z.astype(jnp.float32))                 # (Z_DIM, B)
        c_cm = jnp.transpose(c.astype(jnp.float32))                     # (C_DIM, B)

        if randomize_noise:
            # Fresh per-pixel noise per branch / layer (noise_mode='random').  Drawn
            # outside the kernel because pltpu.prng_* has no interpret/CPU lowering.
            noise = jax.random.normal(noise_key, (2, 2, bsz * HW), dtype=jnp.float32)
        else:
            # TODO(synk): noise_mode='const' uses StyleGAN's registered const noise
            # buffers; approximated here as zero noise.
            noise = jnp.zeros((2, 2, bsz * HW), jnp.float32)

        weights = [self.clip_model_weights[m] for m in self.clip_models]
        imgs_cm, loss = pallas_zssgan_forward(
            z_cm, c_cm, wlat_cm, noise,
            self._map_consts, self._synth_consts, self._pool_big, self._clip_consts,
            use_mapping=not input_is_latent, use_noise=bool(randomize_noise),
            truncation=0.7, model_weights=weights)

        imgs_nchw = imgs_cm.reshape(2, bsz, 3, H, W)          # channel-major -> NCHW, no transpose
        frozen_img = jax.lax.stop_gradient(imgs_nchw[0])      # torch.no_grad() branch
        trainable_img = imgs_nchw[1]
        # TODO(synk): args.sg3/sgxl extra-noise branch (frozen_img += 0.0005*randn) skipped.
        return [frozen_img, trainable_img], loss[0, 0]


# ================================== main ======================================

if __name__ == "__main__":
    key = jax.random.PRNGKey(0)
    k_model, k_z, k_noise = jax.random.split(key, 3)

    model = ZSSGANPallas(k_model)
    z = jax.random.normal(k_z, (B, Z_DIM), dtype=jnp.float32)

    fwd = jax.jit(lambda zz, nk: model.forward([zz], randomize_noise=True,
                                               noise_key=nk))
    imgs, clip_loss = fwd(z, k_noise)
    frozen_img, trainable_img = imgs

    jax.block_until_ready(frozen_img)
    jax.block_until_ready(trainable_img)
    jax.block_until_ready(clip_loss)

    assert frozen_img.shape == (B, 3, H, W)
    assert trainable_img.shape == (B, 3, H, W)
    assert frozen_img.dtype == jnp.float32
    assert clip_loss.shape == ()
    assert bool(jnp.isfinite(clip_loss))
    assert bool(jnp.all(jnp.isfinite(frozen_img)))
    assert bool(jnp.all(jnp.isfinite(trainable_img)))

    print("KERNEL_OK")
</pallas_src>

<mosaic_0001>
module attributes {stable_mosaic.version = 11 : i64} {
  func.func @_fused_zssgan_kernel(%arg0: i32, %arg1: memref<32x2xf32, #tpu.memory_space<vmem>>, %arg2: memref<16x2xf32, #tpu.memory_space<vmem>>, %arg3: memref<3x32x2xf32, #tpu.memory_space<vmem>>, %arg4: memref<32x16xbf16, #tpu.memory_space<vmem>>, %arg5: memref<32x1xf32, #tpu.memory_space<vmem>>, %arg6: memref<32x32xbf16, #tpu.memory_space<vmem>>, %arg7: memref<32x32xbf16, #tpu.memory_space<vmem>>, %arg8: memref<32x1xf32, #tpu.memory_space<vmem>>, %arg9: memref<32x32xbf16, #tpu.memory_space<vmem>>, %arg10: memref<32x1xf32, #tpu.memory_space<vmem>>, %arg11: memref<32x1xf32, #tpu.memory_space<vmem>>, %arg12: memref<1x8x256xf32, #tpu.memory_space<vmem>>, %arg13: memref<1x8x32xbf16, #tpu.memory_space<vmem>>, %arg14: memref<1x8x1xf32, #tpu.memory_space<vmem>>, %arg15: memref<1x16x8xbf16, #tpu.memory_space<vmem>>, %arg16: memref<1x16x1xf32, #tpu.memory_space<vmem>>, %arg17: memref<1x16x32xbf16, #tpu.memory_space<vmem>>, %arg18: memref<1x16x1xf32, #tpu.memory_space<vmem>>, %arg19: memref<1x16x16xbf16, #tpu.memory_space<vmem>>, %arg20: memref<1x16x1xf32, #tpu.memory_space<vmem>>, %arg21: memref<1x16x32xbf16, #tpu.memory_space<vmem>>, %arg22: memref<1x16x1xf32, #tpu.memory_space<vmem>>, %arg23: memref<1x3x16xbf16, #tpu.memory_space<vmem>>, %arg24: memref<1x3x1xf32, #tpu.memory_space<vmem>>, %arg25: memref<1x2x512xf32, #tpu.memory_space<vmem>>, %arg26: memref<768x48xbf16, #tpu.memory_space<vmem>>, %arg27: memref<48x32xbf16, #tpu.memory_space<vmem>>, %arg28: memref<1x32xf32, #tpu.memory_space<vmem>>, %arg29: memref<1x32xf32, #tpu.memory_space<vmem>>, %arg30: memref<48x32xbf16, #tpu.memory_space<vmem>>, %arg31: memref<1x32xf32, #tpu.memory_space<vmem>>, %arg32: memref<1x32xf32, #tpu.memory_space<vmem>>, %arg33: memref<1x2x3x256xf32, #tpu.memory_space<vmem>>, %arg34: memref<1x1xf32, #tpu.memory_space<vmem>>, %arg35: memref<2x2x32xf32, #tpu.memory_space<vmem>>) attributes {dimension_semantics = [#tpu.dimension_semantics<arbitrary>], iteration_bounds = array<i64: 2>, scalar_prefetch = 0 : i64, scratch_operands = 1 : i64, tpu.core_type = #tpu.core_type<tc>, window_params = [{pipeline_mode = #tpu.pipeline_mode<synchronous>, transform_indices = @transform_0, window_bounds = array<i64: 32, 2>}, {pipeline_mode = #tpu.pipeline_mode<synchronous>, transform_indices = @transform_1, window_bounds = array<i64: 16, 2>}, {pipeline_mode = #tpu.pipeline_mode<synchronous>, transform_indices = @transform_2, window_bounds = array<i64: 3, 32, 2>}, {pipeline_mode = #tpu.pipeline_mode<synchronous>, transform_indices = @transform_3, window_bounds = array<i64: 32, 16>}, {pipeline_mode = #tpu.pipeline_mode<synchronous>, transform_indices = @transform_4, window_bounds = array<i64: 32, 1>}, {pipeline_mode = #tpu.pipeline_mode<synchronous>, transform_indices = @transform_5, window_bounds = array<i64: 32, 32>}, {pipeline_mode = #tpu.pipeline_mode<synchronous>, transform_indices = @transform_6, window_bounds = array<i64: 32, 32>}, {pipeline_mode = #tpu.pipeline_mode<synchronous>, transform_indices = @transform_7, window_bounds = array<i64: 32, 1>}, {pipeline_mode = #tpu.pipeline_mode<synchronous>, transform_indices = @transform_8, window_bounds = array<i64: 32, 32>}, {pipeline_mode = #tpu.pipeline_mode<synchronous>, transform_indices = @transform_9, window_bounds = array<i64: 32, 1>}, {pipeline_mode = #tpu.pipeline_mode<synchronous>, transform_indices = @transform_10, window_bounds = array<i64: 32, 1>}, {transform_indices = @transform_11, window_bounds = array<i64: 1, 8, 256>}, {transform_indices = @transform_12, window_bounds = array<i64: 1, 8, 32>}, {transform_indices = @transform_13, window_bounds = array<i64: 1, 8, 1>}, {transform_indices = @transform_14, window_bounds = array<i64: 1, 16, 8>}, {transform_indices = @transform_15, window_bounds = array<i64: 1, 16, 1>}, {transform_indices = @transform_16, window_bounds = array<i64: 1, 16, 32>}, {transform_indices = @transform_17, window_bounds = array<i64: 1, 16, 1>}, {transform_indices = @transform_18, window_bounds = array<i64: 1, 16, 16>}, {transform_indices = @transform_19, window_bounds = array<i64: 1, 16, 1>}, {transform_indices = @transform_20, window_bounds = array<i64: 1, 16, 32>}, {transform_indices = @transform_21, window_bounds = array<i64: 1, 16, 1>}, {transform_indices = @transform_22, window_bounds = array<i64: 1, 3, 16>}, {transform_indices = @transform_23, window_bounds = array<i64: 1, 3, 1>}, {transform_indices = @transform_24, window_bounds = array<i64: 1, 2, 512>}, {pipeline_mode = #tpu.pipeline_mode<synchronous>, transform_indices = @transform_25, window_bounds = array<i64: 768, 48>}, {pipeline_mode = #tpu.pipeline_mode<synchronous>, transform_indices = @transform_26, window_bounds = array<i64: 48, 32>}, {pipeline_mode = #tpu.pipeline_mode<synchronous>, transform_indices = @transform_27, window_bounds = array<i64: 1, 32>}, {pipeline_mode = #tpu.pipeline_mode<synchronous>, transform_indices = @transform_28, window_bounds = array<i64: 1, 32>}, {pipeline_mode = #tpu.pipeline_mode<synchronous>, transform_indices = @transform_29, window_bounds = array<i64: 48, 32>}, {pipeline_mode = #tpu.pipeline_mode<synchronous>, transform_indices = @transform_30, window_bounds = array<i64: 1, 32>}, {pipeline_mode = #tpu.pipeline_mode<synchronous>, transform_indices = @transform_31, window_bounds = array<i64: 1, 32>}, {transform_indices = @transform_32, window_bounds = array<i64: 1, 2, 3, 256>}, {pipeline_mode = #tpu.pipeline_mode<synchronous>, transform_indices = @transform_33, window_bounds = array<i64: 1, 1>}]} {
    %c0 = arith.constant 0 : index
    %c0_0 = arith.constant 0 : index
    %0 = vector.load %arg1[%c0, %c0_0] : memref<32x2xf32, #tpu.memory_space<vmem>>, vector<32x2xf32>
    %1 = arith.mulf %0, %0 : vector<32x2xf32>
    %cst = arith.constant dense<0.000000e+00> : vector<2xf32>
    %2 = vector.multi_reduction <add>, %1, %cst [0] : vector<32x2xf32> to vector<2xf32>
    %3 = vector.shape_cast %2 : vector<2xf32> to vector<1x2xf32>
    %cst_1 = arith.constant 3.200000e+01 : f32
    %4 = vector.broadcast %cst_1 : f32 to vector<1x2xf32>
    %5 = arith.divf %3, %4 : vector<1x2xf32>
    %cst_2 = arith.constant 9.99999993E-9 : f32
    %6 = vector.broadcast %cst_2 : f32 to vector<1x2xf32>
    %7 = arith.addf %5, %6 : vector<1x2xf32>
    %8 = math.rsqrt %7 : vector<1x2xf32>
    %9 = vector.broadcast %8 : vector<1x2xf32> to vector<32x2xf32>
    %10 = arith.mulf %0, %9 : vector<32x2xf32>
    %c0_3 = arith.constant 0 : index
    %c0_4 = arith.constant 0 : index
    %11 = vector.load %arg4[%c0_3, %c0_4] : memref<32x16xbf16, #tpu.memory_space<vmem>>, vector<32x16xbf16>
    %c0_5 = arith.constant 0 : index
    %c0_6 = arith.constant 0 : index
    %12 = vector.load %arg2[%c0_5, %c0_6] : memref<16x2xf32, #tpu.memory_space<vmem>>, vector<16x2xf32>
    %13 = arith.truncf %12 : vector<16x2xf32> to vector<16x2xbf16>
    %cst_7 = arith.constant dense<0.000000e+00> : vector<32x2xf32>
    %14 = tpu.matmul %11, %13, %cst_7 {dimension_numbers = #tpu.dot_dimension_numbers<[1], [0], [0], [1], [0, 0, 1, 1], [], []>} : vector<32x16xbf16>, vector<16x2xbf16>, vector<32x2xf32> -> vector<32x2xf32>
    %c0_8 = arith.constant 0 : index
    %c0_9 = arith.constant 0 : index
    %15 = vector.load %arg5[%c0_8, %c0_9] : memref<32x1xf32, #tpu.memory_space<vmem>>, vector<32x1xf32>
    %16 = vector.broadcast %15 : vector<32x1xf32> to vector<32x2xf32>
    %17 = arith.addf %14, %16 : vector<32x2xf32>
    %18 = arith.mulf %17, %17 : vector<32x2xf32>
    %cst_10 = arith.constant dense<0.000000e+00> : vector<2xf32>
    %19 = vector.multi_reduction <add>, %18, %cst_10 [0] : vector<32x2xf32> to vector<2xf32>
    %20 = vector.shape_cast %19 : vector<2xf32> to vector<1x2xf32>
    %cst_11 = arith.constant 3.200000e+01 : f32
    %21 = vector.broadcast %cst_11 : f32 to vector<1x2xf32>
    %22 = arith.divf %20, %21 : vector<1x2xf32>
    %cst_12 = arith.constant 9.99999993E-9 : f32
    %23 = vector.broadcast %cst_12 : f32 to vector<1x2xf32>
    %24 = arith.addf %22, %23 : vector<1x2xf32>
    %25 = math.rsqrt %24 : vector<1x2xf32>
    %26 = vector.broadcast %25 : vector<1x2xf32> to vector<32x2xf32>
    %27 = arith.mulf %17, %26 : vector<32x2xf32>
    %c0_13 = arith.constant 0 : index
    %c0_14 = arith.constant 0 : index
    %28 = vector.load %arg6[%c0_13, %c0_14] : memref<32x32xbf16, #tpu.memory_space<vmem>>, vector<32x32xbf16>
    %29 = arith.truncf %10 : vector<32x2xf32> to vector<32x2xbf16>
    %cst_15 = arith.constant dense<0.000000e+00> : vector<32x2xf32>
    %30 = tpu.matmul %28, %29, %cst_15 {dimension_numbers = #tpu.dot_dimension_numbers<[1], [0], [0], [1], [0, 0, 1, 1], [], []>} : vector<32x32xbf16>, vector<32x2xbf16>, vector<32x2xf32> -> vector<32x2xf32>
    %c0_16 = arith.constant 0 : index
    %c0_17 = arith.constant 0 : index
    %31 = vector.load %arg7[%c0_16, %c0_17] : memref<32x32xbf16, #tpu.memory_space<vmem>>, vector<32x32xbf16>
    %32 = arith.truncf %27 : vector<32x2xf32> to vector<32x2xbf16>
    %cst_18 = arith.constant dense<0.000000e+00> : vector<32x2xf32>
    %33 = tpu.matmul %31, %32, %cst_18 {dimension_numbers = #tpu.dot_dimension_numbers<[1], [0], [0], [1], [0, 0, 1, 1], [], []>} : vector<32x32xbf16>, vector<32x2xbf16>, vector<32x2xf32> -> vector<32x2xf32>
    %34 = arith.addf %30, %33 : vector<32x2xf32>
    %c0_19 = arith.constant 0 : index
    %c0_20 = arith.constant 0 : index
    %35 = vector.load %arg8[%c0_19, %c0_20] : memref<32x1xf32, #tpu.memory_space<vmem>>, vector<32x1xf32>
    %36 = vector.broadcast %35 : vector<32x1xf32> to vector<32x2xf32>
    %37 = arith.addf %34, %36 : vector<32x2xf32>
    %cst_21 = arith.constant 0.000000e+00 : f32
    %38 = vector.broadcast %cst_21 : f32 to vector<32x2xf32>
    %39 = arith.cmpf oge, %37, %38 : vector<32x2xf32>
    %cst_22 = arith.constant 2.000000e-01 : f32
    %40 = vector.broadcast %cst_22 : f32 to vector<32x2xf32>
    %41 = arith.mulf %40, %37 : vector<32x2xf32>
    %42 = arith.select %39, %37, %41 : vector<32x2xi1>, vector<32x2xf32>
    %cst_23 = arith.constant 1.41421354 : f32
    %43 = vector.broadcast %cst_23 : f32 to vector<32x2xf32>
    %44 = arith.mulf %42, %43 : vector<32x2xf32>
    %c0_24 = arith.constant 0 : index
    %c0_25 = arith.constant 0 : index
    %45 = vector.load %arg9[%c0_24, %c0_25] : memref<32x32xbf16, #tpu.memory_space<vmem>>, vector<32x32xbf16>
    %46 = arith.truncf %44 : vector<32x2xf32> to vector<32x2xbf16>
    %cst_26 = arith.constant dense<0.000000e+00> : vector<32x2xf32>
    %47 = tpu.matmul %45, %46, %cst_26 {dimension_numbers = #tpu.dot_dimension_numbers<[1], [0], [0], [1], [0, 0, 1, 1], [], []>} : vector<32x32xbf16>, vector<32x2xbf16>, vector<32x2xf32> -> vector<32x2xf32>
    %c0_27 = arith.constant 0 : index
    %c0_28 = arith.constant 0 : index
    %48 = vector.load %arg10[%c0_27, %c0_28] : memref<32x1xf32, #tpu.memory_space<vmem>>, vector<32x1xf32>
    %49 = vector.broadcast %48 : vector<32x1xf32> to vector<32x2xf32>
    %50 = arith.addf %47, %49 : vector<32x2xf32>
    %cst_29 = arith.constant 0.000000e+00 : f32
    %51 = vector.broadcast %cst_29 : f32 to vector<32x2xf32>
    %52 = arith.cmpf oge, %50, %51 : vector<32x2xf32>
    %cst_30 = arith.constant 2.000000e-01 : f32
    %53 = vector.broadcast %cst_30 : f32 to vector<32x2xf32>
    %54 = arith.mulf %53, %50 : vector<32x2xf32>
    %55 = arith.select %52, %50, %54 : vector<32x2xi1>, vector<32x2xf32>
    %cst_31 = arith.constant 1.41421354 : f32
    %56 = vector.broadcast %cst_31 : f32 to vector<32x2xf32>
    %57 = arith.mulf %55, %56 : vector<32x2xf32>
    %c0_32 = arith.constant 0 : index
    %c0_33 = arith.constant 0 : index
    %58 = vector.load %arg11[%c0_32, %c0_33] : memref<32x1xf32, #tpu.memory_space<vmem>>, vector<32x1xf32>
    %59 = vector.broadcast %58 : vector<32x1xf32> to vector<32x2xf32>
    %60 = arith.subf %57, %59 : vector<32x2xf32>
    %cst_34 = arith.constant 0.699999988 : f32
    %61 = vector.broadcast %cst_34 : f32 to vector<32x2xf32>
    %62 = arith.mulf %61, %60 : vector<32x2xf32>
    %63 = vector.broadcast %58 : vector<32x1xf32> to vector<32x2xf32>
    %64 = arith.addf %63, %62 : vector<32x2xf32>
    %c0_35 = arith.constant 0 : index
    %c0_36 = arith.constant 0 : index
    %c0_37 = arith.constant 0 : index
    %65 = vector.load %arg13[%c0_35, %c0_36, %c0_37] : memref<1x8x32xbf16, #tpu.memory_space<vmem>>, vector<1x8x32xbf16>
    %66 = vector.shape_cast %65 : vector<1x8x32xbf16> to vector<8x32xbf16>
    %c0_38 = arith.constant 0 : index
    %c0_39 = arith.constant 0 : index
    %c0_40 = arith.constant 0 : index
    %67 = vector.load %arg17[%c0_38, %c0_39, %c0_40] : memref<1x16x32xbf16, #tpu.memory_space<vmem>>, vector<1x16x32xbf16>
    %68 = vector.shape_cast %67 : vector<1x16x32xbf16> to vector<16x32xbf16>
    %c0_41 = arith.constant 0 : index
    %c0_42 = arith.constant 0 : index
    %c0_43 = arith.constant 0 : index
    %69 = vector.load %arg21[%c0_41, %c0_42, %c0_43] : memref<1x16x32xbf16, #tpu.memory_space<vmem>>, vector<1x16x32xbf16>
    %70 = vector.shape_cast %69 : vector<1x16x32xbf16> to vector<16x32xbf16>
    %c0_44 = arith.constant 0 : index
    %c0_45 = arith.constant 0 : index
    %c0_46 = arith.constant 0 : index
    %71 = vector.load %arg15[%c0_44, %c0_45, %c0_46] : memref<1x16x8xbf16, #tpu.memory_space<vmem>>, vector<1x16x8xbf16>
    %72 = vector.shape_cast %71 : vector<1x16x8xbf16> to vector<16x8xbf16>
    %c0_47 = arith.constant 0 : index
    %c0_48 = arith.constant 0 : index
    %c0_49 = arith.constant 0 : index
    %73 = vector.load %arg19[%c0_47, %c0_48, %c0_49] : memref<1x16x16xbf16, #tpu.memory_space<vmem>>, vector<1x16x16xbf16>
    %74 = vector.shape_cast %73 : vector<1x16x16xbf16> to vector<16x16xbf16>
    %c0_50 = arith.constant 0 : index
    %c0_51 = arith.constant 0 : index
    %c0_52 = arith.constant 0 : index
    %75 = vector.load %arg23[%c0_50, %c0_51, %c0_52] : memref<1x3x16xbf16, #tpu.memory_space<vmem>>, vector<1x3x16xbf16>
    %76 = vector.shape_cast %75 : vector<1x3x16xbf16> to vector<3x16xbf16>
    %77 = arith.truncf %64 : vector<32x2xf32> to vector<32x2xbf16>
    %cst_53 = arith.constant dense<0.000000e+00> : vector<8x2xf32>
    %78 = tpu.matmul %66, %77, %cst_53 {dimension_numbers = #tpu.dot_dimension_numbers<[1], [0], [0], [1], [0, 0, 1, 1], [], []>} : vector<8x32xbf16>, vector<32x2xbf16>, vector<8x2xf32> -> vector<8x2xf32>
    %c0_54 = arith.constant 0 : index
    %c0_55 = arith.constant 0 : index
    %c0_56 = arith.constant 0 : index
    %79 = vector.load %arg14[%c0_54, %c0_55, %c0_56] : memref<1x8x1xf32, #tpu.memory_space<vmem>>, vector<1x8x1xf32>
    %80 = vector.shape_cast %79 : vector<1x8x1xf32> to vector<8x1xf32>
    %81 = vector.broadcast %80 : vector<8x1xf32> to vector<8x2xf32>
    %82 = arith.addf %78, %81 : vector<8x2xf32>
    %83 = arith.truncf %64 : vector<32x2xf32> to vector<32x2xbf16>
    %cst_57 = arith.constant dense<0.000000e+00> : vector<16x2xf32>
    %84 = tpu.matmul %68, %83, %cst_57 {dimension_numbers = #tpu.dot_dimension_numbers<[1], [0], [0], [1], [0, 0, 1, 1], [], []>} : vector<16x32xbf16>, vector<32x2xbf16>, vector<16x2xf32> -> vector<16x2xf32>
    %c0_58 = arith.constant 0 : index
    %c0_59 = arith.constant 0 : index
    %c0_60 = arith.constant 0 : index
    %85 = vector.load %arg18[%c0_58, %c0_59, %c0_60] : memref<1x16x1xf32, #tpu.memory_space<vmem>>, vector<1x16x1xf32>
    %86 = vector.shape_cast %85 : vector<1x16x1xf32> to vector<16x1xf32>
    %87 = vector.broadcast %86 : vector<16x1xf32> to vector<16x2xf32>
    %88 = arith.addf %84, %87 : vector<16x2xf32>
    %89 = arith.truncf %64 : vector<32x2xf32> to vector<32x2xbf16>
    %cst_61 = arith.constant dense<0.000000e+00> : vector<16x2xf32>
    %90 = tpu.matmul %70, %89, %cst_61 {dimension_numbers = #tpu.dot_dimension_numbers<[1], [0], [0], [1], [0, 0, 1, 1], [], []>} : vector<16x32xbf16>, vector<32x2xbf16>, vector<16x2xf32> -> vector<16x2xf32>
    %c0_62 = arith.constant 0 : index
    %c0_63 = arith.constant 0 : index
    %c0_64 = arith.constant 0 : index
    %91 = vector.load %arg22[%c0_62, %c0_63, %c0_64] : memref<1x16x1xf32, #tpu.memory_space<vmem>>, vector<1x16x1xf32>
    %92 = vector.shape_cast %91 : vector<1x16x1xf32> to vector<16x1xf32>
    %93 = vector.broadcast %92 : vector<16x1xf32> to vector<16x2xf32>
    %94 = arith.addf %90, %93 : vector<16x2xf32>
    %95 = arith.extf %72 : vector<16x8xbf16> to vector<16x8xf32>
    %96 = arith.extf %74 : vector<16x16xbf16> to vector<16x16xf32>
    %97 = arith.mulf %95, %95 : vector<16x8xf32>
    %98 = arith.mulf %82, %82 : vector<8x2xf32>
    %cst_65 = arith.constant dense<0.000000e+00> : vector<16x2xf32>
    %99 = tpu.matmul %97, %98, %cst_65 {dimension_numbers = #tpu.dot_dimension_numbers<[1], [0], [0], [1], [0, 0, 1, 1], [], []>} : vector<16x8xf32>, vector<8x2xf32>, vector<16x2xf32> -> vector<16x2xf32>
    %cst_66 = arith.constant 9.99999993E-9 : f32
    %100 = vector.broadcast %cst_66 : f32 to vector<16x2xf32>
    %101 = arith.addf %99, %100 : vector<16x2xf32>
    %102 = math.rsqrt %101 : vector<16x2xf32>
    %103 = arith.mulf %96, %96 : vector<16x16xf32>
    %104 = arith.mulf %88, %88 : vector<16x2xf32>
    %cst_67 = arith.constant dense<0.000000e+00> : vector<16x2xf32>
    %105 = tpu.matmul %103, %104, %cst_67 {dimension_numbers = #tpu.dot_dimension_numbers<[1], [0], [0], [1], [0, 0, 1, 1], [], []>} : vector<16x16xf32>, vector<16x2xf32>, vector<16x2xf32> -> vector<16x2xf32>
    %cst_68 = arith.constant 9.99999993E-9 : f32
    %106 = vector.broadcast %cst_68 : f32 to vector<16x2xf32>
    %107 = arith.addf %105, %106 : vector<16x2xf32>
    %108 = math.rsqrt %107 : vector<16x2xf32>
    %109 = vector.extract_strided_slice %82 {offsets = [0, 0], sizes = [8, 1], strides = [1, 1]} : vector<8x2xf32> to vector<8x1xf32>
    %110 = vector.extract_strided_slice %82 {offsets = [0, 1], sizes = [8, 1], strides = [1, 1]} : vector<8x2xf32> to vector<8x1xf32>
    %111 = vector.shape_cast %109 : vector<8x1xf32> to vector<8x1xf32>
    %112 = vector.broadcast %111 : vector<8x1xf32> to vector<8x256xf32>
    %113 = vector.shape_cast %110 : vector<8x1xf32> to vector<8x1xf32>
    %114 = vector.broadcast %113 : vector<8x1xf32> to vector<8x256xf32>
    %115 = tpu.concatenate %112, %114 in 1 : vector<8x256xf32>, vector<8x256xf32> -> vector<8x512xf32>
    %116 = vector.extract_strided_slice %102 {offsets = [0, 0], sizes = [16, 1], strides = [1, 1]} : vector<16x2xf32> to vector<16x1xf32>
    %117 = vector.extract_strided_slice %102 {offsets = [0, 1], sizes = [16, 1], strides = [1, 1]} : vector<16x2xf32> to vector<16x1xf32>
    %118 = vector.shape_cast %116 : vector<16x1xf32> to vector<16x1xf32>
    %119 = vector.broadcast %118 : vector<16x1xf32> to vector<16x256xf32>
    %120 = vector.shape_cast %117 : vector<16x1xf32> to vector<16x1xf32>
    %121 = vector.broadcast %120 : vector<16x1xf32> to vector<16x256xf32>
    %122 = tpu.concatenate %119, %121 in 1 : vector<16x256xf32>, vector<16x256xf32> -> vector<16x512xf32>
    %123 = vector.extract_strided_slice %88 {offsets = [0, 0], sizes = [16, 1], strides = [1, 1]} : vector<16x2xf32> to vector<16x1xf32>
    %124 = vector.extract_strided_slice %88 {offsets = [0, 1], sizes = [16, 1], strides = [1, 1]} : vector<16x2xf32> to vector<16x1xf32>
    %125 = vector.shape_cast %123 : vector<16x1xf32> to vector<16x1xf32>
    %126 = vector.broadcast %125 : vector<16x1xf32> to vector<16x256xf32>
    %127 = vector.shape_cast %124 : vector<16x1xf32> to vector<16x1xf32>
    %128 = vector.broadcast %127 : vector<16x1xf32> to vector<16x256xf32>
    %129 = tpu.concatenate %126, %128 in 1 : vector<16x256xf32>, vector<16x256xf32> -> vector<16x512xf32>
    %130 = vector.extract_strided_slice %108 {offsets = [0, 0], sizes = [16, 1], strides = [1, 1]} : vector<16x2xf32> to vector<16x1xf32>
    %131 = vector.extract_strided_slice %108 {offsets = [0, 1], sizes = [16, 1], strides = [1, 1]} : vector<16x2xf32> to vector<16x1xf32>
    %132 = vector.shape_cast %130 : vector<16x1xf32> to vector<16x1xf32>
    %133 = vector.broadcast %132 : vector<16x1xf32> to vector<16x256xf32>
    %134 = vector.shape_cast %131 : vector<16x1xf32> to vector<16x1xf32>
    %135 = vector.broadcast %134 : vector<16x1xf32> to vector<16x256xf32>
    %136 = tpu.concatenate %133, %135 in 1 : vector<16x256xf32>, vector<16x256xf32> -> vector<16x512xf32>
    %137 = vector.extract_strided_slice %94 {offsets = [0, 0], sizes = [16, 1], strides = [1, 1]} : vector<16x2xf32> to vector<16x1xf32>
    %138 = vector.extract_strided_slice %94 {offsets = [0, 1], sizes = [16, 1], strides = [1, 1]} : vector<16x2xf32> to vector<16x1xf32>
    %139 = vector.shape_cast %137 : vector<16x1xf32> to vector<16x1xf32>
    %140 = vector.broadcast %139 : vector<16x1xf32> to vector<16x256xf32>
    %141 = vector.shape_cast %138 : vector<16x1xf32> to vector<16x1xf32>
    %142 = vector.broadcast %141 : vector<16x1xf32> to vector<16x256xf32>
    %143 = tpu.concatenate %140, %142 in 1 : vector<16x256xf32>, vector<16x256xf32> -> vector<16x512xf32>
    %c0_69 = arith.constant 0 : index
    %c0_70 = arith.constant 0 : index
    %c0_71 = arith.constant 0 : index
    %144 = vector.load %arg12[%c0_69, %c0_70, %c0_71] : memref<1x8x256xf32, #tpu.memory_space<vmem>>, vector<1x8x256xf32>
    %145 = vector.shape_cast %144 : vector<1x8x256xf32> to vector<8x256xf32>
    %146 = tpu.concatenate %145, %145 in 1 : vector<8x256xf32>, vector<8x256xf32> -> vector<8x512xf32>
    %c0_72 = arith.constant 0 : index
    %c0_73 = arith.constant 0 : index
    %c0_74 = arith.constant 0 : index
    %147 = vector.load %arg25[%c0_72, %c0_73, %c0_74] : memref<1x2x512xf32, #tpu.memory_space<vmem>>, vector<1x2x512xf32>
    %148 = vector.shape_cast %147 : vector<1x2x512xf32> to vector<2x512xf32>
    %149 = arith.mulf %146, %115 : vector<8x512xf32>
    %150 = arith.truncf %149 : vector<8x512xf32> to vector<8x512xbf16>
    %cst_75 = arith.constant dense<0.000000e+00> : vector<16x512xf32>
    %151 = tpu.matmul %72, %150, %cst_75 {dimension_numbers = #tpu.dot_dimension_numbers<[1], [0], [0], [1], [0, 0, 1, 1], [], []>} : vector<16x8xbf16>, vector<8x512xbf16>, vector<16x512xf32> -> vector<16x512xf32>
    %152 = arith.mulf %151, %122 : vector<16x512xf32>
    %c0_76 = arith.constant 0 : index
    %c0_77 = arith.constant 0 : index
    %c0_78 = arith.constant 0 : index
    %153 = vector.load %arg16[%c0_76, %c0_77, %c0_78] : memref<1x16x1xf32, #tpu.memory_space<vmem>>, vector<1x16x1xf32>
    %154 = vector.shape_cast %153 : vector<1x16x1xf32> to vector<16x1xf32>
    %155 = vector.broadcast %154 : vector<16x1xf32> to vector<16x512xf32>
    %156 = arith.addf %152, %155 : vector<16x512xf32>
    %157 = vector.extract_strided_slice %148 {offsets = [0, 0], sizes = [1, 512], strides = [1, 1]} : vector<2x512xf32> to vector<1x512xf32>
    %cst_79 = arith.constant 1.000000e-01 : f32
    %158 = vector.broadcast %cst_79 : f32 to vector<1x512xf32>
    %159 = arith.mulf %158, %157 : vector<1x512xf32>
    %160 = vector.broadcast %159 : vector<1x512xf32> to vector<16x512xf32>
    %161 = arith.addf %156, %160 : vector<16x512xf32>
    %cst_80 = arith.constant 0.000000e+00 : f32
    %162 = vector.broadcast %cst_80 : f32 to vector<16x512xf32>
    %163 = arith.cmpf oge, %161, %162 : vector<16x512xf32>
    %cst_81 = arith.constant 2.000000e-01 : f32
    %164 = vector.broadcast %cst_81 : f32 to vector<16x512xf32>
    %165 = arith.mulf %164, %161 : vector<16x512xf32>
    %166 = arith.select %163, %161, %165 : vector<16x512xi1>, vector<16x512xf32>
    %cst_82 = arith.constant 1.41421354 : f32
    %167 = vector.broadcast %cst_82 : f32 to vector<16x512xf32>
    %168 = arith.mulf %166, %167 : vector<16x512xf32>
    %169 = arith.mulf %168, %129 : vector<16x512xf32>
    %170 = arith.truncf %169 : vector<16x512xf32> to vector<16x512xbf16>
    %cst_83 = arith.constant dense<0.000000e+00> : vector<16x512xf32>
    %171 = tpu.matmul %74, %170, %cst_83 {dimension_numbers = #tpu.dot_dimension_numbers<[1], [0], [0], [1], [0, 0, 1, 1], [], []>} : vector<16x16xbf16>, vector<16x512xbf16>, vector<16x512xf32> -> vector<16x512xf32>
    %172 = arith.mulf %171, %136 : vector<16x512xf32>
    %c0_84 = arith.constant 0 : index
    %c0_85 = arith.constant 0 : index
    %c0_86 = arith.constant 0 : index
    %173 = vector.load %arg20[%c0_84, %c0_85, %c0_86] : memref<1x16x1xf32, #tpu.memory_space<vmem>>, vector<1x16x1xf32>
    %174 = vector.shape_cast %173 : vector<1x16x1xf32> to vector<16x1xf32>
    %175 = vector.broadcast %174 : vector<16x1xf32> to vector<16x512xf32>
    %176 = arith.addf %172, %175 : vector<16x512xf32>
    %177 = vector.extract_strided_slice %148 {offsets = [1, 0], sizes = [1, 512], strides = [1, 1]} : vector<2x512xf32> to vector<1x512xf32>
    %cst_87 = arith.constant 1.000000e-01 : f32
    %178 = vector.broadcast %cst_87 : f32 to vector<1x512xf32>
    %179 = arith.mulf %178, %177 : vector<1x512xf32>
    %180 = vector.broadcast %179 : vector<1x512xf32> to vector<16x512xf32>
    %181 = arith.addf %176, %180 : vector<16x512xf32>
    %cst_88 = arith.constant 0.000000e+00 : f32
    %182 = vector.broadcast %cst_88 : f32 to vector<16x512xf32>
    %183 = arith.cmpf oge, %181, %182 : vector<16x512xf32>
    %cst_89 = arith.constant 2.000000e-01 : f32
    %184 = vector.broadcast %cst_89 : f32 to vector<16x512xf32>
    %185 = arith.mulf %184, %181 : vector<16x512xf32>
    %186 = arith.select %183, %181, %185 : vector<16x512xi1>, vector<16x512xf32>
    %cst_90 = arith.constant 1.41421354 : f32
    %187 = vector.broadcast %cst_90 : f32 to vector<16x512xf32>
    %188 = arith.mulf %186, %187 : vector<16x512xf32>
    %189 = arith.mulf %188, %143 : vector<16x512xf32>
    %190 = arith.truncf %189 : vector<16x512xf32> to vector<16x512xbf16>
    %cst_91 = arith.constant dense<0.000000e+00> : vector<3x512xf32>
    %191 = tpu.matmul %76, %190, %cst_91 {dimension_numbers = #tpu.dot_dimension_numbers<[1], [0], [0], [1], [0, 0, 1, 1], [], []>} : vector<3x16xbf16>, vector<16x512xbf16>, vector<3x512xf32> -> vector<3x512xf32>
    %c0_92 = arith.constant 0 : index
    %c0_93 = arith.constant 0 : index
    %c0_94 = arith.constant 0 : index
    %192 = vector.load %arg24[%c0_92, %c0_93, %c0_94] : memref<1x3x1xf32, #tpu.memory_space<vmem>>, vector<1x3x1xf32>
    %193 = vector.shape_cast %192 : vector<1x3x1xf32> to vector<3x1xf32>
    %194 = vector.broadcast %193 : vector<3x1xf32> to vector<3x512xf32>
    %195 = arith.addf %191, %194 : vector<3x512xf32>
    %196 = vector.extract_strided_slice %195 {offsets = [0, 0], sizes = [3, 256], strides = [1, 1]} : vector<3x512xf32> to vector<3x256xf32>
    %c0_95 = arith.constant 0 : index
    %c0_96 = arith.constant 0 : index
    %c0_97 = arith.constant 0 : index
    %c0_98 = arith.constant 0 : index
    %197 = vector.load %arg33[%c0_95, %c0_96, %c0_97, %c0_98] : memref<1x2x3x256xf32, #tpu.memory_space<vmem>>, vector<1x1x3x256xf32>
    %198 = vector.shape_cast %197 : vector<1x1x3x256xf32> to vector<3x256xf32>
    %199 = vector.shape_cast %196 : vector<3x256xf32> to vector<1x1x3x256xf32>
    tpu.vector_store %arg33[%c0_95, %c0_96, %c0_97, %c0_98], %199 {strides = array<i32>} : memref<1x2x3x256xf32, #tpu.memory_space<vmem>>, vector<1x1x3x256xf32>,
    %200 = vector.extract_strided_slice %195 {offsets = [0, 256], sizes = [3, 256], strides = [1, 1]} : vector<3x512xf32> to vector<3x256xf32>
    %c0_99 = arith.constant 0 : index
    %c1 = arith.constant 1 : index
    %c0_100 = arith.constant 0 : index
    %c0_101 = arith.constant 0 : index
    %201 = vector.load %arg33[%c0_99, %c1, %c0_100, %c0_101] : memref<1x2x3x256xf32, #tpu.memory_space<vmem>>, vector<1x1x3x256xf32>
    %202 = vector.shape_cast %201 : vector<1x1x3x256xf32> to vector<3x256xf32>
    %203 = vector.shape_cast %200 : vector<3x256xf32> to vector<1x1x3x256xf32>
    tpu.vector_store %arg33[%c0_99, %c1, %c0_100, %c0_101], %203 {strides = array<i32>} : memref<1x2x3x256xf32, #tpu.memory_space<vmem>>, vector<1x1x3x256xf32>,
    %204 = vector.extract_strided_slice %195 {offsets = [0, 0], sizes = [1, 256], strides = [1, 1]} : vector<3x512xf32> to vector<1x256xf32>
    %205 = vector.extract_strided_slice %195 {offsets = [1, 0], sizes = [1, 256], strides = [1, 1]} : vector<3x512xf32> to vector<1x256xf32>
    %206 = vector.extract_strided_slice %195 {offsets = [2, 0], sizes = [1, 256], strides = [1, 1]} : vector<3x512xf32> to vector<1x256xf32>
    %207 = tpu.concatenate %204, %205, %206 in 1 : vector<1x256xf32>, vector<1x256xf32>, vector<1x256xf32> -> vector<1x768xf32>
    %208 = vector.extract_strided_slice %195 {offsets = [0, 256], sizes = [1, 256], strides = [1, 1]} : vector<3x512xf32> to vector<1x256xf32>
    %209 = vector.extract_strided_slice %195 {offsets = [1, 256], sizes = [1, 256], strides = [1, 1]} : vector<3x512xf32> to vector<1x256xf32>
    %210 = vector.extract_strided_slice %195 {offsets = [2, 256], sizes = [1, 256], strides = [1, 1]} : vector<3x512xf32> to vector<1x256xf32>
    %211 = tpu.concatenate %208, %209, %210 in 1 : vector<1x256xf32>, vector<1x256xf32>, vector<1x256xf32> -> vector<1x768xf32>
    %212 = tpu.concatenate %207, %211 in 0 : vector<1x768xf32>, vector<1x768xf32> -> vector<2x768xf32>
    %c0_102 = arith.constant 0 : index
    %c0_103 = arith.constant 0 : index
    %213 = vector.load %arg26[%c0_102, %c0_103] : memref<768x48xbf16, #tpu.memory_space<vmem>>, vector<768x48xbf16>
    %214 = arith.truncf %212 : vector<2x768xf32> to vector<2x768xbf16>
    %cst_104 = arith.constant dense<0.000000e+00> : vector<2x48xf32>
    %215 = tpu.matmul %214, %213, %cst_104 {dimension_numbers = #tpu.dot_dimension_numbers<[1], [0], [0], [1], [0, 0, 1, 1], [], []>} : vector<2x768xbf16>, vector<768x48xbf16>, vector<2x48xf32> -> vector<2x48xf32>
    %c0_105 = arith.constant 0 : index
    %c0_106 = arith.constant 0 : index
    %216 = vector.load %arg27[%c0_105, %c0_106] : memref<48x32xbf16, #tpu.memory_space<vmem>>, vector<48x32xbf16>
    %217 = arith.truncf %215 : vector<2x48xf32> to vector<2x48xbf16>
    %cst_107 = arith.constant dense<0.000000e+00> : vector<2x32xf32>
    %218 = tpu.matmul %217, %216, %cst_107 {dimension_numbers = #tpu.dot_dimension_numbers<[1], [0], [0], [1], [0, 0, 1, 1], [], []>} : vector<2x48xbf16>, vector<48x32xbf16>, vector<2x32xf32> -> vector<2x32xf32>
    %c0_108 = arith.constant 0 : index
    %c0_109 = arith.constant 0 : index
    %219 = vector.load %arg28[%c0_108, %c0_109] : memref<1x32xf32, #tpu.memory_space<vmem>>, vector<1x32xf32>
    %220 = vector.broadcast %219 : vector<1x32xf32> to vector<2x32xf32>
    %221 = arith.addf %218, %220 : vector<2x32xf32>
    %222 = arith.mulf %221, %221 : vector<2x32xf32>
    %cst_110 = arith.constant dense<0.000000e+00> : vector<2xf32>
    %223 = vector.multi_reduction <add>, %222, %cst_110 [1] : vector<2x32xf32> to vector<2xf32>
    %224 = vector.shape_cast %223 : vector<2xf32> to vector<2x1xf32>
    %cst_111 = arith.constant 9.99999993E-9 : f32
    %225 = vector.broadcast %cst_111 : f32 to vector<2x1xf32>
    %226 = arith.addf %224, %225 : vector<2x1xf32>
    %227 = math.rsqrt %226 : vector<2x1xf32>
    %228 = vector.broadcast %227 : vector<2x1xf32> to vector<2x32xf32>
    %229 = arith.mulf %221, %228 : vector<2x32xf32>
    %c0_112 = arith.constant 0 : index
    %c0_113 = arith.constant 0 : index
    %230 = vector.load %arg30[%c0_112, %c0_113] : memref<48x32xbf16, #tpu.memory_space<vmem>>, vector<48x32xbf16>
    %231 = arith.truncf %215 : vector<2x48xf32> to vector<2x48xbf16>
    %cst_114 = arith.constant dense<0.000000e+00> : vector<2x32xf32>
    %232 = tpu.matmul %231, %230, %cst_114 {dimension_numbers = #tpu.dot_dimension_numbers<[1], [0], [0], [1], [0, 0, 1, 1], [], []>} : vector<2x48xbf16>, vector<48x32xbf16>, vector<2x32xf32> -> vector<2x32xf32>
    %c0_115 = arith.constant 0 : index
    %c0_116 = arith.constant 0 : index
    %233 = vector.load %arg31[%c0_115, %c0_116] : memref<1x32xf32, #tpu.memory_space<vmem>>, vector<1x32xf32>
    %234 = vector.broadcast %233 : vector<1x32xf32> to vector<2x32xf32>
    %235 = arith.addf %232, %234 : vector<2x32xf32>
    %236 = arith.mulf %235, %235 : vector<2x32xf32>
    %cst_117 = arith.constant dense<0.000000e+00> : vector<2xf32>
    %237 = vector.multi_reduction <add>, %236, %cst_117 [1] : vector<2x32xf32> to vector<2xf32>
    %238 = vector.shape_cast %237 : vector<2xf32> to vector<2x1xf32>
    %cst_118 = arith.constant 9.99999993E-9 : f32
    %239 = vector.broadcast %cst_118 : f32 to vector<2x1xf32>
    %240 = arith.addf %238, %239 : vector<2x1xf32>
    %241 = math.rsqrt %240 : vector<2x1xf32>
    %242 = vector.broadcast %241 : vector<2x1xf32> to vector<2x32xf32>
    %243 = arith.mulf %235, %242 : vector<2x32xf32>
    %c0_i32 = arith.constant 0 : i32
    %244 = arith.cmpi eq, %arg0, %c0_i32 : i32
    %245 = arith.extui %244 : i1 to i32
    %c0_i32_119 = arith.constant 0 : i32
    %246 = arith.cmpi ne, %245, %c0_i32_119 : i32
    scf.if %246 {
      %c0_121 = arith.constant 0 : index
      %c0_122 = arith.constant 0 : index
      %c0_123 = arith.constant 0 : index
      %250 = vector.load %arg35[%c0_121, %c0_122, %c0_123] : memref<2x2x32xf32, #tpu.memory_space<vmem>>, vector<1x2x32xf32>
      %251 = vector.shape_cast %250 : vector<1x2x32xf32> to vector<2x32xf32>
      %252 = vector.shape_cast %229 : vector<2x32xf32> to vector<1x2x32xf32>
      tpu.vector_store %arg35[%c0_121, %c0_122, %c0_123], %252 {strides = array<i32>} : memref<2x2x32xf32, #tpu.memory_space<vmem>>, vector<1x2x32xf32>,
      %c1_124 = arith.constant 1 : index
      %c0_125 = arith.constant 0 : index
      %c0_126 = arith.constant 0 : index
      %253 = vector.load %arg35[%c1_124, %c0_125, %c0_126] : memref<2x2x32xf32, #tpu.memory_space<vmem>>, vector<1x2x32xf32>
      %254 = vector.shape_cast %253 : vector<1x2x32xf32> to vector<2x32xf32>
      %255 = vector.shape_cast %243 : vector<2x32xf32> to vector<1x2x32xf32>
      tpu.vector_store %arg35[%c1_124, %c0_125, %c0_126], %255 {strides = array<i32>} : memref<2x2x32xf32, #tpu.memory_space<vmem>>, vector<1x2x32xf32>,
      %cst_127 = arith.constant 0.000000e+00 : f32
      %256 = vector.broadcast %cst_127 : f32 to vector<1x1xf32>
      %c0_128 = arith.constant 0 : index
      %c0_129 = arith.constant 0 : index
      %257 = vector.load %arg34[%c0_128, %c0_129] : memref<1x1xf32, #tpu.memory_space<vmem>>, vector<1x1xf32>
      tpu.vector_store %arg34[%c0_128, %c0_129], %256 {strides = array<i32>} : memref<1x1xf32, #tpu.memory_space<vmem>>, vector<1x1xf32>,
    } else {
    }
    %c1_i32 = arith.constant 1 : i32
    %247 = arith.cmpi eq, %arg0, %c1_i32 : i32
    %248 = arith.extui %247 : i1 to i32
    %c0_i32_120 = arith.constant 0 : i32
    %249 = arith.cmpi ne, %248, %c0_i32_120 : i32
    scf.if %249 {
      %cst_121 = arith.constant 0.000000e+00 : f32
      %250 = vector.broadcast %cst_121 : f32 to vector<1x1xf32>
      %c0_122 = arith.constant 0 : index
      %c0_123 = arith.constant 0 : index
      %c0_124 = arith.constant 0 : index
      %251 = vector.load %arg35[%c0_122, %c0_123, %c0_124] : memref<2x2x32xf32, #tpu.memory_space<vmem>>, vector<1x2x32xf32>
      %252 = vector.shape_cast %251 : vector<1x2x32xf32> to vector<2x32xf32>
      %253 = arith.subf %229, %252 : vector<2x32xf32>
      %254 = arith.mulf %253, %253 : vector<2x32xf32>
      %cst_125 = arith.constant dense<0.000000e+00> : vector<2xf32>
      %255 = vector.multi_reduction <add>, %254, %cst_125 [1] : vector<2x32xf32> to vector<2xf32>
      %256 = vector.shape_cast %255 : vector<2xf32> to vector<2x1xf32>
      %cst_126 = arith.constant 9.99999993E-9 : f32
      %257 = vector.broadcast %cst_126 : f32 to vector<2x1xf32>
      %258 = arith.addf %256, %257 : vector<2x1xf32>
      %259 = math.rsqrt %258 : vector<2x1xf32>
      %260 = vector.broadcast %259 : vector<2x1xf32> to vector<2x32xf32>
      %261 = arith.mulf %253, %260 : vector<2x32xf32>
      %c0_127 = arith.constant 0 : index
      %c0_128 = arith.constant 0 : index
      %262 = vector.load %arg29[%c0_127, %c0_128] : memref<1x32xf32, #tpu.memory_space<vmem>>, vector<1x32xf32>
      %263 = vector.broadcast %262 : vector<1x32xf32> to vector<2x32xf32>
      %264 = arith.mulf %261, %263 : vector<2x32xf32>
      %cst_129 = arith.constant dense<0.000000e+00> : vector<2xf32>
      %265 = vector.multi_reduction <add>, %264, %cst_129 [1] : vector<2x32xf32> to vector<2xf32>
      %266 = vector.shape_cast %265 : vector<2xf32> to vector<2x1xf32>
      %cst_130 = arith.constant 1.000000e+00 : f32
      %267 = vector.broadcast %cst_130 : f32 to vector<2x1xf32>
      %268 = arith.subf %267, %266 : vector<2x1xf32>
      %269 = vector.shape_cast %268 : vector<2x1xf32> to vector<1x2x1xf32>
      %cst_131 = arith.constant dense<0.000000e+00> : vector<1xf32>
      %270 = vector.multi_reduction <add>, %269, %cst_131 [1, 2] : vector<1x2x1xf32> to vector<1xf32>
      %271 = vector.shape_cast %270 : vector<1xf32> to vector<1x1x1xf32>
      %272 = vector.extract %271[0, 0, 0] : f32 from vector<1x1x1xf32>
      %273 = vector.broadcast %272 : f32 to vector<1x1xf32>
      %cst_132 = arith.constant 2.000000e+00 : f32
      %274 = vector.broadcast %cst_132 : f32 to vector<1x1xf32>
      %275 = arith.divf %273, %274 : vector<1x1xf32>
      %cst_133 = arith.constant 1.000000e+00 : f32
      %276 = vector.broadcast %cst_133 : f32 to vector<1x1xf32>
      %277 = arith.mulf %276, %275 : vector<1x1xf32>
      %278 = arith.addf %250, %277 : vector<1x1xf32>
      %c1_134 = arith.constant 1 : index
      %c0_135 = arith.constant 0 : index
      %c0_136 = arith.constant 0 : index
      %279 = vector.load %arg35[%c1_134, %c0_135, %c0_136] : memref<2x2x32xf32, #tpu.memory_space<vmem>>, vector<1x2x32xf32>
      %280 = vector.shape_cast %279 : vector<1x2x32xf32> to vector<2x32xf32>
      %281 = arith.subf %243, %280 : vector<2x32xf32>
      %282 = arith.mulf %281, %281 : vector<2x32xf32>
      %cst_137 = arith.constant dense<0.000000e+00> : vector<2xf32>
      %283 = vector.multi_reduction <add>, %282, %cst_137 [1] : vector<2x32xf32> to vector<2xf32>
      %284 = vector.shape_cast %283 : vector<2xf32> to vector<2x1xf32>
      %cst_138 = arith.constant 9.99999993E-9 : f32
      %285 = vector.broadcast %cst_138 : f32 to vector<2x1xf32>
      %286 = arith.addf %284, %285 : vector<2x1xf32>
      %287 = math.rsqrt %286 : vector<2x1xf32>
      %288 = vector.broadcast %287 : vector<2x1xf32> to vector<2x32xf32>
      %289 = arith.mulf %281, %288 : vector<2x32xf32>
      %c0_139 = arith.constant 0 : index
      %c0_140 = arith.constant 0 : index
      %290 = vector.load %arg32[%c0_139, %c0_140] : memref<1x32xf32, #tpu.memory_space<vmem>>, vector<1x32xf32>
      %291 = vector.broadcast %290 : vector<1x32xf32> to vector<2x32xf32>
      %292 = arith.mulf %289, %291 : vector<2x32xf32>
      %cst_141 = arith.constant dense<0.000000e+00> : vector<2xf32>
      %293 = vector.multi_reduction <add>, %292, %cst_141 [1] : vector<2x32xf32> to vector<2xf32>
      %294 = vector.shape_cast %293 : vector<2xf32> to vector<2x1xf32>
      %cst_142 = arith.constant 1.000000e+00 : f32
      %295 = vector.broadcast %cst_142 : f32 to vector<2x1xf32>
      %296 = arith.subf %295, %294 : vector<2x1xf32>
      %297 = vector.shape_cast %296 : vector<2x1xf32> to vector<1x2x1xf32>
      %cst_143 = arith.constant dense<0.000000e+00> : vector<1xf32>
      %298 = vector.multi_reduction <add>, %297, %cst_143 [1, 2] : vector<1x2x1xf32> to vector<1xf32>
      %299 = vector.shape_cast %298 : vector<1xf32> to vector<1x1x1xf32>
      %300 = vector.extract %299[0, 0, 0] : f32 from vector<1x1x1xf32>
      %301 = vector.broadcast %300 : f32 to vector<1x1xf32>
      %cst_144 = arith.constant 2.000000e+00 : f32
      %302 = vector.broadcast %cst_144 : f32 to vector<1x1xf32>
      %303 = arith.divf %301, %302 : vector<1x1xf32>
      %cst_145 = arith.constant 5.000000e-01 : f32
      %304 = vector.broadcast %cst_145 : f32 to vector<1x1xf32>
      %305 = arith.mulf %304, %303 : vector<1x1xf32>
      %306 = arith.addf %278, %305 : vector<1x1xf32>
      %c0_146 = arith.constant 0 : index
      %c0_147 = arith.constant 0 : index
      %307 = vector.load %arg34[%c0_146, %c0_147] : memref<1x1xf32, #tpu.memory_space<vmem>>, vector<1x1xf32>
      tpu.vector_store %arg34[%c0_146, %c0_147], %306 {strides = array<i32>} : memref<1x1xf32, #tpu.memory_space<vmem>>, vector<1x1xf32>,
    } else {
    }
    return
  }
  func.func @transform_0(%arg0: i32) -> (i32, i32) {
    %c0_i32 = arith.constant 0 : i32
    %c0_i32_0 = arith.constant 0 : i32
    %c0_i32_1 = arith.constant 0 : i32
    return %c0_i32, %c0_i32_0 : i32, i32
  }
  func.func @transform_1(%arg0: i32) -> (i32, i32) {
    %c0_i32 = arith.constant 0 : i32
    %c0_i32_0 = arith.constant 0 : i32
    %c0_i32_1 = arith.constant 0 : i32
    return %c0_i32, %c0_i32_0 : i32, i32
  }
  func.func @transform_2(%arg0: i32) -> (i32, i32, i32) {
    %c0_i32 = arith.constant 0 : i32
    %c0_i32_0 = arith.constant 0 : i32
    %c0_i32_1 = arith.constant 0 : i32
    %c0_i32_2 = arith.constant 0 : i32
    return %c0_i32, %c0_i32_0, %c0_i32_1 : i32, i32, i32
  }
  func.func @transform_3(%arg0: i32) -> (i32, i32) {
    %c0_i32 = arith.constant 0 : i32
    %c0_i32_0 = arith.constant 0 : i32
    %c0_i32_1 = arith.constant 0 : i32
    return %c0_i32, %c0_i32_0 : i32, i32
  }
  func.func @transform_4(%arg0: i32) -> (i32, i32) {
    %c0_i32 = arith.constant 0 : i32
    %c0_i32_0 = arith.constant 0 : i32
    %c0_i32_1 = arith.constant 0 : i32
    return %c0_i32, %c0_i32_0 : i32, i32
  }
  func.func @transform_5(%arg0: i32) -> (i32, i32) {
    %c0_i32 = arith.constant 0 : i32
    %c0_i32_0 = arith.constant 0 : i32
    %c0_i32_1 = arith.constant 0 : i32
    return %c0_i32, %c0_i32_0 : i32, i32
  }
  func.func @transform_6(%arg0: i32) -> (i32, i32) {
    %c0_i32 = arith.constant 0 : i32
    %c0_i32_0 = arith.constant 0 : i32
    %c0_i32_1 = arith.constant 0 : i32
    return %c0_i32, %c0_i32_0 : i32, i32
  }
  func.func @transform_7(%arg0: i32) -> (i32, i32) {
    %c0_i32 = arith.constant 0 : i32
    %c0_i32_0 = arith.constant 0 : i32
    %c0_i32_1 = arith.constant 0 : i32
    return %c0_i32, %c0_i32_0 : i32, i32
  }
  func.func @transform_8(%arg0: i32) -> (i32, i32) {
    %c0_i32 = arith.constant 0 : i32
    %c0_i32_0 = arith.constant 0 : i32
    %c0_i32_1 = arith.constant 0 : i32
    return %c0_i32, %c0_i32_0 : i32, i32
  }
  func.func @transform_9(%arg0: i32) -> (i32, i32) {
    %c0_i32 = arith.constant 0 : i32
    %c0_i32_0 = arith.constant 0 : i32
    %c0_i32_1 = arith.constant 0 : i32
    return %c0_i32, %c0_i32_0 : i32, i32
  }
  func.func @transform_10(%arg0: i32) -> (i32, i32) {
    %c0_i32 = arith.constant 0 : i32
    %c0_i32_0 = arith.constant 0 : i32
    %c0_i32_1 = arith.constant 0 : i32
    return %c0_i32, %c0_i32_0 : i32, i32
  }
  func.func @transform_11(%arg0: i32) -> (i32, i32, i32) {
    %c0_i32 = arith.constant 0 : i32
    %c0_i32_0 = arith.constant 0 : i32
    %c0_i32_1 = arith.constant 0 : i32
    return %arg0, %c0_i32, %c0_i32_0 : i32, i32, i32
  }
  func.func @transform_12(%arg0: i32) -> (i32, i32, i32) {
    %c0_i32 = arith.constant 0 : i32
    %c0_i32_0 = arith.constant 0 : i32
    %c0_i32_1 = arith.constant 0 : i32
    return %arg0, %c0_i32, %c0_i32_0 : i32, i32, i32
  }
  func.func @transform_13(%arg0: i32) -> (i32, i32, i32) {
    %c0_i32 = arith.constant 0 : i32
    %c0_i32_0 = arith.constant 0 : i32
    %c0_i32_1 = arith.constant 0 : i32
    return %arg0, %c0_i32, %c0_i32_0 : i32, i32, i32
  }
  func.func @transform_14(%arg0: i32) -> (i32, i32, i32) {
    %c0_i32 = arith.constant 0 : i32
    %c0_i32_0 = arith.constant 0 : i32
    %c0_i32_1 = arith.constant 0 : i32
    return %arg0, %c0_i32, %c0_i32_0 : i32, i32, i32
  }
  func.func @transform_15(%arg0: i32) -> (i32, i32, i32) {
    %c0_i32 = arith.constant 0 : i32
    %c0_i32_0 = arith.constant 0 : i32
    %c0_i32_1 = arith.constant 0 : i32
    return %arg0, %c0_i32, %c0_i32_0 : i32, i32, i32
  }
  func.func @transform_16(%arg0: i32) -> (i32, i32, i32) {
    %c0_i32 = arith.constant 0 : i32
    %c0_i32_0 = arith.constant 0 : i32
    %c0_i32_1 = arith.constant 0 : i32
    return %arg0, %c0_i32, %c0_i32_0 : i32, i32, i32
  }
  func.func @transform_17(%arg0: i32) -> (i32, i32, i32) {
    %c0_i32 = arith.constant 0 : i32
    %c0_i32_0 = arith.constant 0 : i32
    %c0_i32_1 = arith.constant 0 : i32
    return %arg0, %c0_i32, %c0_i32_0 : i32, i32, i32
  }
  func.func @transform_18(%arg0: i32) -> (i32, i32, i32) {
    %c0_i32 = arith.constant 0 : i32
    %c0_i32_0 = arith.constant 0 : i32
    %c0_i32_1 = arith.constant 0 : i32
    return %arg0, %c0_i32, %c0_i32_0 : i32, i32, i32
  }
  func.func @transform_19(%arg0: i32) -> (i32, i32, i32) {
    %c0_i32 = arith.constant 0 : i32
    %c0_i32_0 = arith.constant 0 : i32
    %c0_i32_1 = arith.constant 0 : i32
    return %arg0, %c0_i32, %c0_i32_0 : i32, i32, i32
  }
  func.func @transform_20(%arg0: i32) -> (i32, i32, i32) {
    %c0_i32 = arith.constant 0 : i32
    %c0_i32_0 = arith.constant 0 : i32
    %c0_i32_1 = arith.constant 0 : i32
    return %arg0, %c0_i32, %c0_i32_0 : i32, i32, i32
  }
  func.func @transform_21(%arg0: i32) -> (i32, i32, i32) {
    %c0_i32 = arith.constant 0 : i32
    %c0_i32_0 = arith.constant 0 : i32
    %c0_i32_1 = arith.constant 0 : i32
    return %arg0, %c0_i32, %c0_i32_0 : i32, i32, i32
  }
  func.func @transform_22(%arg0: i32) -> (i32, i32, i32) {
    %c0_i32 = arith.constant 0 : i32
    %c0_i32_0 = arith.constant 0 : i32
    %c0_i32_1 = arith.constant 0 : i32
    return %arg0, %c0_i32, %c0_i32_0 : i32, i32, i32
  }
  func.func @transform_23(%arg0: i32) -> (i32, i32, i32) {
    %c0_i32 = arith.constant 0 : i32
    %c0_i32_0 = arith.constant 0 : i32
    %c0_i32_1 = arith.constant 0 : i32
    return %arg0, %c0_i32, %c0_i32_0 : i32, i32, i32
  }
  func.func @transform_24(%arg0: i32) -> (i32, i32, i32) {
    %c0_i32 = arith.constant 0 : i32
    %c0_i32_0 = arith.constant 0 : i32
    %c0_i32_1 = arith.constant 0 : i32
    return %arg0, %c0_i32, %c0_i32_0 : i32, i32, i32
  }
  func.func @transform_25(%arg0: i32) -> (i32, i32) {
    %c0_i32 = arith.constant 0 : i32
    %c0_i32_0 = arith.constant 0 : i32
    %c0_i32_1 = arith.constant 0 : i32
    return %c0_i32, %c0_i32_0 : i32, i32
  }
  func.func @transform_26(%arg0: i32) -> (i32, i32) {
    %c0_i32 = arith.constant 0 : i32
    %c0_i32_0 = arith.constant 0 : i32
    %c0_i32_1 = arith.constant 0 : i32
    return %c0_i32, %c0_i32_0 : i32, i32
  }
  func.func @transform_27(%arg0: i32) -> (i32, i32) {
    %c0_i32 = arith.constant 0 : i32
    %c0_i32_0 = arith.constant 0 : i32
    %c0_i32_1 = arith.constant 0 : i32
    return %c0_i32, %c0_i32_0 : i32, i32
  }
  func.func @transform_28(%arg0: i32) -> (i32, i32) {
    %c0_i32 = arith.constant 0 : i32
    %c0_i32_0 = arith.constant 0 : i32
    %c0_i32_1 = arith.constant 0 : i32
    return %c0_i32, %c0_i32_0 : i32, i32
  }
  func.func @transform_29(%arg0: i32) -> (i32, i32) {
    %c0_i32 = arith.constant 0 : i32
    %c0_i32_0 = arith.constant 0 : i32
    %c0_i32_1 = arith.constant 0 : i32
    return %c0_i32, %c0_i32_0 : i32, i32
  }
  func.func @transform_30(%arg0: i32) -> (i32, i32) {
    %c0_i32 = arith.constant 0 : i32
    %c0_i32_0 = arith.constant 0 : i32
    %c0_i32_1 = arith.constant 0 : i32
    return %c0_i32, %c0_i32_0 : i32, i32
  }
  func.func @transform_31(%arg0: i32) -> (i32, i32) {
    %c0_i32 = arith.constant 0 : i32
    %c0_i32_0 = arith.constant 0 : i32
    %c0_i32_1 = arith.constant 0 : i32
    return %c0_i32, %c0_i32_0 : i32, i32
  }
  func.func @transform_32(%arg0: i32) -> (i32, i32, i32, i32) {
    %c0_i32 = arith.constant 0 : i32
    %c0_i32_0 = arith.constant 0 : i32
    %c0_i32_1 = arith.constant 0 : i32
    %c0_i32_2 = arith.constant 0 : i32
    return %arg0, %c0_i32, %c0_i32_0, %c0_i32_1 : i32, i32, i32, i32
  }
  func.func @transform_33(%arg0: i32) -> (i32, i32) {
    %c0_i32 = arith.constant 0 : i32
    %c0_i32_0 = arith.constant 0 : i32
    %c0_i32_1 = arith.constant 0 : i32
    return %c0_i32, %c0_i32_0 : i32, i32
  }
}

</mosaic_0001>

<llo_original>
// kernel: _lambda_.1
$region0: #{_lambda_.1}
  #allocation0 [shape = 'u32[]', space=smem, size = 0x4, offset = 0x4, fixed_abs, tag = 'smem constant byte address 0x4 - core index']
  #allocation1 [shape = 'u32[144,128]{1,0:T(1,128)}', space=vmem, size = 0x12000, scoped, tag = 'internal scratch']
  #allocation2 [shape = 'f32[2,2,32]{2,1,0:T(2,128)}', space=vmem, size = 0x800, scoped, tag = 'scratch operand']
  %s0 = inlined_call_operand.smem [shape: u32[34], index: -1, kind: input, shape index: {}]
  %s1 = sld [smem:[%s0]]
  %s2 = scalar_lea.smem %s0, 1
  %s3 = sld [smem:[%s2]]
  %s4 = scalar_lea.smem %s0, 2
  %s5 = sld [smem:[%s4]]
  %s6 = scalar_lea.smem %s0, 3
  %s7 = sld [smem:[%s6]]
  %s8 = scalar_lea.smem %s0, 4
  %s9 = sld [smem:[%s8]]
  %s10 = scalar_lea.smem %s0, 5
  %s11 = sld [smem:[%s10]]
  %s12 = scalar_lea.smem %s0, 6
  %s13 = sld [smem:[%s12]]
  %s14 = scalar_lea.smem %s0, 7
  %s15 = sld [smem:[%s14]]
  %s16 = scalar_lea.smem %s0, 8
  %s17 = sld [smem:[%s16]]
  %s18 = scalar_lea.smem %s0, 9
  %s19 = sld [smem:[%s18]]
  %s20 = scalar_lea.smem %s0, 10
  %s21 = sld [smem:[%s20]]
  %s22 = scalar_lea.smem %s0, 11
  %s23 = sld [smem:[%s22]]
  %s24 = scalar_lea.smem %s0, 12
  %s25 = sld [smem:[%s24]]
  %s26 = scalar_lea.smem %s0, 13
  %s27 = sld [smem:[%s26]]
  %s28 = scalar_lea.smem %s0, 14
  %s29 = sld [smem:[%s28]]
  %s30 = scalar_lea.smem %s0, 15
  %s31 = sld [smem:[%s30]]
  %s32 = scalar_lea.smem %s0, 16
  %s33 = sld [smem:[%s32]]
  %s34 = scalar_lea.smem %s0, 17
  %s35 = sld [smem:[%s34]]
  %s36 = scalar_lea.smem %s0, 18
  %s37 = sld [smem:[%s36]]
  %s38 = scalar_lea.smem %s0, 19
  %s39 = sld [smem:[%s38]]
  %s40 = scalar_lea.smem %s0, 20
  %s41 = sld [smem:[%s40]]
  %s42 = scalar_lea.smem %s0, 21
  %s43 = sld [smem:[%s42]]
  %s44 = scalar_lea.smem %s0, 22
  %s45 = sld [smem:[%s44]]
  %s46 = scalar_lea.smem %s0, 23
  %s47 = sld [smem:[%s46]]
  %s48 = scalar_lea.smem %s0, 24
  %s49 = sld [smem:[%s48]]
  %s50 = scalar_lea.smem %s0, 25
  %s51 = sld [smem:[%s50]]
  %s52 = scalar_lea.smem %s0, 26
  %s53 = sld [smem:[%s52]]
  %s54 = scalar_lea.smem %s0, 27
  %s55 = sld [smem:[%s54]]
  %s56 = scalar_lea.smem %s0, 28
  %s57 = sld [smem:[%s56]]
  %s58 = scalar_lea.smem %s0, 29
  %s59 = sld [smem:[%s58]]
  %s60 = scalar_lea.smem %s0, 30
  %s61 = sld [smem:[%s60]]
  %s62 = scalar_lea.smem %s0, 31
  %s63 = sld [smem:[%s62]]
  %s64 = scalar_lea.smem %s0, 32
  %s65 = sld [smem:[%s64]]
  %s66 = scalar_lea.smem %s0, 33
  %s67 = sld [smem:[%s66]]
  %68 = xla_tuple %s65, %s67
  %s69 = sld [smem:[#allocation0]]
  $region209: #{_lambda_.1} parent=0
    _
  %s71 = ssub.s32 1, %s69
  %s72 = scalar_select 0, %s71, %s69
  $region1: #{_lambda_.1} parent=0
    #allocation3 [shape = 'u8[8192]{0}', space=vmem, size = 0x2000, scoped, tag = 'input window, operand 5, single buffered']
    #allocation4 [shape = 's32[2]{0}', space=sflag, size = 0x8, scoped, tag = 'scoped memory for _lambda_.1']
    #allocation5 [shape = 's32[2]{0}', space=sflag, size = 0x8, scoped, tag = 'scoped memory for _lambda_.1']
    #allocation6 [shape = 'u8[4096]{0}', space=vmem, size = 0x1000, scoped, tag = 'input window, operand 12']
    #allocation7 [shape = 's32[2]{0}', space=sflag, size = 0x8, scoped, tag = 'scoped memory for _lambda_.1']
    #allocation8 [shape = 'u8[8192]{0}', space=vmem, size = 0x2000, scoped, tag = 'input window, operand 13']
    #allocation9 [shape = 'u8[2048]{0}', space=vmem, size = 0x800, scoped, tag = 'input window, operand 22']
    #allocation10 [shape = 's32[2]{0}', space=sflag, size = 0x8, scoped, tag = 'scoped memory for _lambda_.1']
    #allocation11 [shape = 'u8[4096]{0}', space=vmem, size = 0x1000, scoped, tag = 'input window, operand 23']
    #allocation12 [shape = 'u8[196608]{0}', space=vmem, size = 0x30000, scoped, tag = 'input window, operand 25, single buffered']
    #allocation13 [shape = 's32[1]{0}', space=sflag, size = 0x4, scoped, tag = 'scoped memory for _lambda_.1']
    #allocation14 [shape = 'u8[512]{0}', space=vmem, size = 0x400, scoped, tag = 'input window, operand 28, single buffered']
    #allocation15 [shape = 'u8[512]{0}', space=vmem, size = 0x400, scoped, tag = 'input window, operand 31, single buffered']
    #allocation16 [shape = 's32[1]{0}', space=sflag, size = 0x4, scoped, tag = 'scoped memory for _lambda_.1']
    #allocation17 [shape = 'u8[512]{0}', space=vmem, size = 0x400, scoped, tag = 'output window, operand 1, single buffered']
    %73 = vsyncpa [#allocation4], 0
    %74 = vsyncpa [#allocation7], 0
    %s75 = scalar_lea.sflag [#allocation7], 1
    %76 = vsyncpa %s75, 0
    %77 = vsyncpa [#allocation10], 0
    %s78 = scalar_lea.sflag [#allocation10], 1
    %79 = vsyncpa %s78, 0
    %80 = vsyncpa [#allocation13], 0
    %81 = vsyncpa [#allocation16], 0
    %82 = vsyncpa [#allocation5], 0
    loop: start=0, step=1, limit=4
    $region2: #{_lambda_.1} parent=1 // loop_pre_header
      _
    $region3: #{_lambda_.1} parent=1 // loop_header
      %s84 = sphi 0, %s88
      %p85 = scmp.ge.s32.totalorder %s84, 4
      %s92 = sphi 0, %s92
      %s94 = sphi 0, %s92
      %s95 = sphi 0, %s94
      %s109 = sphi 0, %s95
      %s113 = sphi 0, %s113
      %s115 = sphi 0, %s113
      %s116 = sphi 0, %s115
      %s130 = sphi 0, %s116
      %s134 = sphi 0, %s134
      %s136 = sphi 0, %s134
      %s137 = sphi 0, %s136
      %s151 = sphi 0, %s137
      %s155 = sphi 0, %s155
      %s157 = sphi 0, %s155
      %s158 = sphi 0, %s157
      %s172 = sphi 0, %s158
      %s176 = sphi 0, %s176
      %s178 = sphi 0, %s176
      %s179 = sphi 0, %s178
      %s193 = sphi 0, %s179
      %s197 = sphi 0, %s197
      %s199 = sphi 0, %s197
      %s200 = sphi 0, %s199
      %s214 = sphi 0, %s200
      %s218 = sphi 0, %s218
      %s220 = sphi 0, %s218
      %s221 = sphi 0, %s220
      %s235 = sphi 0, %s221
      %s239 = sphi 0, %s239
      %s241 = sphi 0, %s239
      %s242 = sphi 0, %s241
      %s256 = sphi 0, %s242
      %s260 = sphi 0, %s260
      %s262 = sphi 0, %s260
      %s263 = sphi 0, %s262
      %s277 = sphi 0, %s263
      %s281 = sphi 0, %s281
      %s283 = sphi 0, %s281
      %s284 = sphi 0, %s283
      %s298 = sphi 0, %s284
      %s302 = sphi 0, %s302
      %s304 = sphi 0, %s302
      %s305 = sphi 0, %s304
      %s319 = sphi 0, %s305
      %s325 = sphi 0, %s327
      %s328 = sphi 0, %s325
      %s329 = sphi 0, %s328
      %s345 = sphi 0, %s329
      %s351 = sphi 0, %s353
      %s354 = sphi 0, %s351
      %s355 = sphi 0, %s354
      %s371 = sphi 0, %s355
      %s377 = sphi 0, %s379
      %s380 = sphi 0, %s377
      %s381 = sphi 0, %s380
      %s397 = sphi 0, %s381
      %s403 = sphi 0, %s405
      %s406 = sphi 0, %s403
      %s407 = sphi 0, %s406
      %s423 = sphi 0, %s407
      %s429 = sphi 0, %s431
      %s432 = sphi 0, %s429
      %s433 = sphi 0, %s432
      %s449 = sphi 0, %s433
      %s455 = sphi 0, %s457
      %s458 = sphi 0, %s455
      %s459 = sphi 0, %s458
      %s475 = sphi 0, %s459
      %s481 = sphi 0, %s483
      %s484 = sphi 0, %s481
      %s485 = sphi 0, %s484
      %s501 = sphi 0, %s485
      %s507 = sphi 0, %s509
      %s510 = sphi 0, %s507
      %s511 = sphi 0, %s510
      %s527 = sphi 0, %s511
      %s533 = sphi 0, %s535
      %s536 = sphi 0, %s533
      %s537 = sphi 0, %s536
      %s553 = sphi 0, %s537
      %s559 = sphi 0, %s561
      %s562 = sphi 0, %s559
      %s563 = sphi 0, %s562
      %s579 = sphi 0, %s563
      %s585 = sphi 0, %s587
      %s588 = sphi 0, %s585
      %s589 = sphi 0, %s588
      %s605 = sphi 0, %s589
      %s611 = sphi 0, %s613
      %s614 = sphi 0, %s611
      %s615 = sphi 0, %s614
      %s631 = sphi 0, %s615
      %s637 = sphi 0, %s639
      %s640 = sphi 0, %s637
      %s641 = sphi 0, %s640
      %s657 = sphi 0, %s641
      %s663 = sphi 0, %s665
      %s666 = sphi 0, %s663
      %s667 = sphi 0, %s666
      %s683 = sphi 0, %s667
      %s687 = sphi 0, %s687
      %s689 = sphi 0, %s687
      %s690 = sphi 0, %s689
      %s704 = sphi 0, %s690
      %s708 = sphi 0, %s708
      %s710 = sphi 0, %s708
      %s711 = sphi 0, %s710
      %s725 = sphi 0, %s711
      %s729 = sphi 0, %s729
      %s731 = sphi 0, %s729
      %s732 = sphi 0, %s731
      %s746 = sphi 0, %s732
      %s750 = sphi 0, %s750
      %s752 = sphi 0, %s750
      %s753 = sphi 0, %s752
      %s767 = sphi 0, %s753
      %s771 = sphi 0, %s771
      %s773 = sphi 0, %s771
      %s774 = sphi 0, %s773
      %s788 = sphi 0, %s774
      %s792 = sphi 0, %s792
      %s794 = sphi 0, %s792
      %s795 = sphi 0, %s794
      %s809 = sphi 0, %s795
      %s813 = sphi 0, %s813
      %s815 = sphi 0, %s813
      %s816 = sphi 0, %s815
      %s830 = sphi 0, %s816
      %s836 = sphi 0, %s838
      %s839 = sphi 0, %s836
      %s840 = sphi 0, %s839
      %s856 = sphi 0, %s840
      %s860 = sphi 0, %s860
      %s862 = sphi 0, %s860
      %s863 = sphi 0, %s862
      %s877 = sphi 0, %s863
    $region4: #{_lambda_.1} parent=1 // loop_header_branch
      %87 = sbr.rel (%p85) target = $region8
    $region5: #{_lambda_.1} parent=1 // loop_body
      %s89 = ssub.s32 %s84, 1
      %s90 = ssub.s32 %s84, 2
      %s91 = sadd.s32 %s84, 1
      %s93 = sadd.s32 %s92, 1
      %p96 = scmp.eq.s32.totalorder %s84, 1
      %p97 = scmp.ne.s32.totalorder %s92, %s94
      %p98 = scmp.eq.s32.totalorder %s84, 0
      %p99 = por %p97, %p98
      %p100 = scmp.ne.s32.totalorder %s92, %s94
      %p101 = scmp.eq.s32.totalorder %s89, 1
      %p102 = por %p100, %p101
      %p103 = scmp.ne.s32.totalorder %s94, %s95
      %p104 = scmp.eq.s32.totalorder %s89, 0
      %p105 = por %p103, %p104
      %p106 = scmp.ne.s32.totalorder %s94, %s95
      %p107 = scmp.eq.s32.totalorder %s90, 1
      %p108 = por %p106, %p107
      %p110 = scmp.ne.s32.totalorder %s95, %s109
      %p111 = scmp.eq.s32.totalorder %s90, 0
      %p112 = por %p110, %p111
      %s114 = sadd.s32 %s113, 1
      %p117 = scmp.eq.s32.totalorder %s84, 1
      %p118 = scmp.ne.s32.totalorder %s113, %s115
      %p119 = scmp.eq.s32.totalorder %s84, 0
      %p120 = por %p118, %p119
      %p121 = scmp.ne.s32.totalorder %s113, %s115
      %p122 = scmp.eq.s32.totalorder %s89, 1
      %p123 = por %p121, %p122
      %p124 = scmp.ne.s32.totalorder %s115, %s116
      %p125 = scmp.eq.s32.totalorder %s89, 0
      %p126 = por %p124, %p125
      %p127 = scmp.ne.s32.totalorder %s115, %s116
      %p128 = scmp.eq.s32.totalorder %s90, 1
      %p129 = por %p127, %p128
      %p131 = scmp.ne.s32.totalorder %s116, %s130
      %p132 = scmp.eq.s32.totalorder %s90, 0
      %p133 = por %p131, %p132
      %s135 = sadd.s32 %s134, 1
      %p138 = scmp.eq.s32.totalorder %s84, 1
      %p139 = scmp.ne.s32.totalorder %s134, %s136
      %p140 = scmp.eq.s32.totalorder %s84, 0
      %p141 = por %p139, %p140
      %p142 = scmp.ne.s32.totalorder %s134, %s136
      %p143 = scmp.eq.s32.totalorder %s89, 1
      %p144 = por %p142, %p143
      %p145 = scmp.ne.s32.totalorder %s136, %s137
      %p146 = scmp.eq.s32.totalorder %s89, 0
      %p147 = por %p145, %p146
      %p148 = scmp.ne.s32.totalorder %s136, %s137
      %p149 = scmp.eq.s32.totalorder %s90, 1
      %p150 = por %p148, %p149
      %p152 = scmp.ne.s32.totalorder %s137, %s151
      %p153 = scmp.eq.s32.totalorder %s90, 0
      %p154 = por %p152, %p153
      %s156 = sadd.s32 %s155, 1
      %p159 = scmp.eq.s32.totalorder %s84, 1
      %p160 = scmp.ne.s32.totalorder %s155, %s157
      %p161 = scmp.eq.s32.totalorder %s84, 0
      %p162 = por %p160, %p161
      %p163 = scmp.ne.s32.totalorder %s155, %s157
      %p164 = scmp.eq.s32.totalorder %s89, 1
      %p165 = por %p163, %p164
      %p166 = scmp.ne.s32.totalorder %s157, %s158
      %p167 = scmp.eq.s32.totalorder %s89, 0
      %p168 = por %p166, %p167
      %p169 = scmp.ne.s32.totalorder %s157, %s158
      %p170 = scmp.eq.s32.totalorder %s90, 1
      %p171 = por %p169, %p170
      %p173 = scmp.ne.s32.totalorder %s158, %s172
      %p174 = scmp.eq.s32.totalorder %s90, 0
      %p175 = por %p173, %p174
      %s177 = sadd.s32 %s176, 1
      %p180 = scmp.eq.s32.totalorder %s84, 1
      %p181 = scmp.ne.s32.totalorder %s176, %s178
      %p182 = scmp.eq.s32.totalorder %s84, 0
      %p183 = por %p181, %p182
      %p184 = scmp.ne.s32.totalorder %s176, %s178
      %p185 = scmp.eq.s32.totalorder %s89, 1
      %p186 = por %p184, %p185
      %p187 = scmp.ne.s32.totalorder %s178, %s179
      %p188 = scmp.eq.s32.totalorder %s89, 0
      %p189 = por %p187, %p188
      %p190 = scmp.ne.s32.totalorder %s178, %s179
      %p191 = scmp.eq.s32.totalorder %s90, 1
      %p192 = por %p190, %p191
      %p194 = scmp.ne.s32.totalorder %s179, %s193
      %p195 = scmp.eq.s32.totalorder %s90, 0
      %p196 = por %p194, %p195
      %s198 = sadd.s32 %s197, 1
      %p201 = scmp.eq.s32.totalorder %s84, 1
      %p202 = scmp.ne.s32.totalorder %s197, %s199
      %p203 = scmp.eq.s32.totalorder %s84, 0
      %p204 = por %p202, %p203
      %p205 = scmp.ne.s32.totalorder %s197, %s199
      %p206 = scmp.eq.s32.totalorder %s89, 1
      %p207 = por %p205, %p206
      %p208 = scmp.ne.s32.totalorder %s199, %s200
      %p209 = scmp.eq.s32.totalorder %s89, 0
      %p210 = por %p208, %p209
      %p211 = scmp.ne.s32.totalorder %s199, %s200
      %p212 = scmp.eq.s32.totalorder %s90, 1
      %p213 = por %p211, %p212
      %p215 = scmp.ne.s32.totalorder %s200, %s214
      %p216 = scmp.eq.s32.totalorder %s90, 0
      %p217 = por %p215, %p216
      %s219 = sadd.s32 %s218, 1
      %p222 = scmp.eq.s32.totalorder %s84, 1
      %p223 = scmp.ne.s32.totalorder %s218, %s220
      %p224 = scmp.eq.s32.totalorder %s84, 0
      %p225 = por %p223, %p224
      %p226 = scmp.ne.s32.totalorder %s218, %s220
      %p227 = scmp.eq.s32.totalorder %s89, 1
      %p228 = por %p226, %p227
      %p229 = scmp.ne.s32.totalorder %s220, %s221
      %p230 = scmp.eq.s32.totalorder %s89, 0
      %p231 = por %p229, %p230
      %p232 = scmp.ne.s32.totalorder %s220, %s221
      %p233 = scmp.eq.s32.totalorder %s90, 1
      %p234 = por %p232, %p233
      %p236 = scmp.ne.s32.totalorder %s221, %s235
      %p237 = scmp.eq.s32.totalorder %s90, 0
      %p238 = por %p236, %p237
      %s240 = sadd.s32 %s239, 1
      %p243 = scmp.eq.s32.totalorder %s84, 1
      %p244 = scmp.ne.s32.totalorder %s239, %s241
      %p245 = scmp.eq.s32.totalorder %s84, 0
      %p246 = por %p244, %p245
      %p247 = scmp.ne.s32.totalorder %s239, %s241
      %p248 = scmp.eq.s32.totalorder %s89, 1
      %p249 = por %p247, %p248
      %p250 = scmp.ne.s32.totalorder %s241, %s242
      %p251 = scmp.eq.s32.totalorder %s89, 0
      %p252 = por %p250, %p251
      %p253 = scmp.ne.s32.totalorder %s241, %s242
      %p254 = scmp.eq.s32.totalorder %s90, 1
      %p255 = por %p253, %p254
      %p257 = scmp.ne.s32.totalorder %s242, %s256
      %p258 = scmp.eq.s32.totalorder %s90, 0
      %p259 = por %p257, %p258
      %s261 = sadd.s32 %s260, 1
      %p264 = scmp.eq.s32.totalorder %s84, 1
      %p265 = scmp.ne.s32.totalorder %s260, %s262
      %p266 = scmp.eq.s32.totalorder %s84, 0
      %p267 = por %p265, %p266
      %p268 = scmp.ne.s32.totalorder %s260, %s262
      %p269 = scmp.eq.s32.totalorder %s89, 1
      %p270 = por %p268, %p269
      %p271 = scmp.ne.s32.totalorder %s262, %s263
      %p272 = scmp.eq.s32.totalorder %s89, 0
      %p273 = por %p271, %p272
      %p274 = scmp.ne.s32.totalorder %s262, %s263
      %p275 = scmp.eq.s32.totalorder %s90, 1
      %p276 = por %p274, %p275
      %p278 = scmp.ne.s32.totalorder %s263, %s277
      %p279 = scmp.eq.s32.totalorder %s90, 0
      %p280 = por %p278, %p279
      %s282 = sadd.s32 %s281, 1
      %p285 = scmp.eq.s32.totalorder %s84, 1
      %p286 = scmp.ne.s32.totalorder %s281, %s283
      %p287 = scmp.eq.s32.totalorder %s84, 0
      %p288 = por %p286, %p287
      %p289 = scmp.ne.s32.totalorder %s281, %s283
      %p290 = scmp.eq.s32.totalorder %s89, 1
      %p291 = por %p289, %p290
      %p292 = scmp.ne.s32.totalorder %s283, %s284
      %p293 = scmp.eq.s32.totalorder %s89, 0
      %p294 = por %p292, %p293
      %p295 = scmp.ne.s32.totalorder %s283, %s284
      %p296 = scmp.eq.s32.totalorder %s90, 1
      %p297 = por %p295, %p296
      %p299 = scmp.ne.s32.totalorder %s284, %s298
      %p300 = scmp.eq.s32.totalorder %s90, 0
      %p301 = por %p299, %p300
      %s303 = sadd.s32 %s302, 1
      %p306 = scmp.eq.s32.totalorder %s84, 1
      %p307 = scmp.ne.s32.totalorder %s302, %s304
      %p308 = scmp.eq.s32.totalorder %s84, 0
      %p309 = por %p307, %p308
      %p310 = scmp.ne.s32.totalorder %s302, %s304
      %p311 = scmp.eq.s32.totalorder %s89, 1
      %p312 = por %p310, %p311
      %p313 = scmp.ne.s32.totalorder %s304, %s305
      %p314 = scmp.eq.s32.totalorder %s89, 0
      %p315 = por %p313, %p314
      %p316 = scmp.ne.s32.totalorder %s304, %s305
      %p317 = scmp.eq.s32.totalorder %s90, 1
      %p318 = por %p316, %p317
      %p320 = scmp.ne.s32.totalorder %s305, %s319
      %p321 = scmp.eq.s32.totalorder %s90, 0
      %p322 = por %p320, %p321
      %s323 = ssub.s32 %s84, %s91
      %p324 = scmp.eq.s32.totalorder %s323, 0
      %s326 = sadd.s32 %s325, 1
      %s327 = scalar_select %p324, %s325, %s326
      %p330 = pneg %p324
      %p331 = scmp.eq.s32.totalorder %s84, 1
      %p332 = por %p330, %p331
      %p333 = scmp.ne.s32.totalorder %s325, %s328
      %p334 = scmp.eq.s32.totalorder %s84, 0
      %p335 = por %p333, %p334
      %p336 = scmp.ne.s32.totalorder %s325, %s328
      %p337 = scmp.eq.s32.totalorder %s89, 1
      %p338 = por %p336, %p337
      %p339 = scmp.ne.s32.totalorder %s328, %s329
      %p340 = scmp.eq.s32.totalorder %s89, 0
      %p341 = por %p339, %p340
      %p342 = scmp.ne.s32.totalorder %s328, %s329
      %p343 = scmp.eq.s32.totalorder %s90, 1
      %p344 = por %p342, %p343
      %p346 = scmp.ne.s32.totalorder %s329, %s345
      %p347 = scmp.eq.s32.totalorder %s90, 0
      %p348 = por %p346, %p347
      %s349 = ssub.s32 %s84, %s91
      %p350 = scmp.eq.s32.totalorder %s349, 0
      %s352 = sadd.s32 %s351, 1
      %s353 = scalar_select %p350, %s351, %s352
      %p356 = pneg %p350
      %p357 = scmp.eq.s32.totalorder %s84, 1
      %p358 = por %p356, %p357
      %p359 = scmp.ne.s32.totalorder %s351, %s354
      %p360 = scmp.eq.s32.totalorder %s84, 0
      %p361 = por %p359, %p360
      %p362 = scmp.ne.s32.totalorder %s351, %s354
      %p363 = scmp.eq.s32.totalorder %s89, 1
      %p364 = por %p362, %p363
      %p365 = scmp.ne.s32.totalorder %s354, %s355
      %p366 = scmp.eq.s32.totalorder %s89, 0
      %p367 = por %p365, %p366
      %p368 = scmp.ne.s32.totalorder %s354, %s355
      %p369 = scmp.eq.s32.totalorder %s90, 1
      %p370 = por %p368, %p369
      %p372 = scmp.ne.s32.totalorder %s355, %s371
      %p373 = scmp.eq.s32.totalorder %s90, 0
      %p374 = por %p372, %p373
      %s375 = ssub.s32 %s84, %s91
      %p376 = scmp.eq.s32.totalorder %s375, 0
      %s378 = sadd.s32 %s377, 1
      %s379 = scalar_select %p376, %s377, %s378
      %p382 = pneg %p376
      %p383 = scmp.eq.s32.totalorder %s84, 1
      %p384 = por %p382, %p383
      %p385 = scmp.ne.s32.totalorder %s377, %s380
      %p386 = scmp.eq.s32.totalorder %s84, 0
      %p387 = por %p385, %p386
      %p388 = scmp.ne.s32.totalorder %s377, %s380
      %p389 = scmp.eq.s32.totalorder %s89, 1
      %p390 = por %p388, %p389
      %p391 = scmp.ne.s32.totalorder %s380, %s381
      %p392 = scmp.eq.s32.totalorder %s89, 0
      %p393 = por %p391, %p392
      %p394 = scmp.ne.s32.totalorder %s380, %s381
      %p395 = scmp.eq.s32.totalorder %s90, 1
      %p396 = por %p394, %p395
      %p398 = scmp.ne.s32.totalorder %s381, %s397
      %p399 = scmp.eq.s32.totalorder %s90, 0
      %p400 = por %p398, %p399
      %s401 = ssub.s32 %s84, %s91
      %p402 = scmp.eq.s32.totalorder %s401, 0
      %s404 = sadd.s32 %s403, 1
      %s405 = scalar_select %p402, %s403, %s404
      %p408 = pneg %p402
      %p409 = scmp.eq.s32.totalorder %s84, 1
      %p410 = por %p408, %p409
      %p411 = scmp.ne.s32.totalorder %s403, %s406
      %p412 = scmp.eq.s32.totalorder %s84, 0
      %p413 = por %p411, %p412
      %p414 = scmp.ne.s32.totalorder %s403, %s406
      %p415 = scmp.eq.s32.totalorder %s89, 1
      %p416 = por %p414, %p415
      %p417 = scmp.ne.s32.totalorder %s406, %s407
      %p418 = scmp.eq.s32.totalorder %s89, 0
      %p419 = por %p417, %p418
      %p420 = scmp.ne.s32.totalorder %s406, %s407
      %p421 = scmp.eq.s32.totalorder %s90, 1
      %p422 = por %p420, %p421
      %p424 = scmp.ne.s32.totalorder %s407, %s423
      %p425 = scmp.eq.s32.totalorder %s90, 0
      %p426 = por %p424, %p425
      %s427 = ssub.s32 %s84, %s91
      %p428 = scmp.eq.s32.totalorder %s427, 0
      %s430 = sadd.s32 %s429, 1
      %s431 = scalar_select %p428, %s429, %s430
      %p434 = pneg %p428
      %p435 = scmp.eq.s32.totalorder %s84, 1
      %p436 = por %p434, %p435
      %p437 = scmp.ne.s32.totalorder %s429, %s432
      %p438 = scmp.eq.s32.totalorder %s84, 0
      %p439 = por %p437, %p438
      %p440 = scmp.ne.s32.totalorder %s429, %s432
      %p441 = scmp.eq.s32.totalorder %s89, 1
      %p442 = por %p440, %p441
      %p443 = scmp.ne.s32.totalorder %s432, %s433
      %p444 = scmp.eq.s32.totalorder %s89, 0
      %p445 = por %p443, %p444
      %p446 = scmp.ne.s32.totalorder %s432, %s433
      %p447 = scmp.eq.s32.totalorder %s90, 1
      %p448 = por %p446, %p447
      %p450 = scmp.ne.s32.totalorder %s433, %s449
      %p451 = scmp.eq.s32.totalorder %s90, 0
      %p452 = por %p450, %p451
      %s453 = ssub.s32 %s84, %s91
      %p454 = scmp.eq.s32.totalorder %s453, 0
      %s456 = sadd.s32 %s455, 1
      %s457 = scalar_select %p454, %s455, %s456
      %p460 = pneg %p454
      %p461 = scmp.eq.s32.totalorder %s84, 1
      %p462 = por %p460, %p461
      %p463 = scmp.ne.s32.totalorder %s455, %s458
      %p464 = scmp.eq.s32.totalorder %s84, 0
      %p465 = por %p463, %p464
      %p466 = scmp.ne.s32.totalorder %s455, %s458
      %p467 = scmp.eq.s32.totalorder %s89, 1
      %p468 = por %p466, %p467
      %p469 = scmp.ne.s32.totalorder %s458, %s459
      %p470 = scmp.eq.s32.totalorder %s89, 0
      %p471 = por %p469, %p470
      %p472 = scmp.ne.s32.totalorder %s458, %s459
      %p473 = scmp.eq.s32.totalorder %s90, 1
      %p474 = por %p472, %p473
      %p476 = scmp.ne.s32.totalorder %s459, %s475
      %p477 = scmp.eq.s32.totalorder %s90, 0
      %p478 = por %p476, %p477
      %s479 = ssub.s32 %s84, %s91
      %p480 = scmp.eq.s32.totalorder %s479, 0
      %s482 = sadd.s32 %s481, 1
      %s483 = scalar_select %p480, %s481, %s482
      %p486 = pneg %p480
      %p487 = scmp.eq.s32.totalorder %s84, 1
      %p488 = por %p486, %p487
      %p489 = scmp.ne.s32.totalorder %s481, %s484
      %p490 = scmp.eq.s32.totalorder %s84, 0
      %p491 = por %p489, %p490
      %p492 = scmp.ne.s32.totalorder %s481, %s484
      %p493 = scmp.eq.s32.totalorder %s89, 1
      %p494 = por %p492, %p493
      %p495 = scmp.ne.s32.totalorder %s484, %s485
      %p496 = scmp.eq.s32.totalorder %s89, 0
      %p497 = por %p495, %p496
      %p498 = scmp.ne.s32.totalorder %s484, %s485
      %p499 = scmp.eq.s32.totalorder %s90, 1
      %p500 = por %p498, %p499
      %p502 = scmp.ne.s32.totalorder %s485, %s501
      %p503 = scmp.eq.s32.totalorder %s90, 0
      %p504 = por %p502, %p503
      %s505 = ssub.s32 %s84, %s91
      %p506 = scmp.eq.s32.totalorder %s505, 0
      %s508 = sadd.s32 %s507, 1
      %s509 = scalar_select %p506, %s507, %s508
      %p512 = pneg %p506
      %p513 = scmp.eq.s32.totalorder %s84, 1
      %p514 = por %p512, %p513
      %p515 = scmp.ne.s32.totalorder %s507, %s510
      %p516 = scmp.eq.s32.totalorder %s84, 0
      %p517 = por %p515, %p516
      %p518 = scmp.ne.s32.totalorder %s507, %s510
      %p519 = scmp.eq.s32.totalorder %s89, 1
      %p520 = por %p518, %p519
      %p521 = scmp.ne.s32.totalorder %s510, %s511
      %p522 = scmp.eq.s32.totalorder %s89, 0
      %p523 = por %p521, %p522
      %p524 = scmp.ne.s32.totalorder %s510, %s511
      %p525 = scmp.eq.s32.totalorder %s90, 1
      %p526 = por %p524, %p525
      %p528 = scmp.ne.s32.totalorder %s511, %s527
      %p529 = scmp.eq.s32.totalorder %s90, 0
      %p530 = por %p528, %p529
      %s531 = ssub.s32 %s84, %s91
      %p532 = scmp.eq.s32.totalorder %s531, 0
      %s534 = sadd.s32 %s533, 1
      %s535 = scalar_select %p532, %s533, %s534
      %p538 = pneg %p532
      %p539 = scmp.eq.s32.totalorder %s84, 1
      %p540 = por %p538, %p539
      %p541 = scmp.ne.s32.totalorder %s533, %s536
      %p542 = scmp.eq.s32.totalorder %s84, 0
      %p543 = por %p541, %p542
      %p544 = scmp.ne.s32.totalorder %s533, %s536
      %p545 = scmp.eq.s32.totalorder %s89, 1
      %p546 = por %p544, %p545
      %p547 = scmp.ne.s32.totalorder %s536, %s537
      %p548 = scmp.eq.s32.totalorder %s89, 0
      %p549 = por %p547, %p548
      %p550 = scmp.ne.s32.totalorder %s536, %s537
      %p551 = scmp.eq.s32.totalorder %s90, 1
      %p552 = por %p550, %p551
      %p554 = scmp.ne.s32.totalorder %s537, %s553
      %p555 = scmp.eq.s32.totalorder %s90, 0
      %p556 = por %p554, %p555
      %s557 = ssub.s32 %s84, %s91
      %p558 = scmp.eq.s32.totalorder %s557, 0
      %s560 = sadd.s32 %s559, 1
      %s561 = scalar_select %p558, %s559, %s560
      %p564 = pneg %p558
      %p565 = scmp.eq.s32.totalorder %s84, 1
      %p566 = por %p564, %p565
      %p567 = scmp.ne.s32.totalorder %s559, %s562
      %p568 = scmp.eq.s32.totalorder %s84, 0
      %p569 = por %p567, %p568
      %p570 = scmp.ne.s32.totalorder %s559, %s562
      %p571 = scmp.eq.s32.totalorder %s89, 1
      %p572 = por %p570, %p571
      %p573 = scmp.ne.s32.totalorder %s562, %s563
      %p574 = scmp.eq.s32.totalorder %s89, 0
      %p575 = por %p573, %p574
      %p576 = scmp.ne.s32.totalorder %s562, %s563
      %p577 = scmp.eq.s32.totalorder %s90, 1
      %p578 = por %p576, %p577
      %p580 = scmp.ne.s32.totalorder %s563, %s579
      %p581 = scmp.eq.s32.totalorder %s90, 0
      %p582 = por %p580, %p581
      %s583 = ssub.s32 %s84, %s91
      %p584 = scmp.eq.s32.totalorder %s583, 0
      %s586 = sadd.s32 %s585, 1
      %s587 = scalar_select %p584, %s585, %s586
      %p590 = pneg %p584
      %p591 = scmp.eq.s32.totalorder %s84, 1
      %p592 = por %p590, %p591
      %p593 = scmp.ne.s32.totalorder %s585, %s588
      %p594 = scmp.eq.s32.totalorder %s84, 0
      %p595 = por %p593, %p594
      %p596 = scmp.ne.s32.totalorder %s585, %s588
      %p597 = scmp.eq.s32.totalorder %s89, 1
      %p598 = por %p596, %p597
      %p599 = scmp.ne.s32.totalorder %s588, %s589
      %p600 = scmp.eq.s32.totalorder %s89, 0
      %p601 = por %p599, %p600
      %p602 = scmp.ne.s32.totalorder %s588, %s589
      %p603 = scmp.eq.s32.totalorder %s90, 1
      %p604 = por %p602, %p603
      %p606 = scmp.ne.s32.totalorder %s589, %s605
      %p607 = scmp.eq.s32.totalorder %s90, 0
      %p608 = por %p606, %p607
      %s609 = ssub.s32 %s84, %s91
      %p610 = scmp.eq.s32.totalorder %s609, 0
      %s612 = sadd.s32 %s611, 1
      %s613 = scalar_select %p610, %s611, %s612
      %p616 = pneg %p610
      %p617 = scmp.eq.s32.totalorder %s84, 1
      %p618 = por %p616, %p617
      %p619 = scmp.ne.s32.totalorder %s611, %s614
      %p620 = scmp.eq.s32.totalorder %s84, 0
      %p621 = por %p619, %p620
      %p622 = scmp.ne.s32.totalorder %s611, %s614
      %p623 = scmp.eq.s32.totalorder %s89, 1
      %p624 = por %p622, %p623
      %p625 = scmp.ne.s32.totalorder %s614, %s615
      %p626 = scmp.eq.s32.totalorder %s89, 0
      %p627 = por %p625, %p626
      %p628 = scmp.ne.s32.totalorder %s614, %s615
      %p629 = scmp.eq.s32.totalorder %s90, 1
      %p630 = por %p628, %p629
      %p632 = scmp.ne.s32.totalorder %s615, %s631
      %p633 = scmp.eq.s32.totalorder %s90, 0
      %p634 = por %p632, %p633
      %s635 = ssub.s32 %s84, %s91
      %p636 = scmp.eq.s32.totalorder %s635, 0
      %s638 = sadd.s32 %s637, 1
      %s639 = scalar_select %p636, %s637, %s638
      %p642 = pneg %p636
      %p643 = scmp.eq.s32.totalorder %s84, 1
      %p644 = por %p642, %p643
      %p645 = scmp.ne.s32.totalorder %s637, %s640
      %p646 = scmp.eq.s32.totalorder %s84, 0
      %p647 = por %p645, %p646
      %p648 = scmp.ne.s32.totalorder %s637, %s640
      %p649 = scmp.eq.s32.totalorder %s89, 1
      %p650 = por %p648, %p649
      %p651 = scmp.ne.s32.totalorder %s640, %s641
      %p652 = scmp.eq.s32.totalorder %s89, 0
      %p653 = por %p651, %p652
      %p654 = scmp.ne.s32.totalorder %s640, %s641
      %p655 = scmp.eq.s32.totalorder %s90, 1
      %p656 = por %p654, %p655
      %p658 = scmp.ne.s32.totalorder %s641, %s657
      %p659 = scmp.eq.s32.totalorder %s90, 0
      %p660 = por %p658, %p659
      %s661 = ssub.s32 %s84, %s91
      %p662 = scmp.eq.s32.totalorder %s661, 0
      %s664 = sadd.s32 %s663, 1
      %s665 = scalar_select %p662, %s663, %s664
      %p668 = pneg %p662
      %p669 = scmp.eq.s32.totalorder %s84, 1
      %p670 = por %p668, %p669
      %p671 = scmp.ne.s32.totalorder %s663, %s666
      %p672 = scmp.eq.s32.totalorder %s84, 0
      %p673 = por %p671, %p672
      %p674 = scmp.ne.s32.totalorder %s663, %s666
      %p675 = scmp.eq.s32.totalorder %s89, 1
      %p676 = por %p674, %p675
      %p677 = scmp.ne.s32.totalorder %s666, %s667
      %p678 = scmp.eq.s32.totalorder %s89, 0
      %p679 = por %p677, %p678
      %p680 = scmp.ne.s32.totalorder %s666, %s667
      %p681 = scmp.eq.s32.totalorder %s90, 1
      %p682 = por %p680, %p681
      %p684 = scmp.ne.s32.totalorder %s667, %s683
      %p685 = scmp.eq.s32.totalorder %s90, 0
      %p686 = por %p684, %p685
      %s688 = sadd.s32 %s687, 1
      %p691 = scmp.eq.s32.totalorder %s84, 1
      %p692 = scmp.ne.s32.totalorder %s687, %s689
      %p693 = scmp.eq.s32.totalorder %s84, 0
      %p694 = por %p692, %p693
      %p695 = scmp.ne.s32.totalorder %s687, %s689
      %p696 = scmp.eq.s32.totalorder %s89, 1
      %p697 = por %p695, %p696
      %p698 = scmp.ne.s32.totalorder %s689, %s690
      %p699 = scmp.eq.s32.totalorder %s89, 0
      %p700 = por %p698, %p699
      %p701 = scmp.ne.s32.totalorder %s689, %s690
      %p702 = scmp.eq.s32.totalorder %s90, 1
      %p703 = por %p701, %p702
      %p705 = scmp.ne.s32.totalorder %s690, %s704
      %p706 = scmp.eq.s32.totalorder %s90, 0
      %p707 = por %p705, %p706
      %s709 = sadd.s32 %s708, 1
      %p712 = scmp.eq.s32.totalorder %s84, 1
      %p713 = scmp.ne.s32.totalorder %s708, %s710
      %p714 = scmp.eq.s32.totalorder %s84, 0
      %p715 = por %p713, %p714
      %p716 = scmp.ne.s32.totalorder %s708, %s710
      %p717 = scmp.eq.s32.totalorder %s89, 1
      %p718 = por %p716, %p717
      %p719 = scmp.ne.s32.totalorder %s710, %s711
      %p720 = scmp.eq.s32.totalorder %s89, 0
      %p721 = por %p719, %p720
      %p722 = scmp.ne.s32.totalorder %s710, %s711
      %p723 = scmp.eq.s32.totalorder %s90, 1
      %p724 = por %p722, %p723
      %p726 = scmp.ne.s32.totalorder %s711, %s725
      %p727 = scmp.eq.s32.totalorder %s90, 0
      %p728 = por %p726, %p727
      %s730 = sadd.s32 %s729, 1
      %p733 = scmp.eq.s32.totalorder %s84, 1
      %p734 = scmp.ne.s32.totalorder %s729, %s731
      %p735 = scmp.eq.s32.totalorder %s84, 0
      %p736 = por %p734, %p735
      %p737 = scmp.ne.s32.totalorder %s729, %s731
      %p738 = scmp.eq.s32.totalorder %s89, 1
      %p739 = por %p737, %p738
      %p740 = scmp.ne.s32.totalorder %s731, %s732
      %p741 = scmp.eq.s32.totalorder %s89, 0
      %p742 = por %p740, %p741
      %p743 = scmp.ne.s32.totalorder %s731, %s732
      %p744 = scmp.eq.s32.totalorder %s90, 1
      %p745 = por %p743, %p744
      %p747 = scmp.ne.s32.totalorder %s732, %s746
      %p748 = scmp.eq.s32.totalorder %s90, 0
      %p749 = por %p747, %p748
      %s751 = sadd.s32 %s750, 1
      %p754 = scmp.eq.s32.totalorder %s84, 1
      %p755 = scmp.ne.s32.totalorder %s750, %s752
      %p756 = scmp.eq.s32.totalorder %s84, 0
      %p757 = por %p755, %p756
      %p758 = scmp.ne.s32.totalorder %s750, %s752
      %p759 = scmp.eq.s32.totalorder %s89, 1
      %p760 = por %p758, %p759
      %p761 = scmp.ne.s32.totalorder %s752, %s753
      %p762 = scmp.eq.s32.totalorder %s89, 0
      %p763 = por %p761, %p762
      %p764 = scmp.ne.s32.totalorder %s752, %s753
      %p765 = scmp.eq.s32.totalorder %s90, 1
      %p766 = por %p764, %p765
      %p768 = scmp.ne.s32.totalorder %s753, %s767
      %p769 = scmp.eq.s32.totalorder %s90, 0
      %p770 = por %p768, %p769
      %s772 = sadd.s32 %s771, 1
      %p775 = scmp.eq.s32.totalorder %s84, 1
      %p776 = scmp.ne.s32.totalorder %s771, %s773
      %p777 = scmp.eq.s32.totalorder %s84, 0
      %p778 = por %p776, %p777
      %p779 = scmp.ne.s32.totalorder %s771, %s773
      %p780 = scmp.eq.s32.totalorder %s89, 1
      %p781 = por %p779, %p780
      %p782 = scmp.ne.s32.totalorder %s773, %s774
      %p783 = scmp.eq.s32.totalorder %s89, 0
      %p784 = por %p782, %p783
      %p785 = scmp.ne.s32.totalorder %s773, %s774
      %p786 = scmp.eq.s32.totalorder %s90, 1
      %p787 = por %p785, %p786
      %p789 = scmp.ne.s32.totalorder %s774, %s788
      %p790 = scmp.eq.s32.totalorder %s90, 0
      %p791 = por %p789, %p790
      %s793 = sadd.s32 %s792, 1
      %p796 = scmp.eq.s32.totalorder %s84, 1
      %p797 = scmp.ne.s32.totalorder %s792, %s794
      %p798 = scmp.eq.s32.totalorder %s84, 0
      %p799 = por %p797, %p798
      %p800 = scmp.ne.s32.totalorder %s792, %s794
      %p801 = scmp.eq.s32.totalorder %s89, 1
      %p802 = por %p800, %p801
      %p803 = scmp.ne.s32.totalorder %s794, %s795
      %p804 = scmp.eq.s32.totalorder %s89, 0
      %p805 = por %p803, %p804
      %p806 = scmp.ne.s32.totalorder %s794, %s795
      %p807 = scmp.eq.s32.totalorder %s90, 1
      %p808 = por %p806, %p807
      %p810 = scmp.ne.s32.totalorder %s795, %s809
      %p811 = scmp.eq.s32.totalorder %s90, 0
      %p812 = por %p810, %p811
      %s814 = sadd.s32 %s813, 1
      %p817 = scmp.eq.s32.totalorder %s84, 1
      %p818 = scmp.ne.s32.totalorder %s813, %s815
      %p819 = scmp.eq.s32.totalorder %s84, 0
      %p820 = por %p818, %p819
      %p821 = scmp.ne.s32.totalorder %s813, %s815
      %p822 = scmp.eq.s32.totalorder %s89, 1
      %p823 = por %p821, %p822
      %p824 = scmp.ne.s32.totalorder %s815, %s816
      %p825 = scmp.eq.s32.totalorder %s89, 0
      %p826 = por %p824, %p825
      %p827 = scmp.ne.s32.totalorder %s815, %s816
      %p828 = scmp.eq.s32.totalorder %s90, 1
      %p829 = por %p827, %p828
      %p831 = scmp.ne.s32.totalorder %s816, %s830
      %p832 = scmp.eq.s32.totalorder %s90, 0
      %p833 = por %p831, %p832
      %s834 = ssub.s32 %s84, %s91
      %p835 = scmp.eq.s32.totalorder %s834, 0
      %s837 = sadd.s32 %s836, 1
      %s838 = scalar_select %p835, %s836, %s837
      %p841 = pneg %p835
      %p842 = scmp.eq.s32.totalorder %s84, 1
      %p843 = por %p841, %p842
      %p844 = scmp.ne.s32.totalorder %s836, %s839
      %p845 = scmp.eq.s32.totalorder %s84, 0
      %p846 = por %p844, %p845
      %p847 = scmp.ne.s32.totalorder %s836, %s839
      %p848 = scmp.eq.s32.totalorder %s89, 1
      %p849 = por %p847, %p848
      %p850 = scmp.ne.s32.totalorder %s839, %s840
      %p851 = scmp.eq.s32.totalorder %s89, 0
      %p852 = por %p850, %p851
      %p853 = scmp.ne.s32.totalorder %s839, %s840
      %p854 = scmp.eq.s32.totalorder %s90, 1
      %p855 = por %p853, %p854
      %p857 = scmp.ne.s32.totalorder %s840, %s856
      %p858 = scmp.eq.s32.totalorder %s90, 0
      %p859 = por %p857, %p858
      %s861 = sadd.s32 %s860, 1
      %p864 = scmp.eq.s32.totalorder %s84, 1
      %p865 = scmp.ne.s32.totalorder %s860, %s862
      %p866 = scmp.eq.s32.totalorder %s84, 0
      %p867 = por %p865, %p866
      %p868 = scmp.ne.s32.totalorder %s860, %s862
      %p869 = scmp.eq.s32.totalorder %s89, 1
      %p870 = por %p868, %p869
      %p871 = scmp.ne.s32.totalorder %s862, %s863
      %p872 = scmp.eq.s32.totalorder %s89, 0
      %p873 = por %p871, %p872
      %p874 = scmp.ne.s32.totalorder %s862, %s863
      %p875 = scmp.eq.s32.totalorder %s90, 1
      %p876 = por %p874, %p875
      %p878 = scmp.ne.s32.totalorder %s863, %s877
      %p879 = scmp.eq.s32.totalorder %s90, 0
      %p880 = por %p878, %p879
      %p881 = scmp.le.s32.totalorder 1, %s84
      %p882 = scmp.lt.s32.totalorder %s84, 3
      %p883 = pnand %p881, %p882
      %p884 = pneg %p883
      // Predicated region
      $region9: #{_lambda_.1} parent=5 // pred_check
        _
      $region10: #{_lambda_.1} parent=5 // pred_check_branch
        %886 = sbr.rel (%p883) target = $region12
      $region11: #{_lambda_.1} parent=5 // pred_region
        %s887 = ssub.s32 %s84, 1
        // Predicated region
        $region13: #{_lambda_.1} parent=11 // pred_check
          %p888 = pneg %p105
        $region14: #{_lambda_.1} parent=11 // pred_check_branch
          %890 = sbr.rel (%p888) target = $region16
        $region15: #{_lambda_.1} parent=11 // pred_region
          _
        $region16: #{_lambda_.1} parent=11 // pred_fallthru
          _
        // Predicated region
        $region17: #{_lambda_.1} parent=11 // pred_check
          %p891 = pneg %p126
        $region18: #{_lambda_.1} parent=11 // pred_check_branch
          %893 = sbr.rel (%p891) target = $region20
        $region19: #{_lambda_.1} parent=11 // pred_region
          _
        $region20: #{_lambda_.1} parent=11 // pred_fallthru
          _
        // Predicated region
        $region21: #{_lambda_.1} parent=11 // pred_check
          %p894 = pneg %p147
        $region22: #{_lambda_.1} parent=11 // pred_check_branch
          %896 = sbr.rel (%p894) target = $region24
        $region23: #{_lambda_.1} parent=11 // pred_region
          _
        $region24: #{_lambda_.1} parent=11 // pred_fallthru
          _
        // Predicated region
        $region25: #{_lambda_.1} parent=11 // pred_check
          %p897 = pneg %p168
        $region26: #{_lambda_.1} parent=11 // pred_check_branch
          %899 = sbr.rel (%p897) target = $region28
        $region27: #{_lambda_.1} parent=11 // pred_region
          _
        $region28: #{_lambda_.1} parent=11 // pred_fallthru
          _
        // Predicated region
        $region29: #{_lambda_.1} parent=11 // pred_check
          %p900 = pneg %p189
        $region30: #{_lambda_.1} parent=11 // pred_check_branch
          %902 = sbr.rel (%p900) target = $region32
        $region31: #{_lambda_.1} parent=11 // pred_region
          _
        $region32: #{_lambda_.1} parent=11 // pred_fallthru
          _
        // Predicated region
        $region33: #{_lambda_.1} parent=11 // pred_check
          %p903 = pneg %p210
        $region34: #{_lambda_.1} parent=11 // pred_check_branch
          %905 = sbr.rel (%p903) target = $region36
        $region35: #{_lambda_.1} parent=11 // pred_region
          %s907 = ssub.s32 256, 256
          %908 = vsyncadd [#allocation4], %s907
          %s909 = sshll.u32 [#allocation3], 4
          %s910 = int_to_ptr.vmem [resolvable:$true] %s909
          %915 = dma.hbm_to_vmem [thread:$0]  %s11, 256, %s910, [#allocation4], 64, 64, 4
        $region36: #{_lambda_.1} parent=11 // pred_fallthru
          _
        // Predicated region
        $region37: #{_lambda_.1} parent=11 // pred_check
          %p916 = pneg %p231
        $region38: #{_lambda_.1} parent=11 // pred_check_branch
          %918 = sbr.rel (%p916) target = $region40
        $region39: #{_lambda_.1} parent=11 // pred_region
          _
        $region40: #{_lambda_.1} parent=11 // pred_fallthru
          _
        // Predicated region
        $region41: #{_lambda_.1} parent=11 // pred_check
          %p919 = pneg %p252
        $region42: #{_lambda_.1} parent=11 // pred_check_branch
          %921 = sbr.rel (%p919) target = $region44
        $region43: #{_lambda_.1} parent=11 // pred_region
          _
        $region44: #{_lambda_.1} parent=11 // pred_fallthru
          _
        // Predicated region
        $region45: #{_lambda_.1} parent=11 // pred_check
          %p922 = pneg %p273
        $region46: #{_lambda_.1} parent=11 // pred_check_branch
          %924 = sbr.rel (%p922) target = $region48
        $region47: #{_lambda_.1} parent=11 // pred_region
          _
        $region48: #{_lambda_.1} parent=11 // pred_fallthru
          _
        // Predicated region
        $region49: #{_lambda_.1} parent=11 // pred_check
          %p925 = pneg %p294
        $region50: #{_lambda_.1} parent=11 // pred_check_branch
          %927 = sbr.rel (%p925) target = $region52
        $region51: #{_lambda_.1} parent=11 // pred_region
          _
        $region52: #{_lambda_.1} parent=11 // pred_fallthru
          _
        // Predicated region
        $region53: #{_lambda_.1} parent=11 // pred_check
          %p928 = pneg %p315
        $region54: #{_lambda_.1} parent=11 // pred_check_branch
          %930 = sbr.rel (%p928) target = $region56
        $region55: #{_lambda_.1} parent=11 // pred_region
          _
        $region56: #{_lambda_.1} parent=11 // pred_fallthru
          _
        // Predicated region
        $region57: #{_lambda_.1} parent=11 // pred_check
          %p931 = pneg %p700
        $region58: #{_lambda_.1} parent=11 // pred_check_branch
          %933 = sbr.rel (%p931) target = $region60
        $region59: #{_lambda_.1} parent=11 // pred_region
          %s935 = ssub.s32 6144, 6144
          %936 = vsyncadd [#allocation13], %s935
          %s937 = sshll.u32 [#allocation12], 4
          %s938 = int_to_ptr.vmem [resolvable:$true] %s937
          %943 = dma.hbm_to_vmem [thread:$0]  %s51, 6144, %s938, [#allocation13], 64, 64, 4
        $region60: #{_lambda_.1} parent=11 // pred_fallthru
          _
        // Predicated region
        $region61: #{_lambda_.1} parent=11 // pred_check
          %p944 = pneg %p721
        $region62: #{_lambda_.1} parent=11 // pred_check_branch
          %946 = sbr.rel (%p944) target = $region64
        $region63: #{_lambda_.1} parent=11 // pred_region
          _
        $region64: #{_lambda_.1} parent=11 // pred_fallthru
          _
        // Predicated region
        $region65: #{_lambda_.1} parent=11 // pred_check
          %p947 = pneg %p742
        $region66: #{_lambda_.1} parent=11 // pred_check_branch
          %949 = sbr.rel (%p947) target = $region68
        $region67: #{_lambda_.1} parent=11 // pred_region
          _
        $region68: #{_lambda_.1} parent=11 // pred_fallthru
          _
        // Predicated region
        $region69: #{_lambda_.1} parent=11 // pred_check
          %p950 = pneg %p763
        $region70: #{_lambda_.1} parent=11 // pred_check_branch
          %952 = sbr.rel (%p950) target = $region72
        $region71: #{_lambda_.1} parent=11 // pred_region
          %s954 = ssub.s32 16, 16
          %955 = vsyncadd [#allocation13], %s954
          %s957 = sshll.u32 [#allocation14], 4
          %s958 = int_to_ptr.vmem [resolvable:$true] %s957
          %960 = dma.hbm_to_vmem [thread:$0]  %s57, 16, %s958, [#allocation13]
        $region72: #{_lambda_.1} parent=11 // pred_fallthru
          _
        // Predicated region
        $region73: #{_lambda_.1} parent=11 // pred_check
          %p961 = pneg %p784
        $region74: #{_lambda_.1} parent=11 // pred_check_branch
          %963 = sbr.rel (%p961) target = $region76
        $region75: #{_lambda_.1} parent=11 // pred_region
          _
        $region76: #{_lambda_.1} parent=11 // pred_fallthru
          _
        // Predicated region
        $region77: #{_lambda_.1} parent=11 // pred_check
          %p964 = pneg %p805
        $region78: #{_lambda_.1} parent=11 // pred_check_branch
          %966 = sbr.rel (%p964) target = $region80
        $region79: #{_lambda_.1} parent=11 // pred_region
          _
        $region80: #{_lambda_.1} parent=11 // pred_fallthru
          _
        // Predicated region
        $region81: #{_lambda_.1} parent=11 // pred_check
          %p967 = pneg %p826
        $region82: #{_lambda_.1} parent=11 // pred_check_branch
          %969 = sbr.rel (%p967) target = $region84
        $region83: #{_lambda_.1} parent=11 // pred_region
          %s971 = ssub.s32 16, 16
          %972 = vsyncadd [#allocation16], %s971
          %s974 = sshll.u32 [#allocation15], 4
          %s975 = int_to_ptr.vmem [resolvable:$true] %s974
          %977 = dma.hbm_to_vmem [thread:$0]  %s63, 16, %s975, [#allocation16]
        $region84: #{_lambda_.1} parent=11 // pred_fallthru
          _
      $region12: #{_lambda_.1} parent=5 // pred_fallthru
        _
      %p978 = scmp.lt.s32.totalorder %s84, 2
      // Predicated region
      $region85: #{_lambda_.1} parent=5 // pred_check
        %p979 = pneg %p978
      $region86: #{_lambda_.1} parent=5 // pred_check_branch
        %981 = sbr.rel (%p979) target = $region88
      $region87: #{_lambda_.1} parent=5 // pred_region
        // Predicated region
        $region89: #{_lambda_.1} parent=87 // pred_check
          %p982 = pneg %p335
        $region90: #{_lambda_.1} parent=87 // pred_check_branch
          %984 = sbr.rel (%p982) target = $region92
        $region91: #{_lambda_.1} parent=87 // pred_region
          %p985 = scmp.lt.s32.totalorder %s84, 1
          %s986 = scalar_select %p985, %s84, 1
          %s987 = smul.addr %s986, 2
          %s988 = smul.addr %s987, 8
          %s989 = scalar_lea.vmem %s23, %s988
        $region92: #{_lambda_.1} parent=87 // pred_fallthru
          _
        // Predicated region
        $region93: #{_lambda_.1} parent=87 // pred_check
          %p990 = pneg %p361
        $region94: #{_lambda_.1} parent=87 // pred_check_branch
          %992 = sbr.rel (%p990) target = $region96
        $region95: #{_lambda_.1} parent=87 // pred_region
          %s993 = sand.u32 %s84, 1
          %s994 = scalar_lea.sflag [#allocation7], %s993
          %s995 = sand.u32 %s351, 1
          %s996 = smul.addr %s995, 4
          %s997 = scalar_lea.vmem [#allocation6], %s996
          %s999 = ssub.s32 64, 64
          %1000 = vsyncadd %s994, %s999
          %s1001 = smul.addr %s84, 64
          %s1002 = scalar_lea.hbm %s25, %s1001
          %s1004 = sshll.u32 %s997, 4
          %s1005 = int_to_ptr.vmem [resolvable:$true] %s1004
          %1007 = dma.hbm_to_vmem [thread:$0]  %s1002, 64, %s1005, %s994
        $region96: #{_lambda_.1} parent=87 // pred_fallthru
          _
        // Predicated region
        $region97: #{_lambda_.1} parent=87 // pred_check
          %p1008 = pneg %p387
        $region98: #{_lambda_.1} parent=87 // pred_check_branch
          %1010 = sbr.rel (%p1008) target = $region100
        $region99: #{_lambda_.1} parent=87 // pred_region
          %s1011 = sand.u32 %s84, 1
          %s1012 = scalar_lea.sflag [#allocation7], %s1011
          %s1013 = sand.u32 %s377, 1
          %s1014 = smul.addr %s1013, 8
          %s1015 = scalar_lea.vmem [#allocation8], %s1014
          %s1017 = ssub.s32 128, 128
          %1018 = vsyncadd %s1012, %s1017
          %s1019 = smul.addr %s84, 128
          %s1020 = scalar_lea.hbm %s27, %s1019
          %s1022 = sshll.u32 %s1015, 4
          %s1023 = int_to_ptr.vmem [resolvable:$true] %s1022
          %1025 = dma.hbm_to_vmem [thread:$0]  %s1020, 128, %s1023, %s1012
        $region100: #{_lambda_.1} parent=87 // pred_fallthru
          _
        // Predicated region
        $region101: #{_lambda_.1} parent=87 // pred_check
          %p1026 = pneg %p413
        $region102: #{_lambda_.1} parent=87 // pred_check_branch
          %1028 = sbr.rel (%p1026) target = $region104
        $region103: #{_lambda_.1} parent=87 // pred_region
          %p1029 = scmp.lt.s32.totalorder %s84, 1
          %s1030 = scalar_select %p1029, %s84, 1
          %s1031 = smul.addr %s1030, 2
          %s1032 = smul.addr %s1031, 4
          %s1033 = scalar_lea.vmem %s29, %s1032
        $region104: #{_lambda_.1} parent=87 // pred_fallthru
          _
        // Predicated region
        $region105: #{_lambda_.1} parent=87 // pred_check
          %p1034 = pneg %p439
        $region106: #{_lambda_.1} parent=87 // pred_check_branch
          %1036 = sbr.rel (%p1034) target = $region108
        $region107: #{_lambda_.1} parent=87 // pred_region
          %p1037 = scmp.lt.s32.totalorder %s84, 1
          %s1038 = scalar_select %p1037, %s84, 1
          %s1039 = smul.addr %s1038, 2
          %s1040 = smul.addr %s1039, 8
          %s1041 = scalar_lea.vmem %s31, %s1040
        $region108: #{_lambda_.1} parent=87 // pred_fallthru
          _
        // Predicated region
        $region109: #{_lambda_.1} parent=87 // pred_check
          %p1042 = pneg %p465
        $region110: #{_lambda_.1} parent=87 // pred_check_branch
          %1044 = sbr.rel (%p1042) target = $region112
        $region111: #{_lambda_.1} parent=87 // pred_region
          %p1045 = scmp.lt.s32.totalorder %s84, 1
          %s1046 = scalar_select %p1045, %s84, 1
          %s1047 = smul.addr %s1046, 2
          %s1048 = smul.addr %s1047, 4
          %s1049 = scalar_lea.vmem %s33, %s1048
        $region112: #{_lambda_.1} parent=87 // pred_fallthru
          _
        // Predicated region
        $region113: #{_lambda_.1} parent=87 // pred_check
          %p1050 = pneg %p491
        $region114: #{_lambda_.1} parent=87 // pred_check_branch
          %1052 = sbr.rel (%p1050) target = $region116
        $region115: #{_lambda_.1} parent=87 // pred_region
          %p1053 = scmp.lt.s32.totalorder %s84, 1
          %s1054 = scalar_select %p1053, %s84, 1
          %s1055 = smul.addr %s1054, 2
          %s1056 = smul.addr %s1055, 8
          %s1057 = scalar_lea.vmem %s35, %s1056
        $region116: #{_lambda_.1} parent=87 // pred_fallthru
          _
        // Predicated region
        $region117: #{_lambda_.1} parent=87 // pred_check
          %p1058 = pneg %p517
        $region118: #{_lambda_.1} parent=87 // pred_check_branch
          %1060 = sbr.rel (%p1058) target = $region120
        $region119: #{_lambda_.1} parent=87 // pred_region
          %p1061 = scmp.lt.s32.totalorder %s84, 1
          %s1062 = scalar_select %p1061, %s84, 1
          %s1063 = smul.addr %s1062, 2
          %s1064 = smul.addr %s1063, 4
          %s1065 = scalar_lea.vmem %s37, %s1064
        $region120: #{_lambda_.1} parent=87 // pred_fallthru
          _
        // Predicated region
        $region121: #{_lambda_.1} parent=87 // pred_check
          %p1066 = pneg %p543
        $region122: #{_lambda_.1} parent=87 // pred_check_branch
          %1068 = sbr.rel (%p1066) target = $region124
        $region123: #{_lambda_.1} parent=87 // pred_region
          %p1069 = scmp.lt.s32.totalorder %s84, 1
          %s1070 = scalar_select %p1069, %s84, 1
          %s1071 = smul.addr %s1070, 2
          %s1072 = smul.addr %s1071, 8
          %s1073 = scalar_lea.vmem %s39, %s1072
        $region124: #{_lambda_.1} parent=87 // pred_fallthru
          _
        // Predicated region
        $region125: #{_lambda_.1} parent=87 // pred_check
          %p1074 = pneg %p569
        $region126: #{_lambda_.1} parent=87 // pred_check_branch
          %1076 = sbr.rel (%p1074) target = $region128
        $region127: #{_lambda_.1} parent=87 // pred_region
          %p1077 = scmp.lt.s32.totalorder %s84, 1
          %s1078 = scalar_select %p1077, %s84, 1
          %s1079 = smul.addr %s1078, 2
          %s1080 = smul.addr %s1079, 4
          %s1081 = scalar_lea.vmem %s41, %s1080
        $region128: #{_lambda_.1} parent=87 // pred_fallthru
          _
        // Predicated region
        $region129: #{_lambda_.1} parent=87 // pred_check
          %p1082 = pneg %p595
        $region130: #{_lambda_.1} parent=87 // pred_check_branch
          %1084 = sbr.rel (%p1082) target = $region132
        $region131: #{_lambda_.1} parent=87 // pred_region
          %p1085 = scmp.lt.s32.totalorder %s84, 1
          %s1086 = scalar_select %p1085, %s84, 1
          %s1087 = smul.addr %s1086, 2
          %s1088 = smul.addr %s1087, 8
          %s1089 = scalar_lea.vmem %s43, %s1088
        $region132: #{_lambda_.1} parent=87 // pred_fallthru
          _
        // Predicated region
        $region133: #{_lambda_.1} parent=87 // pred_check
          %p1090 = pneg %p621
        $region134: #{_lambda_.1} parent=87 // pred_check_branch
          %1092 = sbr.rel (%p1090) target = $region136
        $region135: #{_lambda_.1} parent=87 // pred_region
          %s1093 = sand.u32 %s84, 1
          %s1094 = scalar_lea.sflag [#allocation10], %s1093
          %s1095 = sand.u32 %s611, 1
          %s1096 = smul.addr %s1095, 2
          %s1097 = scalar_lea.vmem [#allocation9], %s1096
          %s1099 = ssub.s32 32, 32
          %1100 = vsyncadd %s1094, %s1099
          %s1101 = smul.addr %s84, 32
          %s1102 = scalar_lea.hbm %s45, %s1101
          %s1104 = sshll.u32 %s1097, 4
          %s1105 = int_to_ptr.vmem [resolvable:$true] %s1104
          %1107 = dma.hbm_to_vmem [thread:$0]  %s1102, 32, %s1105, %s1094
        $region136: #{_lambda_.1} parent=87 // pred_fallthru
          _
        // Predicated region
        $region137: #{_lambda_.1} parent=87 // pred_check
          %p1108 = pneg %p647
        $region138: #{_lambda_.1} parent=87 // pred_check_branch
          %1110 = sbr.rel (%p1108) target = $region140
        $region139: #{_lambda_.1} parent=87 // pred_region
          %s1111 = sand.u32 %s84, 1
          %s1112 = scalar_lea.sflag [#allocation10], %s1111
          %s1113 = sand.u32 %s637, 1
          %s1114 = smul.addr %s1113, 4
          %s1115 = scalar_lea.vmem [#allocation11], %s1114
          %s1117 = ssub.s32 64, 64
          %1118 = vsyncadd %s1112, %s1117
          %s1119 = smul.addr %s84, 64
          %s1120 = scalar_lea.hbm %s47, %s1119
          %s1122 = sshll.u32 %s1115, 4
          %s1123 = int_to_ptr.vmem [resolvable:$true] %s1122
          %1125 = dma.hbm_to_vmem [thread:$0]  %s1120, 64, %s1123, %s1112
        $region140: #{_lambda_.1} parent=87 // pred_fallthru
          _
        // Predicated region
        $region141: #{_lambda_.1} parent=87 // pred_check
          %p1126 = pneg %p673
        $region142: #{_lambda_.1} parent=87 // pred_check_branch
          %1128 = sbr.rel (%p1126) target = $region144
        $region143: #{_lambda_.1} parent=87 // pred_region
          %p1129 = scmp.lt.s32.totalorder %s84, 1
          %s1130 = scalar_select %p1129, %s84, 1
          %s1131 = smul.addr %s1130, 4
          %s1132 = smul.addr %s1131, 2
          %s1133 = scalar_lea.vmem %s49, %s1132
        $region144: #{_lambda_.1} parent=87 // pred_fallthru
          _
      $region88: #{_lambda_.1} parent=5 // pred_fallthru
        _
      %p1134 = scmp.le.s32.totalorder 1, %s84
      %p1135 = scmp.lt.s32.totalorder %s84, 3
      %p1136 = pnand %p1134, %p1135
      %p1137 = pneg %p1136
      // Predicated region
      $region145: #{_lambda_.1} parent=5 // pred_check
        _
      $region146: #{_lambda_.1} parent=5 // pred_check_branch
        %1139 = sbr.rel (%p1136) target = $region148
      $region147: #{_lambda_.1} parent=5 // pred_region
        %s1140 = ssub.s32 %s84, 1
        // Predicated region
        $region149: #{_lambda_.1} parent=147 // pred_check
          %p1141 = pneg %p210
        $region150: #{_lambda_.1} parent=147 // pred_check_branch
          %1143 = sbr.rel (%p1141) target = $region152
        $region151: #{_lambda_.1} parent=147 // pred_region
          %1144 = dma.done [#allocation4], 256
        $region152: #{_lambda_.1} parent=147 // pred_fallthru
          _
        %s1145 = sand.u32 %s89, 1
        %s1146 = scalar_lea.sflag [#allocation7], %s1145
        %s1147 = sand.u32 %s354, 1
        %s1148 = smul.addr %s1147, 4
        %s1149 = scalar_lea.vmem [#allocation6], %s1148
        // Predicated region
        $region153: #{_lambda_.1} parent=147 // pred_check
          %p1150 = pneg %p367
        $region154: #{_lambda_.1} parent=147 // pred_check_branch
          %1152 = sbr.rel (%p1150) target = $region156
        $region155: #{_lambda_.1} parent=147 // pred_region
          %1153 = dma.done %s1146, 64
        $region156: #{_lambda_.1} parent=147 // pred_fallthru
          _
        %s1154 = sand.u32 %s89, 1
        %s1155 = scalar_lea.sflag [#allocation7], %s1154
        %s1156 = sand.u32 %s380, 1
        %s1157 = smul.addr %s1156, 8
        %s1158 = scalar_lea.vmem [#allocation8], %s1157
        // Predicated region
        $region157: #{_lambda_.1} parent=147 // pred_check
          %p1159 = pneg %p393
        $region158: #{_lambda_.1} parent=147 // pred_check_branch
          %1161 = sbr.rel (%p1159) target = $region160
        $region159: #{_lambda_.1} parent=147 // pred_region
          %1162 = dma.done %s1155, 128
        $region160: #{_lambda_.1} parent=147 // pred_fallthru
          _
        %s1163 = sand.u32 %s89, 1
        %s1164 = scalar_lea.sflag [#allocation10], %s1163
        %s1165 = sand.u32 %s614, 1
        %s1166 = smul.addr %s1165, 2
        %s1167 = scalar_lea.vmem [#allocation9], %s1166
        // Predicated region
        $region161: #{_lambda_.1} parent=147 // pred_check
          %p1168 = pneg %p627
        $region162: #{_lambda_.1} parent=147 // pred_check_branch
          %1170 = sbr.rel (%p1168) target = $region164
        $region163: #{_lambda_.1} parent=147 // pred_region
          %1171 = dma.done %s1164, 32
        $region164: #{_lambda_.1} parent=147 // pred_fallthru
          _
        %s1172 = sand.u32 %s89, 1
        %s1173 = scalar_lea.sflag [#allocation10], %s1172
        %s1174 = sand.u32 %s640, 1
        %s1175 = smul.addr %s1174, 4
        %s1176 = scalar_lea.vmem [#allocation11], %s1175
        // Predicated region
        $region165: #{_lambda_.1} parent=147 // pred_check
          %p1177 = pneg %p653
        $region166: #{_lambda_.1} parent=147 // pred_check_branch
          %1179 = sbr.rel (%p1177) target = $region168
        $region167: #{_lambda_.1} parent=147 // pred_region
          %1180 = dma.done %s1173, 64
        $region168: #{_lambda_.1} parent=147 // pred_fallthru
          _
        // Predicated region
        $region169: #{_lambda_.1} parent=147 // pred_check
          %p1181 = pneg %p700
        $region170: #{_lambda_.1} parent=147 // pred_check_branch
          %1183 = sbr.rel (%p1181) target = $region172
        $region171: #{_lambda_.1} parent=147 // pred_region
          %1184 = dma.done [#allocation13], 6144
        $region172: #{_lambda_.1} parent=147 // pred_fallthru
          _
        // Predicated region
        $region173: #{_lambda_.1} parent=147 // pred_check
          %p1185 = pneg %p763
        $region174: #{_lambda_.1} parent=147 // pred_check_branch
          %1187 = sbr.rel (%p1185) target = $region176
        $region175: #{_lambda_.1} parent=147 // pred_region
          %1188 = dma.done [#allocation13], 16
        $region176: #{_lambda_.1} parent=147 // pred_fallthru
          _
        // Predicated region
        $region177: #{_lambda_.1} parent=147 // pred_check
          %p1189 = pneg %p826
        $region178: #{_lambda_.1} parent=147 // pred_check_branch
          %1191 = sbr.rel (%p1189) target = $region180
        $region179: #{_lambda_.1} parent=147 // pred_region
          %1192 = dma.done [#allocation16], 16
        $region180: #{_lambda_.1} parent=147 // pred_fallthru
          _
        %p1193 = pneg %p105
        %p1194 = pneg %p102
        %p1195 = pneg %p126
        %p1196 = pneg %p123
        %p1197 = pneg %p147
        %p1198 = pneg %p144
        %p1199 = pneg %p168
        %p1200 = pneg %p165
        %p1201 = pneg %p189
        %p1202 = pneg %p186
        %p1203 = pneg %p210
        %p1204 = pneg %p207
        %p1205 = pneg %p231
        %p1206 = pneg %p228
        %p1207 = pneg %p252
        %p1208 = pneg %p249
        %p1209 = pneg %p273
        %p1210 = pneg %p270
        %p1211 = pneg %p294
        %p1212 = pneg %p291
        %p1213 = pneg %p315
        %p1214 = pneg %p312
        %p1215 = scmp.lt.s32.totalorder %s89, 1
        %s1216 = scalar_select %p1215, %s89, 1
        %s1217 = smul.addr %s1216, 2
        %s1218 = smul.addr %s1217, 8
        %s1219 = scalar_lea.vmem %s23, %s1218
        %p1220 = pneg %p341
        %p1221 = pneg %p338
        %s1222 = sand.u32 %s89, 1
        %s1223 = scalar_lea.sflag [#allocation7], %s1222
        %s1224 = sand.u32 %s354, 1
        %s1225 = smul.addr %s1224, 4
        %s1226 = scalar_lea.vmem [#allocation6], %s1225
        %p1227 = pneg %p367
        %p1228 = pneg %p364
        %s1229 = sand.u32 %s89, 1
        %s1230 = scalar_lea.sflag [#allocation7], %s1229
        %s1231 = sand.u32 %s380, 1
        %s1232 = smul.addr %s1231, 8
        %s1233 = scalar_lea.vmem [#allocation8], %s1232
        %p1234 = pneg %p393
        %p1235 = pneg %p390
        %p1236 = scmp.lt.s32.totalorder %s89, 1
        %s1237 = scalar_select %p1236, %s89, 1
        %s1238 = smul.addr %s1237, 2
        %s1239 = smul.addr %s1238, 4
        %s1240 = scalar_lea.vmem %s29, %s1239
        %p1241 = pneg %p419
        %p1242 = pneg %p416
        %p1243 = scmp.lt.s32.totalorder %s89, 1
        %s1244 = scalar_select %p1243, %s89, 1
        %s1245 = smul.addr %s1244, 2
        %s1246 = smul.addr %s1245, 8
        %s1247 = scalar_lea.vmem %s31, %s1246
        %p1248 = pneg %p445
        %p1249 = pneg %p442
        %p1250 = scmp.lt.s32.totalorder %s89, 1
        %s1251 = scalar_select %p1250, %s89, 1
        %s1252 = smul.addr %s1251, 2
        %s1253 = smul.addr %s1252, 4
        %s1254 = scalar_lea.vmem %s33, %s1253
        %p1255 = pneg %p471
        %p1256 = pneg %p468
        %p1257 = scmp.lt.s32.totalorder %s89, 1
        %s1258 = scalar_select %p1257, %s89, 1
        %s1259 = smul.addr %s1258, 2
        %s1260 = smul.addr %s1259, 8
        %s1261 = scalar_lea.vmem %s35, %s1260
        %p1262 = pneg %p497
        %p1263 = pneg %p494
        %p1264 = scmp.lt.s32.totalorder %s89, 1
        %s1265 = scalar_select %p1264, %s89, 1
        %s1266 = smul.addr %s1265, 2
        %s1267 = smul.addr %s1266, 4
        %s1268 = scalar_lea.vmem %s37, %s1267
        %p1269 = pneg %p523
        %p1270 = pneg %p520
        %p1271 = scmp.lt.s32.totalorder %s89, 1
        %s1272 = scalar_select %p1271, %s89, 1
        %s1273 = smul.addr %s1272, 2
        %s1274 = smul.addr %s1273, 8
        %s1275 = scalar_lea.vmem %s39, %s1274
        %p1276 = pneg %p549
        %p1277 = pneg %p546
        %p1278 = scmp.lt.s32.totalorder %s89, 1
        %s1279 = scalar_select %p1278, %s89, 1
        %s1280 = smul.addr %s1279, 2
        %s1281 = smul.addr %s1280, 4
        %s1282 = scalar_lea.vmem %s41, %s1281
        %p1283 = pneg %p575
        %p1284 = pneg %p572
        %p1285 = scmp.lt.s32.totalorder %s89, 1
        %s1286 = scalar_select %p1285, %s89, 1
        %s1287 = smul.addr %s1286, 2
        %s1288 = smul.addr %s1287, 8
        %s1289 = scalar_lea.vmem %s43, %s1288
        %p1290 = pneg %p601
        %p1291 = pneg %p598
        %s1292 = sand.u32 %s89, 1
        %s1293 = scalar_lea.sflag [#allocation10], %s1292
        %s1294 = sand.u32 %s614, 1
        %s1295 = smul.addr %s1294, 2
        %s1296 = scalar_lea.vmem [#allocation9], %s1295
        %p1297 = pneg %p627
        %p1298 = pneg %p624
        %s1299 = sand.u32 %s89, 1
        %s1300 = scalar_lea.sflag [#allocation10], %s1299
        %s1301 = sand.u32 %s640, 1
        %s1302 = smul.addr %s1301, 4
        %s1303 = scalar_lea.vmem [#allocation11], %s1302
        %p1304 = pneg %p653
        %p1305 = pneg %p650
        %p1306 = scmp.lt.s32.totalorder %s89, 1
        %s1307 = scalar_select %p1306, %s89, 1
        %s1308 = smul.addr %s1307, 4
        %s1309 = smul.addr %s1308, 2
        %s1310 = scalar_lea.vmem %s49, %s1309
        %p1311 = pneg %p679
        %p1312 = pneg %p676
        %p1313 = pneg %p700
        %p1314 = pneg %p697
        %p1315 = pneg %p721
        %p1316 = pneg %p718
        %p1317 = pneg %p742
        %p1318 = pneg %p739
        %p1319 = pneg %p763
        %p1320 = pneg %p760
        %p1321 = pneg %p784
        %p1322 = pneg %p781
        %p1323 = pneg %p805
        %p1324 = pneg %p802
        %p1325 = pneg %p826
        %p1326 = pneg %p823
        %p1327 = pneg %p852
        %p1328 = pneg %p849
        %p1329 = scmp.lt.s32.totalorder %s89, 1
        %s1330 = scalar_select %p1329, %s89, 1
        %s1331 = smul.addr %s1330, 4
        %s1332 = smul.addr %s1331, 4
        %s1333 = scalar_lea.vmem %s65, %s1332
        %p1334 = pneg %p873
        %p1335 = pneg %p870
        %p1336 = scmp.lt.s32.totalorder %s89, 1
        %s1337 = scalar_select %p1336, %s89, 1
        %s1338 = smul.addr %s1337, 2
        %s1339 = smul.addr %s1338, 8
        %s1340 = scalar_lea.vmem %s23, %s1339
        %p1341 = scmp.lt.s32.totalorder %s89, 1
        %s1342 = scalar_select %p1341, %s89, 1
        %s1343 = smul.addr %s1342, 2
        %s1344 = smul.addr %s1343, 4
        %s1345 = scalar_lea.vmem %s29, %s1344
        %p1346 = scmp.lt.s32.totalorder %s89, 1
        %s1347 = scalar_select %p1346, %s89, 1
        %s1348 = smul.addr %s1347, 2
        %s1349 = smul.addr %s1348, 8
        %s1350 = scalar_lea.vmem %s31, %s1349
        %p1351 = scmp.lt.s32.totalorder %s89, 1
        %s1352 = scalar_select %p1351, %s89, 1
        %s1353 = smul.addr %s1352, 2
        %s1354 = smul.addr %s1353, 4
        %s1355 = scalar_lea.vmem %s33, %s1354
        %p1356 = scmp.lt.s32.totalorder %s89, 1
        %s1357 = scalar_select %p1356, %s89, 1
        %s1358 = smul.addr %s1357, 2
        %s1359 = smul.addr %s1358, 8
        %s1360 = scalar_lea.vmem %s35, %s1359
        %p1361 = scmp.lt.s32.totalorder %s89, 1
        %s1362 = scalar_select %p1361, %s89, 1
        %s1363 = smul.addr %s1362, 2
        %s1364 = smul.addr %s1363, 4
        %s1365 = scalar_lea.vmem %s37, %s1364
        %p1366 = scmp.lt.s32.totalorder %s89, 1
        %s1367 = scalar_select %p1366, %s89, 1
        %s1368 = smul.addr %s1367, 2
        %s1369 = smul.addr %s1368, 8
        %s1370 = scalar_lea.vmem %s39, %s1369
        %p1371 = scmp.lt.s32.totalorder %s89, 1
        %s1372 = scalar_select %p1371, %s89, 1
        %s1373 = smul.addr %s1372, 2
        %s1374 = smul.addr %s1373, 4
        %s1375 = scalar_lea.vmem %s41, %s1374
        %p1376 = scmp.lt.s32.totalorder %s89, 1
        %s1377 = scalar_select %p1376, %s89, 1
        %s1378 = smul.addr %s1377, 2
        %s1379 = smul.addr %s1378, 8
        %s1380 = scalar_lea.vmem %s43, %s1379
        %p1381 = scmp.lt.s32.totalorder %s89, 1
        %s1382 = scalar_select %p1381, %s89, 1
        %s1383 = smul.addr %s1382, 4
        %s1384 = smul.addr %s1383, 2
        %s1385 = scalar_lea.vmem %s49, %s1384
        %p1386 = scmp.lt.s32.totalorder %s89, 1
        %s1387 = scalar_select %p1386, %s89, 1
        %s1388 = smul.addr %s1387, 4
        %s1389 = smul.addr %s1388, 4
        %s1390 = scalar_lea.vmem %s65, %s1389
        %v1392 = vld [vmem:[%s1] sm:$0xff]
        %v1393 = vld [vmem:[%s1 + $0x8] sm:$0xff]
        %v1394 = vld [vmem:[%s1 + $0x10] sm:$0xff]
        %v1395 = vld [vmem:[%s1 + $0x18] sm:$0xff]
        %v1396 = vmul.f32 %v1392, %v1392
        %v1397 = vmul.f32 %v1393, %v1393
        %v1398 = vmul.f32 %v1394, %v1394
        %v1399 = vmul.f32 %v1395, %v1395
        %vm1400 = vcmask 15360
        %v1401 = vsel %vm1400, %v1396, 0.0
        %v1402 = vsel %vm1400, %v1397, 0.0
        %v1403 = vadd.f32 %v1401, %v1402
        %v1404 = vsel %vm1400, %v1398, 0.0
        %v1405 = vadd.f32 %v1403, %v1404
        %v1406 = vsel %vm1400, %v1399, 0.0
        %v1407 = vadd.f32 %v1405, %v1406
        %v1408 = vrot.slane %v1407, 4
        %v1409 = vadd.f32 %v1407, %v1408
        %v1410 = vrot.slane %v1409, 2
        %v1411 = vadd.f32 %v1409, %v1410
        %v1412 = vrot.slane %v1411, 1
        %v1413 = vadd.f32 %v1411, %v1412
        %v1414 = vrcp.pop 32.0
        %v1415 = vmul.f32 %v1413, %v1414
        %v1416 = vadd.f32 %v1415, 1e-08
        %v1417 = vrsqrt.pop %v1416
        %v1418 = vmul.f32 %v1392, %v1417
        %v1419 = vmul.f32 %v1393, %v1417
        %v1420 = vmul.f32 %v1394, %v1417
        %v1421 = vmul.f32 %v1395, %v1417
        %v1422 = vld [vmem:[%s7] sm:$0xf]
        %v1423 = vld [vmem:[%s7 + $0x4] sm:$0xf]
        %v1424 = vld [vmem:[%s7 + $0x8] sm:$0xf]
        %v1425 = vld [vmem:[%s7 + $0xc] sm:$0xf]
        %v1426 = vld [vmem:[%s3] sm:$0xff]
        %v1427 = vld [vmem:[%s3 + $0x8] sm:$0xff]
        %v1428 = vpack.c.bf16 %v1427, %v1426
        %v1429 = vld [vmem:[%s9] sm:$0xff]
        %v1430 = vld [vmem:[%s9 + $0x8] sm:$0xff]
        %v1431 = vld [vmem:[%s9 + $0x10] sm:$0xff]
        %v1432 = vld [vmem:[%s9 + $0x18] sm:$0xff]
        %1434 = vset.pattern.permute.xlu0 0
        %1435 = vperm.xlu0 %1434, %v1429
        %v1436 = vpop.permute.xlu0 %1435
        %1439 = vset.pattern.permute.xlu0 0
        %1440 = vperm.xlu0 %1439, %v1430
        %v1441 = vpop.permute.xlu0 %1440
        %1444 = vset.pattern.permute.xlu0 0
        %1445 = vperm.xlu0 %1444, %v1431
        %v1446 = vpop.permute.xlu0 %1445
        %1449 = vset.pattern.permute.xlu0 0
        %1450 = vperm.xlu0 %1449, %v1432
        %v1451 = vpop.permute.xlu0 %1450
        %v1457 = vunpack.c.l.b16 %v1422
        %v1458 = vunpack.c.l.b16 %v1423
        %v1459 = vunpack.c.l.b16 %v1424
        %v1460 = vunpack.c.l.b16 %v1425
        %v1461 = vpack.c.b16 %v1458, %v1457
        %v1462 = vpack.c.b16 %v1460, %v1459
        %vm1463 = vcmask 130048
        %v1465 = vsel %vm1463, %v1461, 0
        %v1468 = vsel %vm1463, %v1462, 0
        %1470 = vmatprep.subr.bf16.mxu0 0
        %1471 = vmatpush1.bf16.msra.mxu0 %v1428
        %1472 = vmatprep.subr.bf16.mxu0 0
        %1473 = vmatpush1.bf16.msra.mxu0 0
        %1474 = vmatprep.subr.bf16.mxu0 0
        %1475 = vmatpush1.bf16.msra.mxu0 0
        %1476 = vmatprep.subr.bf16.mxu0 0
        %1477 = vmatpush1.bf16.msra.mxu0 0
        %1478 = vmatprep.subr.bf16.mxu0 0
        %1479 = vmatpush1.bf16.msra.mxu0 0
        %1480 = vmatprep.subr.bf16.mxu0 0
        %1481 = vmatpush1.bf16.msra.mxu0 0
        %1482 = vmatprep.subr.bf16.mxu0 0
        %1483 = vmatpush1.bf16.msra.mxu0 0
        %1484 = vmatprep.subr.bf16.mxu0 0
        %1485 = vmatpush1.bf16.msra.mxu0 0
        %1486 = vmatprep.subr.bf16.mxu0 0
        %1487 = vmatpush1.bf16.msra.mxu0 0
        %1488 = vmatprep.subr.bf16.mxu0 0
        %1489 = vmatpush1.bf16.msra.mxu0 0
        %1490 = vmatprep.subr.bf16.mxu0 0
        %1491 = vmatpush1.bf16.msra.mxu0 0
        %1492 = vmatprep.subr.bf16.mxu0 0
        %1493 = vmatpush1.bf16.msra.mxu0 0
        %1494 = vmatprep.subr.bf16.mxu0 0
        %1495 = vmatpush1.bf16.msra.mxu0 0
        %1496 = vmatprep.subr.bf16.mxu0 0
        %1497 = vmatpush1.bf16.msra.mxu0 0
        %1498 = vmatprep.subr.bf16.mxu0 0
        %1499 = vmatpush1.bf16.msra.mxu0 0
        %1500 = vmatprep.subr.bf16.mxu0 0
        %1501 = vmatpush1.bf16.msra.mxu0 0
        %1502 = vmatprep.mubr.bf16.mxu0 0
        %1503 = vmatmul.mubr.bf16.gmra.mrb[0].mxu0 %v1465
        %v1504 = vpop.f32.mrb[0].mxu0
        %v1505 = vadd.f32 %v1436, %v1504
        %v1506 = vpop.f32.mrb[0].mxu0
        %v1507 = vpop.f32.mrb[0].mxu0
        %v1508 = vadd.f32 %v1441, %v1507
        %v1509 = vpop.f32.mrb[0].mxu0
        %1510 = vmatprep.mubr.bf16.mxu0 0
        %1511 = vmatmul.mubr.bf16.gmra.mrb[0].mxu0 %v1468
        %v1512 = vpop.f32.mrb[0].mxu0
        %v1513 = vadd.f32 %v1446, %v1512
        %v1514 = vpop.f32.mrb[0].mxu0
        %v1515 = vpop.f32.mrb[0].mxu0
        %v1516 = vadd.f32 %v1451, %v1515
        %v1517 = vpop.f32.mrb[0].mxu0
        %1518 = vdwg.mxu0
        %v1519 = vmul.f32 %v1505, %v1505
        %v1520 = vmul.f32 %v1508, %v1508
        %v1521 = vmul.f32 %v1513, %v1513
        %v1522 = vmul.f32 %v1516, %v1516
        %v1523 = vsel %vm1400, %v1519, 0.0
        %v1524 = vsel %vm1400, %v1520, 0.0
        %v1525 = vadd.f32 %v1523, %v1524
        %v1526 = vsel %vm1400, %v1521, 0.0
        %v1527 = vadd.f32 %v1525, %v1526
        %v1528 = vsel %vm1400, %v1522, 0.0
        %v1529 = vadd.f32 %v1527, %v1528
        %v1530 = vrot.slane %v1529, 4
        %v1531 = vadd.f32 %v1529, %v1530
        %v1532 = vrot.slane %v1531, 2
        %v1533 = vadd.f32 %v1531, %v1532
        %v1534 = vrot.slane %v1533, 1
        %v1535 = vadd.f32 %v1533, %v1534
        %v1536 = vmul.f32 %v1535, %v1414
        %v1537 = vadd.f32 %v1536, 1e-08
        %v1538 = vrsqrt.pop %v1537
        %v1539 = vmul.f32 %v1505, %v1538
        %v1540 = vmul.f32 %v1508, %v1538
        %v1541 = vmul.f32 %v1513, %v1538
        %v1542 = vmul.f32 %v1516, %v1538
        %v1543 = vld [vmem:[#allocation3] sm:$0xf]
        %v1544 = vld [vmem:[#allocation3 + $0x4] sm:$0xf]
        %v1545 = vld [vmem:[#allocation3 + $0x8] sm:$0xf]
        %v1546 = vld [vmem:[#allocation3 + $0xc] sm:$0xf]
        %v1547 = vpack.c.bf16 %v1419, %v1418
        %v1548 = vpack.c.bf16 %v1421, %v1420
        %v1549 = vld [vmem:[%s13] sm:$0xf]
        %v1550 = vld [vmem:[%s13 + $0x4] sm:$0xf]
        %v1551 = vld [vmem:[%s13 + $0x8] sm:$0xf]
        %v1552 = vld [vmem:[%s13 + $0xc] sm:$0xf]
        %v1553 = vpack.c.bf16 %v1540, %v1539
        %v1554 = vpack.c.bf16 %v1542, %v1541
        %v1559 = vunpack.c.l.b16 %v1549
        %v1560 = vunpack.c.l.b16 %v1550
        %v1561 = vunpack.c.l.b16 %v1551
        %v1562 = vunpack.c.l.b16 %v1552
        %v1563 = vpack.c.b16 %v1560, %v1559
        %v1564 = vpack.c.b16 %v1562, %v1561
        %vm1565 = vcmask 261120
        %v1567 = vsel %vm1565, %v1563, 0
        %v1570 = vsel %vm1565, %v1564, 0
        %1572 = vmatprep.subr.bf16.mxu0 0
        %1573 = vmatpush1.bf16.msra.mxu0 %v1553
        %1574 = vmatprep.subr.bf16.mxu0 0
        %1575 = vmatpush1.bf16.msra.mxu0 %v1554
        %1576 = vmatprep.subr.bf16.mxu0 0
        %1577 = vmatpush1.bf16.msra.mxu0 0
        %1578 = vmatprep.subr.bf16.mxu0 0
        %1579 = vmatpush1.bf16.msra.mxu0 0
        %1580 = vmatprep.subr.bf16.mxu0 0
        %1581 = vmatpush1.bf16.msra.mxu0 0
        %1582 = vmatprep.subr.bf16.mxu0 0
        %1583 = vmatpush1.bf16.msra.mxu0 0
        %1584 = vmatprep.subr.bf16.mxu0 0
        %1585 = vmatpush1.bf16.msra.mxu0 0
        %1586 = vmatprep.subr.bf16.mxu0 0
        %1587 = vmatpush1.bf16.msra.mxu0 0
        %1588 = vmatprep.subr.bf16.mxu0 0
        %1589 = vmatpush1.bf16.msra.mxu0 0
        %1590 = vmatprep.subr.bf16.mxu0 0
        %1591 = vmatpush1.bf16.msra.mxu0 0
        %1592 = vmatprep.subr.bf16.mxu0 0
        %1593 = vmatpush1.bf16.msra.mxu0 0
        %1594 = vmatprep.subr.bf16.mxu0 0
        %1595 = vmatpush1.bf16.msra.mxu0 0
        %1596 = vmatprep.subr.bf16.mxu0 0
        %1597 = vmatpush1.bf16.msra.mxu0 0
        %1598 = vmatprep.subr.bf16.mxu0 0
        %1599 = vmatpush1.bf16.msra.mxu0 0
        %1600 = vmatprep.subr.bf16.mxu0 0
        %1601 = vmatpush1.bf16.msra.mxu0 0
        %1602 = vmatprep.subr.bf16.mxu0 0
        %1603 = vmatpush1.bf16.msra.mxu0 0
        %1604 = vmatprep.mubr.bf16.mxu0 0
        %1605 = vmatmul.mubr.bf16.gmra.mrb[0].mxu0 %v1567
        %v1606 = vpop.f32.mrb[0].mxu0
        %v1607 = vadd.f32 0.0, %v1606
        %v1608 = vpop.f32.mrb[0].mxu0
        %v1609 = vpop.f32.mrb[0].mxu0
        %v1610 = vadd.f32 0.0, %v1609
        %v1611 = vpop.f32.mrb[0].mxu0
        %1612 = vmatprep.mubr.bf16.mxu0 0
        %1613 = vmatmul.mubr.bf16.gmra.mrb[0].mxu0 %v1570
        %v1614 = vpop.f32.mrb[0].mxu0
        %v1615 = vadd.f32 0.0, %v1614
        %v1616 = vpop.f32.mrb[0].mxu0
        %v1617 = vpop.f32.mrb[0].mxu0
        %v1618 = vadd.f32 0.0, %v1617
        %v1619 = vpop.f32.mrb[0].mxu0
        %1620 = vdwg.mxu0
        %v1625 = vunpack.c.l.b16 %v1543
        %v1626 = vunpack.c.l.b16 %v1544
        %v1627 = vunpack.c.l.b16 %v1545
        %v1628 = vunpack.c.l.b16 %v1546
        %v1629 = vpack.c.b16 %v1626, %v1625
        %v1630 = vpack.c.b16 %v1628, %v1627
        %v1632 = vsel %vm1565, %v1629, 0
        %v1635 = vsel %vm1565, %v1630, 0
        %1637 = vmatprep.subr.bf16.mxu0 0
        %1638 = vmatpush1.bf16.msra.mxu0 %v1547
        %1639 = vmatprep.subr.bf16.mxu0 0
        %1640 = vmatpush1.bf16.msra.mxu0 %v1548
        %1641 = vmatprep.subr.bf16.mxu0 0
        %1642 = vmatpush1.bf16.msra.mxu0 0
        %1643 = vmatprep.subr.bf16.mxu0 0
        %1644 = vmatpush1.bf16.msra.mxu0 0
        %1645 = vmatprep.subr.bf16.mxu0 0
        %1646 = vmatpush1.bf16.msra.mxu0 0
        %1647 = vmatprep.subr.bf16.mxu0 0
        %1648 = vmatpush1.bf16.msra.mxu0 0
        %1649 = vmatprep.subr.bf16.mxu0 0
        %1650 = vmatpush1.bf16.msra.mxu0 0
        %1651 = vmatprep.subr.bf16.mxu0 0
        %1652 = vmatpush1.bf16.msra.mxu0 0
        %1653 = vmatprep.subr.bf16.mxu0 0
        %1654 = vmatpush1.bf16.msra.mxu0 0
        %1655 = vmatprep.subr.bf16.mxu0 0
        %1656 = vmatpush1.bf16.msra.mxu0 0
        %1657 = vmatprep.subr.bf16.mxu0 0
        %1658 = vmatpush1.bf16.msra.mxu0 0
        %1659 = vmatprep.subr.bf16.mxu0 0
        %1660 = vmatpush1.bf16.msra.mxu0 0
        %1661 = vmatprep.subr.bf16.mxu0 0
        %1662 = vmatpush1.bf16.msra.mxu0 0
        %1663 = vmatprep.subr.bf16.mxu0 0
        %1664 = vmatpush1.bf16.msra.mxu0 0
        %1665 = vmatprep.subr.bf16.mxu0 0
        %1666 = vmatpush1.bf16.msra.mxu0 0
        %1667 = vmatprep.subr.bf16.mxu0 0
        %1668 = vmatpush1.bf16.msra.mxu0 0
        %1669 = vmatprep.mubr.bf16.mxu0 0
        %1670 = vmatmul.mubr.bf16.gmra.mrb[0].mxu0 %v1632
        %v1671 = vpop.f32.mrb[0].mxu0
        %v1672 = vadd.f32 %v1607, %v1671
        %v1673 = vpop.f32.mrb[0].mxu0
        %v1674 = vpop.f32.mrb[0].mxu0
        %v1675 = vadd.f32 %v1610, %v1674
        %v1676 = vpop.f32.mrb[0].mxu0
        %1677 = vmatprep.mubr.bf16.mxu0 0
        %1678 = vmatmul.mubr.bf16.gmra.mrb[0].mxu0 %v1635
        %v1679 = vpop.f32.mrb[0].mxu0
        %v1680 = vadd.f32 %v1615, %v1679
        %v1681 = vpop.f32.mrb[0].mxu0
        %v1682 = vpop.f32.mrb[0].mxu0
        %v1683 = vadd.f32 %v1618, %v1682
        %v1684 = vpop.f32.mrb[0].mxu0
        %1685 = vdwg.mxu0
        %v1686 = vld [vmem:[%s15] sm:$0xff]
        %v1687 = vld [vmem:[%s15 + $0x8] sm:$0xff]
        %v1688 = vld [vmem:[%s15 + $0x10] sm:$0xff]
        %v1689 = vld [vmem:[%s15 + $0x18] sm:$0xff]
        %1691 = vset.pattern.permute.xlu0 0
        %1692 = vperm.xlu0 %1691, %v1686
        %v1693 = vpop.permute.xlu0 %1692
        %1696 = vset.pattern.permute.xlu0 0
        %1697 = vperm.xlu0 %1696, %v1687
        %v1698 = vpop.permute.xlu0 %1697
        %1701 = vset.pattern.permute.xlu0 0
        %1702 = vperm.xlu0 %1701, %v1688
        %v1703 = vpop.permute.xlu0 %1702
        %1706 = vset.pattern.permute.xlu0 0
        %1707 = vperm.xlu0 %1706, %v1689
        %v1708 = vpop.permute.xlu0 %1707
        %v1710 = vadd.f32 %v1672, %v1693
        %v1711 = vadd.f32 %v1675, %v1698
        %v1712 = vadd.f32 %v1680, %v1703
        %v1713 = vadd.f32 %v1683, %v1708
        %vm1714 = vcmp.ge.f32.partialorder %v1710, 0.0
        %vm1715 = vcmp.ge.f32.partialorder %v1711, 0.0
        %vm1716 = vcmp.ge.f32.partialorder %v1712, 0.0
        %vm1717 = vcmp.ge.f32.partialorder %v1713, 0.0
        %v1718 = vmul.f32 %v1710, 0.2
        %v1719 = vmul.f32 %v1711, 0.2
        %v1720 = vmul.f32 %v1712, 0.2
        %v1721 = vmul.f32 %v1713, 0.2
        %v1722 = vsel %vm1714, %v1710, %v1718
        %v1723 = vsel %vm1715, %v1711, %v1719
        %v1724 = vsel %vm1716, %v1712, %v1720
        %v1725 = vsel %vm1717, %v1713, %v1721
        %v1726 = vmul.f32 %v1722, 1.4142135
        %v1727 = vmul.f32 %v1723, 1.4142135
        %v1728 = vmul.f32 %v1724, 1.4142135
        %v1729 = vmul.f32 %v1725, 1.4142135
        %v1730 = vld [vmem:[%s17] sm:$0xf]
        %v1731 = vld [vmem:[%s17 + $0x4] sm:$0xf]
        %v1732 = vld [vmem:[%s17 + $0x8] sm:$0xf]
        %v1733 = vld [vmem:[%s17 + $0xc] sm:$0xf]
        %v1734 = vpack.c.bf16 %v1727, %v1726
        %v1735 = vpack.c.bf16 %v1729, %v1728
        %v1736 = vld [vmem:[%s19] sm:$0xff]
        %v1737 = vld [vmem:[%s19 + $0x8] sm:$0xff]
        %v1738 = vld [vmem:[%s19 + $0x10] sm:$0xff]
        %v1739 = vld [vmem:[%s19 + $0x18] sm:$0xff]
        %1741 = vset.pattern.permute.xlu0 0
        %1742 = vperm.xlu0 %1741, %v1736
        %v1743 = vpop.permute.xlu0 %1742
        %1746 = vset.pattern.permute.xlu0 0
        %1747 = vperm.xlu0 %1746, %v1737
        %v1748 = vpop.permute.xlu0 %1747
        %1751 = vset.pattern.permute.xlu0 0
        %1752 = vperm.xlu0 %1751, %v1738
        %v1753 = vpop.permute.xlu0 %1752
        %1756 = vset.pattern.permute.xlu0 0
        %1757 = vperm.xlu0 %1756, %v1739
        %v1758 = vpop.permute.xlu0 %1757
        %v1764 = vunpack.c.l.b16 %v1730
        %v1765 = vunpack.c.l.b16 %v1731
        %v1766 = vunpack.c.l.b16 %v1732
        %v1767 = vunpack.c.l.b16 %v1733
        %v1768 = vpack.c.b16 %v1765, %v1764
        %v1769 = vpack.c.b16 %v1767, %v1766
        %v1771 = vsel %vm1565, %v1768, 0
        %v1774 = vsel %vm1565, %v1769, 0
        %1776 = vmatprep.subr.bf16.mxu0 0
        %1777 = vmatpush1.bf16.msra.mxu0 %v1734
        %1778 = vmatprep.subr.bf16.mxu0 0
        %1779 = vmatpush1.bf16.msra.mxu0 %v1735
        %1780 = vmatprep.subr.bf16.mxu0 0
        %1781 = vmatpush1.bf16.msra.mxu0 0
        %1782 = vmatprep.subr.bf16.mxu0 0
        %1783 = vmatpush1.bf16.msra.mxu0 0
        %1784 = vmatprep.subr.bf16.mxu0 0
        %1785 = vmatpush1.bf16.msra.mxu0 0
        %1786 = vmatprep.subr.bf16.mxu0 0
        %1787 = vmatpush1.bf16.msra.mxu0 0
        %1788 = vmatprep.subr.bf16.mxu0 0
        %1789 = vmatpush1.bf16.msra.mxu0 0
        %1790 = vmatprep.subr.bf16.mxu0 0
        %1791 = vmatpush1.bf16.msra.mxu0 0
        %1792 = vmatprep.subr.bf16.mxu0 0
        %1793 = vmatpush1.bf16.msra.mxu0 0
        %1794 = vmatprep.subr.bf16.mxu0 0
        %1795 = vmatpush1.bf16.msra.mxu0 0
        %1796 = vmatprep.subr.bf16.mxu0 0
        %1797 = vmatpush1.bf16.msra.mxu0 0
        %1798 = vmatprep.subr.bf16.mxu0 0
        %1799 = vmatpush1.bf16.msra.mxu0 0
        %1800 = vmatprep.subr.bf16.mxu0 0
        %1801 = vmatpush1.bf16.msra.mxu0 0
        %1802 = vmatprep.subr.bf16.mxu0 0
        %1803 = vmatpush1.bf16.msra.mxu0 0
        %1804 = vmatprep.subr.bf16.mxu0 0
        %1805 = vmatpush1.bf16.msra.mxu0 0
        %1806 = vmatprep.subr.bf16.mxu0 0
        %1807 = vmatpush1.bf16.msra.mxu0 0
        %1808 = vmatprep.mubr.bf16.mxu0 0
        %1809 = vmatmul.mubr.bf16.gmra.mrb[0].mxu0 %v1771
        %v1810 = vpop.f32.mrb[0].mxu0
        %v1811 = vadd.f32 %v1743, %v1810
        %v1812 = vpop.f32.mrb[0].mxu0
        %v1813 = vpop.f32.mrb[0].mxu0
        %v1814 = vadd.f32 %v1748, %v1813
        %v1815 = vpop.f32.mrb[0].mxu0
        %1816 = vmatprep.mubr.bf16.mxu0 0
        %1817 = vmatmul.mubr.bf16.gmra.mrb[0].mxu0 %v1774
        %v1818 = vpop.f32.mrb[0].mxu0
        %v1819 = vadd.f32 %v1753, %v1818
        %v1820 = vpop.f32.mrb[0].mxu0
        %v1821 = vpop.f32.mrb[0].mxu0
        %v1822 = vadd.f32 %v1758, %v1821
        %v1823 = vpop.f32.mrb[0].mxu0
        %1824 = vdwg.mxu0
        %vm1825 = vcmp.ge.f32.partialorder %v1811, 0.0
        %vm1826 = vcmp.ge.f32.partialorder %v1814, 0.0
        %vm1827 = vcmp.ge.f32.partialorder %v1819, 0.0
        %vm1828 = vcmp.ge.f32.partialorder %v1822, 0.0
        %v1829 = vmul.f32 %v1811, 0.2
        %v1830 = vmul.f32 %v1814, 0.2
        %v1831 = vmul.f32 %v1819, 0.2
        %v1832 = vmul.f32 %v1822, 0.2
        %v1833 = vsel %vm1825, %v1811, %v1829
        %v1834 = vsel %vm1826, %v1814, %v1830
        %v1835 = vsel %vm1827, %v1819, %v1831
        %v1836 = vsel %vm1828, %v1822, %v1832
        %v1837 = vmul.f32 %v1833, 1.4142135
        %v1838 = vmul.f32 %v1834, 1.4142135
        %v1839 = vmul.f32 %v1835, 1.4142135
        %v1840 = vmul.f32 %v1836, 1.4142135
        %v1841 = vld [vmem:[%s21] sm:$0xff]
        %v1842 = vld [vmem:[%s21 + $0x8] sm:$0xff]
        %v1843 = vld [vmem:[%s21 + $0x10] sm:$0xff]
        %v1844 = vld [vmem:[%s21 + $0x18] sm:$0xff]
        %1846 = vset.pattern.permute.xlu0 0
        %1847 = vperm.xlu0 %1846, %v1841
        %v1848 = vpop.permute.xlu0 %1847
        %1851 = vset.pattern.permute.xlu0 0
        %1852 = vperm.xlu0 %1851, %v1842
        %v1853 = vpop.permute.xlu0 %1852
        %1856 = vset.pattern.permute.xlu0 0
        %1857 = vperm.xlu0 %1856, %v1843
        %v1858 = vpop.permute.xlu0 %1857
        %1861 = vset.pattern.permute.xlu0 0
        %1862 = vperm.xlu0 %1861, %v1844
        %v1863 = vpop.permute.xlu0 %1862
        %v1865 = vsub.f32 %v1837, %v1848
        %v1866 = vsub.f32 %v1838, %v1853
        %v1867 = vsub.f32 %v1839, %v1858
        %v1868 = vsub.f32 %v1840, %v1863
        %v1869 = vmul.f32 %v1865, 0.7
        %v1870 = vmul.f32 %v1866, 0.7
        %v1871 = vmul.f32 %v1867, 0.7
        %v1872 = vmul.f32 %v1868, 0.7
        %v1873 = vadd.f32 %v1848, %v1869
        %v1874 = vadd.f32 %v1853, %v1870
        %v1875 = vadd.f32 %v1858, %v1871
        %v1876 = vadd.f32 %v1863, %v1872
        %v1877 = vld [vmem:[%s1149] sm:$0xf]
        %v1878 = vld [vmem:[%s1355] sm:$0xf]
        %v1879 = vld [vmem:[%s1355 + $0x4] sm:$0xf]
        %v1880 = vld [vmem:[%s1375] sm:$0xf]
        %v1881 = vld [vmem:[%s1375 + $0x4] sm:$0xf]
        %v1882 = vld [vmem:[%s1345] sm:$0xf]
        %v1883 = vld [vmem:[%s1345 + $0x4] sm:$0xf]
        %v1884 = vld [vmem:[%s1365] sm:$0xf]
        %v1885 = vld [vmem:[%s1365 + $0x4] sm:$0xf]
        %v1886 = vld [vmem:[%s1167] sm:$0x3]
        %v1887 = vpack.c.bf16 %v1874, %v1873
        %v1888 = vpack.c.bf16 %v1876, %v1875
        %v1889 = vld [vmem:[%s1158] sm:$0xff]
        %1891 = vset.pattern.permute.xlu0 0
        %1892 = vperm.xlu0 %1891, %v1889
        %v1893 = vpop.permute.xlu0 %1892
        %v1896 = vsel %vm1565, %v1877, 0
        %1898 = vmatprep.subr.bf16.mxu0 0
        %1899 = vmatpush1.bf16.msra.mxu0 %v1887
        %1900 = vmatprep.subr.bf16.mxu0 0
        %1901 = vmatpush1.bf16.msra.mxu0 %v1888
        %1902 = vmatprep.subr.bf16.mxu0 0
        %1903 = vmatpush1.bf16.msra.mxu0 0
        %1904 = vmatprep.subr.bf16.mxu0 0
        %1905 = vmatpush1.bf16.msra.mxu0 0
        %1906 = vmatprep.subr.bf16.mxu0 0
        %1907 = vmatpush1.bf16.msra.mxu0 0
        %1908 = vmatprep.subr.bf16.mxu0 0
        %1909 = vmatpush1.bf16.msra.mxu0 0
        %1910 = vmatprep.subr.bf16.mxu0 0
        %1911 = vmatpush1.bf16.msra.mxu0 0
        %1912 = vmatprep.subr.bf16.mxu0 0
        %1913 = vmatpush1.bf16.msra.mxu0 0
        %1914 = vmatprep.subr.bf16.mxu0 0
        %1915 = vmatpush1.bf16.msra.mxu0 0
        %1916 = vmatprep.subr.bf16.mxu0 0
        %1917 = vmatpush1.bf16.msra.mxu0 0
        %1918 = vmatprep.subr.bf16.mxu0 0
        %1919 = vmatpush1.bf16.msra.mxu0 0
        %1920 = vmatprep.subr.bf16.mxu0 0
        %1921 = vmatpush1.bf16.msra.mxu0 0
        %1922 = vmatprep.subr.bf16.mxu0 0
        %1923 = vmatpush1.bf16.msra.mxu0 0
        %1924 = vmatprep.subr.bf16.mxu0 0
        %1925 = vmatpush1.bf16.msra.mxu0 0
        %1926 = vmatprep.subr.bf16.mxu0 0
        %1927 = vmatpush1.bf16.msra.mxu0 0
        %1928 = vmatprep.subr.bf16.mxu0 0
        %1929 = vmatpush1.bf16.msra.mxu0 0
        %1930 = vmatprep.mubr.bf16.mxu0 0
        %1931 = vmatmul.mubr.bf16.gmra.mrb[0].mxu0 %v1896
        %v1932 = vpop.f32.mrb[0].mxu0
        %v1933 = vadd.f32 %v1893, %v1932
        %v1934 = vpop.f32.mrb[0].mxu0
        %v1935 = vpop.f32.mrb[0].mxu0
        %v1936 = vpop.f32.mrb[0].mxu0
        %1937 = vdwg.mxu0
        %v1938 = vld [vmem:[%s1360] sm:$0xff]
        %v1939 = vld [vmem:[%s1360 + $0x8] sm:$0xff]
        %1941 = vset.pattern.permute.xlu0 0
        %1942 = vperm.xlu0 %1941, %v1938
        %v1943 = vpop.permute.xlu0 %1942
        %1946 = vset.pattern.permute.xlu0 0
        %1947 = vperm.xlu0 %1946, %v1939
        %v1948 = vpop.permute.xlu0 %1947
        %v1952 = vunpack.c.l.b16 %v1878
        %v1953 = vunpack.c.l.b16 %v1879
        %v1954 = vpack.c.b16 %v1953, %v1952
        %v1956 = vsel %vm1565, %v1954, 0
        %1958 = vmatprep.subr.bf16.mxu0 0
        %1959 = vmatpush1.bf16.msra.mxu0 %v1887
        %1960 = vmatprep.subr.bf16.mxu0 0
        %1961 = vmatpush1.bf16.msra.mxu0 %v1888
        %1962 = vmatprep.subr.bf16.mxu0 0
        %1963 = vmatpush1.bf16.msra.mxu0 0
        %1964 = vmatprep.subr.bf16.mxu0 0
        %1965 = vmatpush1.bf16.msra.mxu0 0
        %1966 = vmatprep.subr.bf16.mxu0 0
        %1967 = vmatpush1.bf16.msra.mxu0 0
        %1968 = vmatprep.subr.bf16.mxu0 0
        %1969 = vmatpush1.bf16.msra.mxu0 0
        %1970 = vmatprep.subr.bf16.mxu0 0
        %1971 = vmatpush1.bf16.msra.mxu0 0
        %1972 = vmatprep.subr.bf16.mxu0 0
        %1973 = vmatpush1.bf16.msra.mxu0 0
        %1974 = vmatprep.subr.bf16.mxu0 0
        %1975 = vmatpush1.bf16.msra.mxu0 0
        %1976 = vmatprep.subr.bf16.mxu0 0
        %1977 = vmatpush1.bf16.msra.mxu0 0
        %1978 = vmatprep.subr.bf16.mxu0 0
        %1979 = vmatpush1.bf16.msra.mxu0 0
        %1980 = vmatprep.subr.bf16.mxu0 0
        %1981 = vmatpush1.bf16.msra.mxu0 0
        %1982 = vmatprep.subr.bf16.mxu0 0
        %1983 = vmatpush1.bf16.msra.mxu0 0
        %1984 = vmatprep.subr.bf16.mxu0 0
        %1985 = vmatpush1.bf16.msra.mxu0 0
        %1986 = vmatprep.subr.bf16.mxu0 0
        %1987 = vmatpush1.bf16.msra.mxu0 0
        %1988 = vmatprep.subr.bf16.mxu0 0
        %1989 = vmatpush1.bf16.msra.mxu0 0
        %1990 = vmatprep.mubr.bf16.mxu0 0
        %1991 = vmatmul.mubr.bf16.gmra.mrb[0].mxu0 %v1956
        %v1992 = vpop.f32.mrb[0].mxu0
        %v1993 = vadd.f32 %v1943, %v1992
        %v1994 = vpop.f32.mrb[0].mxu0
        %v1995 = vpop.f32.mrb[0].mxu0
        %v1996 = vadd.f32 %v1948, %v1995
        %v1997 = vpop.f32.mrb[0].mxu0
        %1998 = vdwg.mxu0
        %v1999 = vld [vmem:[%s1380] sm:$0xff]
        %v2000 = vld [vmem:[%s1380 + $0x8] sm:$0xff]
        %2002 = vset.pattern.permute.xlu0 0
        %2003 = vperm.xlu0 %2002, %v1999
        %v2004 = vpop.permute.xlu0 %2003
        %2007 = vset.pattern.permute.xlu0 0
        %2008 = vperm.xlu0 %2007, %v2000
        %v2009 = vpop.permute.xlu0 %2008
        %v2013 = vunpack.c.l.b16 %v1880
        %v2014 = vunpack.c.l.b16 %v1881
        %v2015 = vpack.c.b16 %v2014, %v2013
        %v2017 = vsel %vm1565, %v2015, 0
        %2019 = vmatprep.subr.bf16.mxu0 0
        %2020 = vmatpush1.bf16.msra.mxu0 %v1887
        %2021 = vmatprep.subr.bf16.mxu0 0
        %2022 = vmatpush1.bf16.msra.mxu0 %v1888
        %2023 = vmatprep.subr.bf16.mxu0 0
        %2024 = vmatpush1.bf16.msra.mxu0 0
        %2025 = vmatprep.subr.bf16.mxu0 0
        %2026 = vmatpush1.bf16.msra.mxu0 0
        %2027 = vmatprep.subr.bf16.mxu0 0
        %2028 = vmatpush1.bf16.msra.mxu0 0
        %2029 = vmatprep.subr.bf16.mxu0 0
        %2030 = vmatpush1.bf16.msra.mxu0 0
        %2031 = vmatprep.subr.bf16.mxu0 0
        %2032 = vmatpush1.bf16.msra.mxu0 0
        %2033 = vmatprep.subr.bf16.mxu0 0
        %2034 = vmatpush1.bf16.msra.mxu0 0
        %2035 = vmatprep.subr.bf16.mxu0 0
        %2036 = vmatpush1.bf16.msra.mxu0 0
        %2037 = vmatprep.subr.bf16.mxu0 0
        %2038 = vmatpush1.bf16.msra.mxu0 0
        %2039 = vmatprep.subr.bf16.mxu0 0
        %2040 = vmatpush1.bf16.msra.mxu0 0
        %2041 = vmatprep.subr.bf16.mxu0 0
        %2042 = vmatpush1.bf16.msra.mxu0 0
        %2043 = vmatprep.subr.bf16.mxu0 0
        %2044 = vmatpush1.bf16.msra.mxu0 0
        %2045 = vmatprep.subr.bf16.mxu0 0
        %2046 = vmatpush1.bf16.msra.mxu0 0
        %2047 = vmatprep.subr.bf16.mxu0 0
        %2048 = vmatpush1.bf16.msra.mxu0 0
        %2049 = vmatprep.subr.bf16.mxu0 0
        %2050 = vmatpush1.bf16.msra.mxu0 0
        %2051 = vmatprep.mubr.bf16.mxu0 0
        %2052 = vmatmul.mubr.bf16.gmra.mrb[0].mxu0 %v2017
        %v2053 = vpop.f32.mrb[0].mxu0
        %v2054 = vadd.f32 %v2004, %v2053
        %v2055 = vpop.f32.mrb[0].mxu0
        %v2056 = vpop.f32.mrb[0].mxu0
        %v2057 = vadd.f32 %v2009, %v2056
        %v2058 = vpop.f32.mrb[0].mxu0
        %2059 = vdwg.mxu0
        %v2060 = vunpack.c.l.bf16 %v1882
        %v2061 = vunpack.c.l.bf16 %v1883
        %v2062 = vunpack.c.l.bf16 %v1884
        %v2063 = vunpack.c.l.bf16 %v1885
        %v2064 = vmul.f32 %v2060, %v2060
        %v2065 = vmul.f32 %v2061, %v2061
        %v2066 = vmul.f32 %v1933, %v1933
        %vm2067 = vcmask 64512
        %v2069 = vsel %vm2067, %v2064, 0
        %v2072 = vsel %vm2067, %v2065, 0
        %2074 = vmatprep.subr.mxu0 0.0
        %2075 = vmatpush1.msra.mxu0 %v2066
        %2076 = vmatprep.subr.mxu0 0.0
        %2077 = vmatpush1.msra.mxu0 0.0
        %2078 = vmatprep.subr.mxu0 0.0
        %2079 = vmatpush1.msra.mxu0 0.0
        %2080 = vmatprep.subr.mxu0 0.0
        %2081 = vmatpush1.msra.mxu0 0.0
        %2082 = vmatprep.subr.mxu0 0.0
        %2083 = vmatpush1.msra.mxu0 0.0
        %2084 = vmatprep.subr.mxu0 0.0
        %2085 = vmatpush1.msra.mxu0 0.0
        %2086 = vmatprep.subr.mxu0 0.0
        %2087 = vmatpush1.msra.mxu0 0.0
        %2088 = vmatprep.subr.mxu0 0.0
        %2089 = vmatpush1.msra.mxu0 0.0
        %2090 = vmatprep.subr.mxu0 0.0
        %2091 = vmatpush1.msra.mxu0 0.0
        %2092 = vmatprep.subr.mxu0 0.0
        %2093 = vmatpush1.msra.mxu0 0.0
        %2094 = vmatprep.subr.mxu0 0.0
        %2095 = vmatpush1.msra.mxu0 0.0
        %2096 = vmatprep.subr.mxu0 0.0
        %2097 = vmatpush1.msra.mxu0 0.0
        %2098 = vmatprep.subr.mxu0 0.0
        %2099 = vmatpush1.msra.mxu0 0.0
        %2100 = vmatprep.subr.mxu0 0.0
        %2101 = vmatpush1.msra.mxu0 0.0
        %2102 = vmatprep.subr.mxu0 0.0
        %2103 = vmatpush1.msra.mxu0 0.0
        %2104 = vmatprep.subr.mxu0 0.0
        %2105 = vmatpush1.msra.mxu0 0.0
        %2106 = vmatprep.subr.mxu0 0.0
        %2107 = vmatpush1.msra.mxu0 0.0
        %2108 = vmatprep.subr.mxu0 0.0
        %2109 = vmatpush1.msra.mxu0 0.0
        %2110 = vmatprep.subr.mxu0 0.0
        %2111 = vmatpush1.msra.mxu0 0.0
        %2112 = vmatprep.subr.mxu0 0.0
        %2113 = vmatpush1.msra.mxu0 0.0
        %2114 = vmatprep.subr.mxu0 0.0
        %2115 = vmatpush1.msra.mxu0 0.0
        %2116 = vmatprep.subr.mxu0 0.0
        %2117 = vmatpush1.msra.mxu0 0.0
        %2118 = vmatprep.subr.mxu0 0.0
        %2119 = vmatpush1.msra.mxu0 0.0
        %2120 = vmatprep.subr.mxu0 0.0
        %2121 = vmatpush1.msra.mxu0 0.0
        %2122 = vmatprep.subr.mxu0 0.0
        %2123 = vmatpush1.msra.mxu0 0.0
        %2124 = vmatprep.subr.mxu0 0.0
        %2125 = vmatpush1.msra.mxu0 0.0
        %2126 = vmatprep.subr.mxu0 0.0
        %2127 = vmatpush1.msra.mxu0 0.0
        %2128 = vmatprep.subr.mxu0 0.0
        %2129 = vmatpush1.msra.mxu0 0.0
        %2130 = vmatprep.subr.mxu0 0.0
        %2131 = vmatpush1.msra.mxu0 0.0
        %2132 = vmatprep.subr.mxu0 0.0
        %2133 = vmatpush1.msra.mxu0 0.0
        %2134 = vmatprep.subr.mxu0 0.0
        %2135 = vmatpush1.msra.mxu0 0.0
        %2136 = vmatprep.subr.mxu0 0.0
        %2137 = vmatpush1.msra.mxu0 0.0
        %2138 = vmatprep.mubr.f32.mxu0 0.0
        %2139 = vmatmul.mubr.f32.gmra.mrb[0].mxu0 %v2069
        %v2140 = vpop.f32.mrb[0].mxu0
        %v2141 = vadd.f32 1e-08, %v2140
        %v2142 = vpop.f32.mrb[0].mxu0
        %2143 = vmatprep.mubr.f32.mxu0 0.0
        %2144 = vmatmul.mubr.f32.gmra.mrb[0].mxu0 %v2072
        %v2145 = vpop.f32.mrb[0].mxu0
        %v2146 = vadd.f32 1e-08, %v2145
        %v2147 = vpop.f32.mrb[0].mxu0
        %2148 = vdwg.mxu0
        %v2149 = vrsqrt.pop %v2141
        %v2150 = vrsqrt.pop %v2146
        %v2151 = vmul.f32 %v2062, %v2062
        %v2152 = vmul.f32 %v2063, %v2063
        %v2153 = vmul.f32 %v1993, %v1993
        %v2154 = vmul.f32 %v1996, %v1996
        %v2156 = vsel %vm1463, %v2151, 0
        %v2159 = vsel %vm1463, %v2152, 0
        %2161 = vmatprep.subr.mxu0 0.0
        %2162 = vmatpush1.msra.mxu0 %v2153
        %2163 = vmatprep.subr.mxu0 0.0
        %2164 = vmatpush1.msra.mxu0 %v2154
        %2165 = vmatprep.subr.mxu0 0.0
        %2166 = vmatpush1.msra.mxu0 0.0
        %2167 = vmatprep.subr.mxu0 0.0
        %2168 = vmatpush1.msra.mxu0 0.0
        %2169 = vmatprep.subr.mxu0 0.0
        %2170 = vmatpush1.msra.mxu0 0.0
        %2171 = vmatprep.subr.mxu0 0.0
        %2172 = vmatpush1.msra.mxu0 0.0
        %2173 = vmatprep.subr.mxu0 0.0
        %2174 = vmatpush1.msra.mxu0 0.0
        %2175 = vmatprep.subr.mxu0 0.0
        %2176 = vmatpush1.msra.mxu0 0.0
        %2177 = vmatprep.subr.mxu0 0.0
        %2178 = vmatpush1.msra.mxu0 0.0
        %2179 = vmatprep.subr.mxu0 0.0
        %2180 = vmatpush1.msra.mxu0 0.0
        %2181 = vmatprep.subr.mxu0 0.0
        %2182 = vmatpush1.msra.mxu0 0.0
        %2183 = vmatprep.subr.mxu0 0.0
        %2184 = vmatpush1.msra.mxu0 0.0
        %2185 = vmatprep.subr.mxu0 0.0
        %2186 = vmatpush1.msra.mxu0 0.0
        %2187 = vmatprep.subr.mxu0 0.0
        %2188 = vmatpush1.msra.mxu0 0.0
        %2189 = vmatprep.subr.mxu0 0.0
        %2190 = vmatpush1.msra.mxu0 0.0
        %2191 = vmatprep.subr.mxu0 0.0
        %2192 = vmatpush1.msra.mxu0 0.0
        %2193 = vmatprep.subr.mxu0 0.0
        %2194 = vmatpush1.msra.mxu0 0.0
        %2195 = vmatprep.subr.mxu0 0.0
        %2196 = vmatpush1.msra.mxu0 0.0
        %2197 = vmatprep.subr.mxu0 0.0
        %2198 = vmatpush1.msra.mxu0 0.0
        %2199 = vmatprep.subr.mxu0 0.0
        %2200 = vmatpush1.msra.mxu0 0.0
        %2201 = vmatprep.subr.mxu0 0.0
        %2202 = vmatpush1.msra.mxu0 0.0
        %2203 = vmatprep.subr.mxu0 0.0
        %2204 = vmatpush1.msra.mxu0 0.0
        %2205 = vmatprep.subr.mxu0 0.0
        %2206 = vmatpush1.msra.mxu0 0.0
        %2207 = vmatprep.subr.mxu0 0.0
        %2208 = vmatpush1.msra.mxu0 0.0
        %2209 = vmatprep.subr.mxu0 0.0
        %2210 = vmatpush1.msra.mxu0 0.0
        %2211 = vmatprep.subr.mxu0 0.0
        %2212 = vmatpush1.msra.mxu0 0.0
        %2213 = vmatprep.subr.mxu0 0.0
        %2214 = vmatpush1.msra.mxu0 0.0
        %2215 = vmatprep.subr.mxu0 0.0
        %2216 = vmatpush1.msra.mxu0 0.0
        %2217 = vmatprep.subr.mxu0 0.0
        %2218 = vmatpush1.msra.mxu0 0.0
        %2219 = vmatprep.subr.mxu0 0.0
        %2220 = vmatpush1.msra.mxu0 0.0
        %2221 = vmatprep.subr.mxu0 0.0
        %2222 = vmatpush1.msra.mxu0 0.0
        %2223 = vmatprep.subr.mxu0 0.0
        %2224 = vmatpush1.msra.mxu0 0.0
        %2225 = vmatprep.mubr.f32.mxu0 0.0
        %2226 = vmatmul.mubr.f32.gmra.mrb[0].mxu0 %v2156
        %v2227 = vpop.f32.mrb[0].mxu0
        %v2228 = vadd.f32 1e-08, %v2227
        %v2229 = vpop.f32.mrb[0].mxu0
        %2230 = vmatprep.mubr.f32.mxu0 0.0
        %2231 = vmatmul.mubr.f32.gmra.mrb[0].mxu0 %v2159
        %v2232 = vpop.f32.mrb[0].mxu0
        %v2233 = vadd.f32 1e-08, %v2232
        %v2234 = vpop.f32.mrb[0].mxu0
        %2235 = vdwg.mxu0
        %v2236 = vrsqrt.pop %v2228
        %v2237 = vrsqrt.pop %v2233
        %2239 = vset.pattern.permute.xlu0 0
        %2240 = vperm.xlu0 %2239, %v1933
        %v2241 = vpop.permute.xlu0 %2240
        %2243 = vset.pattern.permute.xlu0 1
        %2244 = vperm.xlu0 %2243, %v1933
        %v2245 = vpop.permute.xlu0 %2244
        %2248 = vset.pattern.permute.xlu0 0
        %2249 = vperm.xlu0 %2248, %v2149
        %v2250 = vpop.permute.xlu0 %2249
        %2253 = vset.pattern.permute.xlu0 0
        %2254 = vperm.xlu0 %2253, %v2150
        %v2255 = vpop.permute.xlu0 %2254
        %2257 = vset.pattern.permute.xlu0 1
        %2258 = vperm.xlu0 %2257, %v2149
        %v2259 = vpop.permute.xlu0 %2258
        %2261 = vset.pattern.permute.xlu0 1
        %2262 = vperm.xlu0 %2261, %v2150
        %v2263 = vpop.permute.xlu0 %2262
        %2266 = vset.pattern.permute.xlu0 0
        %2267 = vperm.xlu0 %2266, %v1993
        %v2268 = vpop.permute.xlu0 %2267
        %2271 = vset.pattern.permute.xlu0 0
        %2272 = vperm.xlu0 %2271, %v1996
        %v2273 = vpop.permute.xlu0 %2272
        %2275 = vset.pattern.permute.xlu0 1
        %2276 = vperm.xlu0 %2275, %v1993
        %v2277 = vpop.permute.xlu0 %2276
        %2279 = vset.pattern.permute.xlu0 1
        %2280 = vperm.xlu0 %2279, %v1996
        %v2281 = vpop.permute.xlu0 %2280
        %2284 = vset.pattern.permute.xlu0 0
        %2285 = vperm.xlu0 %2284, %v2236
        %v2286 = vpop.permute.xlu0 %2285
        %2289 = vset.pattern.permute.xlu0 0
        %2290 = vperm.xlu0 %2289, %v2237
        %v2291 = vpop.permute.xlu0 %2290
        %2293 = vset.pattern.permute.xlu0 1
        %2294 = vperm.xlu0 %2293, %v2236
        %v2295 = vpop.permute.xlu0 %2294
        %2297 = vset.pattern.permute.xlu0 1
        %2298 = vperm.xlu0 %2297, %v2237
        %v2299 = vpop.permute.xlu0 %2298
        %2302 = vset.pattern.permute.xlu0 0
        %2303 = vperm.xlu0 %2302, %v2054
        %v2304 = vpop.permute.xlu0 %2303
        %2307 = vset.pattern.permute.xlu0 0
        %2308 = vperm.xlu0 %2307, %v2057
        %v2309 = vpop.permute.xlu0 %2308
        %2311 = vset.pattern.permute.xlu0 1
        %2312 = vperm.xlu0 %2311, %v2054
        %v2313 = vpop.permute.xlu0 %2312
        %2315 = vset.pattern.permute.xlu0 1
        %2316 = vperm.xlu0 %2315, %v2057
        %v2317 = vpop.permute.xlu0 %2316
        %v2319 = vld [vmem:[%s1340] sm:$0xff]
        %v2320 = vld [vmem:[%s1340 + $0x8] sm:$0xff]
        %v2321 = vld [vmem:[%s1385] sm:$0xff]
        %v2322 = vmul.f32 %v2319, %v2241
        %v2323 = vmul.f32 %v2320, %v2241
        %v2324 = vmul.f32 %v2319, %v2245
        %v2325 = vmul.f32 %v2320, %v2245
        %v2326 = vpack.c.bf16 %v2322, %v2322
        %v2327 = vpack.c.bf16 %v2323, %v2323
        %v2328 = vpack.c.bf16 %v2324, %v2324
        %v2329 = vpack.c.bf16 %v2325, %v2325
        %v2332 = vunpack.c.l.b16 %v1882
        %v2333 = vunpack.c.l.b16 %v1883
        %v2334 = vpack.c.b16 %v2333, %v2332
        %v2336 = vsel %vm2067, %v2334, 0
        %vm2338 = vcmask 1043456
        %v2340 = vsel %vm2338, %v2326, 0
        %v2343 = vsel %vm2338, %v2327, 0
        %v2346 = vsel %vm2338, %v2328, 0
        %v2349 = vsel %vm2338, %v2329, 0
        %2351 = vmatprep.subr.bf16.mxu0 %v2343
        %2352 = vmatpush1.bf16.msra.mxu0 %v2340
        %2353 = vmatprep.subr.bf16.mxu0 0
        %2354 = vmatpush1.bf16.msra.mxu0 0
        %2355 = vmatprep.subr.bf16.mxu0 0
        %2356 = vmatpush1.bf16.msra.mxu0 0
        %2357 = vmatprep.subr.bf16.mxu0 0
        %2358 = vmatpush1.bf16.msra.mxu0 0
        %2359 = vmatprep.subr.bf16.mxu0 0
        %2360 = vmatpush1.bf16.msra.mxu0 0
        %2361 = vmatprep.subr.bf16.mxu0 0
        %2362 = vmatpush1.bf16.msra.mxu0 0
        %2363 = vmatprep.subr.bf16.mxu0 0
        %2364 = vmatpush1.bf16.msra.mxu0 0
        %2365 = vmatprep.subr.bf16.mxu0 0
        %2366 = vmatpush1.bf16.msra.mxu0 0
        %2367 = vmatprep.subr.bf16.mxu0 0
        %2368 = vmatpush1.bf16.msra.mxu0 0
        %2369 = vmatprep.subr.bf16.mxu0 0
        %2370 = vmatpush1.bf16.msra.mxu0 0
        %2371 = vmatprep.subr.bf16.mxu0 0
        %2372 = vmatpush1.bf16.msra.mxu0 0
        %2373 = vmatprep.subr.bf16.mxu0 0
        %2374 = vmatpush1.bf16.msra.mxu0 0
        %2375 = vmatprep.subr.bf16.mxu0 0
        %2376 = vmatpush1.bf16.msra.mxu0 0
        %2377 = vmatprep.subr.bf16.mxu0 0
        %2378 = vmatpush1.bf16.msra.mxu0 0
        %2379 = vmatprep.subr.bf16.mxu0 0
        %2380 = vmatpush1.bf16.msra.mxu0 0
        %2381 = vmatprep.subr.bf16.mxu0 0
        %2382 = vmatpush1.bf16.msra.mxu0 0
        %2383 = vmatprep.mubr.bf16.mxu0 0
        %2384 = vmatmul.mubr.bf16.gmra.mrb[0].mxu0 %v2336
        %v2385 = vpop.f32.mrb[0].mxu0
        %v2386 = vadd.f32 0.0, %v2385
        %v2387 = vpop.f32.mrb[0].mxu0
        %v2388 = vadd.f32 0.0, %v2387
        %v2389 = vpop.f32.mrb[0].mxu0
        %v2390 = vadd.f32 0.0, %v2389
        %v2391 = vpop.f32.mrb[0].mxu0
        %v2392 = vadd.f32 0.0, %v2391
        %2393 = vdwg.mxu0
        %2394 = vmatprep.subr.bf16.mxu0 %v2349
        %2395 = vmatpush1.bf16.msra.mxu0 %v2346
        %2396 = vmatprep.subr.bf16.mxu0 0
        %2397 = vmatpush1.bf16.msra.mxu0 0
        %2398 = vmatprep.subr.bf16.mxu0 0
        %2399 = vmatpush1.bf16.msra.mxu0 0
        %2400 = vmatprep.subr.bf16.mxu0 0
        %2401 = vmatpush1.bf16.msra.mxu0 0
        %2402 = vmatprep.subr.bf16.mxu0 0
        %2403 = vmatpush1.bf16.msra.mxu0 0
        %2404 = vmatprep.subr.bf16.mxu0 0
        %2405 = vmatpush1.bf16.msra.mxu0 0
        %2406 = vmatprep.subr.bf16.mxu0 0
        %2407 = vmatpush1.bf16.msra.mxu0 0
        %2408 = vmatprep.subr.bf16.mxu0 0
        %2409 = vmatpush1.bf16.msra.mxu0 0
        %2410 = vmatprep.subr.bf16.mxu0 0
        %2411 = vmatpush1.bf16.msra.mxu0 0
        %2412 = vmatprep.subr.bf16.mxu0 0
        %2413 = vmatpush1.bf16.msra.mxu0 0
        %2414 = vmatprep.subr.bf16.mxu0 0
        %2415 = vmatpush1.bf16.msra.mxu0 0
        %2416 = vmatprep.subr.bf16.mxu0 0
        %2417 = vmatpush1.bf16.msra.mxu0 0
        %2418 = vmatprep.subr.bf16.mxu0 0
        %2419 = vmatpush1.bf16.msra.mxu0 0
        %2420 = vmatprep.subr.bf16.mxu0 0
        %2421 = vmatpush1.bf16.msra.mxu0 0
        %2422 = vmatprep.subr.bf16.mxu0 0
        %2423 = vmatpush1.bf16.msra.mxu0 0
        %2424 = vmatprep.subr.bf16.mxu0 0
        %2425 = vmatpush1.bf16.msra.mxu0 0
        %2426 = vmatprep.mubr.bf16.mxu0 0
        %2427 = vmatmul.mubr.bf16.gmra.mrb[0].mxu0 %v2336
        %v2428 = vpop.f32.mrb[0].mxu0
        %v2429 = vadd.f32 0.0, %v2428
        %v2430 = vpop.f32.mrb[0].mxu0
        %v2431 = vadd.f32 0.0, %v2430
        %v2432 = vpop.f32.mrb[0].mxu0
        %v2433 = vadd.f32 0.0, %v2432
        %v2434 = vpop.f32.mrb[0].mxu0
        %v2435 = vadd.f32 0.0, %v2434
        %2436 = vdwg.mxu0
        %v2437 = vmul.f32 %v2386, %v2250
        %v2438 = vmul.f32 %v2388, %v2250
        %v2439 = vmul.f32 %v2429, %v2259
        %v2440 = vmul.f32 %v2431, %v2259
        %v2441 = vmul.f32 %v2390, %v2255
        %v2442 = vmul.f32 %v2392, %v2255
        %v2443 = vmul.f32 %v2433, %v2263
        %v2444 = vmul.f32 %v2435, %v2263
        %v2445 = vld [vmem:[%s1350] sm:$0xff]
        %v2446 = vld [vmem:[%s1350 + $0x8] sm:$0xff]
        %2448 = vset.pattern.permute.xlu0 0
        %2449 = vperm.xlu0 %2448, %v2445
        %v2450 = vpop.permute.xlu0 %2449
        %2453 = vset.pattern.permute.xlu0 0
        %2454 = vperm.xlu0 %2453, %v2446
        %v2455 = vpop.permute.xlu0 %2454
        %v2457 = vadd.f32 %v2437, %v2450
        %v2458 = vadd.f32 %v2438, %v2450
        %v2459 = vadd.f32 %v2439, %v2450
        %v2460 = vadd.f32 %v2440, %v2450
        %v2461 = vadd.f32 %v2441, %v2455
        %v2462 = vadd.f32 %v2442, %v2455
        %v2463 = vadd.f32 %v2443, %v2455
        %v2464 = vadd.f32 %v2444, %v2455
        %v2465 = vmul.f32 %v2321, 0.1
        %v2467 = vlaneseq
        %v2468 = vshrl.u32 %v2467, 7
        %v2469 = vsub.s32 0, %v2468
        %v2470 = vrot.slane %v2465, %v2469
        %v2471 = vlaneseq
        %v2472 = vshrl.u32 %v2471, 7
        %v2473 = vsub.s32 2, %v2472
        %v2474 = vrot.slane %v2465, %v2473
        %v2475 = vlaneseq
        %v2476 = vshrl.u32 %v2475, 7
        %v2477 = vsub.s32 4, %v2476
        %v2478 = vrot.slane %v2465, %v2477
        %v2479 = vlaneseq
        %v2480 = vshrl.u32 %v2479, 7
        %v2481 = vsub.s32 6, %v2480
        %v2482 = vrot.slane %v2465, %v2481
        %v2487 = vlaneseq
        %v2488 = vshrl.u32 %v2487, 7
        %v2489 = vsub.s32 0, %v2488
        %v2490 = vrot.slane %v2470, %v2489
        %v2491 = vlaneseq
        %v2492 = vshrl.u32 %v2491, 7
        %v2493 = vsub.s32 0, %v2492
        %v2494 = vrot.slane %v2474, %v2493
        %v2495 = vlaneseq
        %v2496 = vshrl.u32 %v2495, 7
        %v2497 = vsub.s32 0, %v2496
        %v2498 = vrot.slane %v2478, %v2497
        %v2499 = vlaneseq
        %v2500 = vshrl.u32 %v2499, 7
        %v2501 = vsub.s32 0, %v2500
        %v2502 = vrot.slane %v2482, %v2501
        %v2503 = vadd.f32 %v2457, %v2490
        %v2504 = vadd.f32 %v2458, %v2494
        %v2505 = vadd.f32 %v2459, %v2498
        %v2506 = vadd.f32 %v2460, %v2502
        %v2507 = vadd.f32 %v2461, %v2490
        %v2508 = vadd.f32 %v2462, %v2494
        %v2509 = vadd.f32 %v2463, %v2498
        %v2510 = vadd.f32 %v2464, %v2502
        %vm2511 = vcmp.ge.f32.partialorder %v2503, 0.0
        %vm2512 = vcmp.ge.f32.partialorder %v2504, 0.0
        %vm2513 = vcmp.ge.f32.partialorder %v2505, 0.0
        %vm2514 = vcmp.ge.f32.partialorder %v2506, 0.0
        %vm2515 = vcmp.ge.f32.partialorder %v2507, 0.0
        %vm2516 = vcmp.ge.f32.partialorder %v2508, 0.0
        %vm2517 = vcmp.ge.f32.partialorder %v2509, 0.0
        %vm2518 = vcmp.ge.f32.partialorder %v2510, 0.0
        %v2519 = vmul.f32 %v2503, 0.2
        %v2520 = vmul.f32 %v2504, 0.2
        %v2521 = vmul.f32 %v2505, 0.2
        %v2522 = vmul.f32 %v2506, 0.2
        %v2523 = vmul.f32 %v2507, 0.2
        %v2524 = vmul.f32 %v2508, 0.2
        %v2525 = vmul.f32 %v2509, 0.2
        %v2526 = vmul.f32 %v2510, 0.2
        %v2527 = vsel %vm2511, %v2503, %v2519
        %v2528 = vsel %vm2512, %v2504, %v2520
        %v2529 = vsel %vm2513, %v2505, %v2521
        %v2530 = vsel %vm2514, %v2506, %v2522
        %v2531 = vsel %vm2515, %v2507, %v2523
        %v2532 = vsel %vm2516, %v2508, %v2524
        %v2533 = vsel %vm2517, %v2509, %v2525
        %v2534 = vsel %vm2518, %v2510, %v2526
        %v2535 = vmul.f32 %v2527, 1.4142135
        %v2536 = vmul.f32 %v2528, 1.4142135
        %v2537 = vmul.f32 %v2529, 1.4142135
        %v2538 = vmul.f32 %v2530, 1.4142135
        %v2539 = vmul.f32 %v2531, 1.4142135
        %v2540 = vmul.f32 %v2532, 1.4142135
        %v2541 = vmul.f32 %v2533, 1.4142135
        %v2542 = vmul.f32 %v2534, 1.4142135
        %v2543 = vmul.f32 %v2535, %v2268
        %v2544 = vmul.f32 %v2536, %v2268
        %v2545 = vmul.f32 %v2537, %v2277
        %v2546 = vmul.f32 %v2538, %v2277
        %v2547 = vmul.f32 %v2539, %v2273
        %v2548 = vmul.f32 %v2540, %v2273
        %v2549 = vmul.f32 %v2541, %v2281
        %v2550 = vmul.f32 %v2542, %v2281
        %v2551 = vpack.c.bf16 %v2547, %v2543
        %v2552 = vpack.c.bf16 %v2548, %v2544
        %v2553 = vpack.c.bf16 %v2549, %v2545
        %v2554 = vpack.c.bf16 %v2550, %v2546
        %v2557 = vunpack.c.l.b16 %v1884
        %v2558 = vunpack.c.l.b16 %v1885
        %v2559 = vpack.c.b16 %v2558, %v2557
        %v2561 = vsel %vm1463, %v2559, 0
        %2563 = vmatprep.subr.bf16.mxu0 %v2552
        %2564 = vmatpush1.bf16.msra.mxu0 %v2551
        %2565 = vmatprep.subr.bf16.mxu0 0
        %2566 = vmatpush1.bf16.msra.mxu0 0
        %2567 = vmatprep.subr.bf16.mxu0 0
        %2568 = vmatpush1.bf16.msra.mxu0 0
        %2569 = vmatprep.subr.bf16.mxu0 0
        %2570 = vmatpush1.bf16.msra.mxu0 0
        %2571 = vmatprep.subr.bf16.mxu0 0
        %2572 = vmatpush1.bf16.msra.mxu0 0
        %2573 = vmatprep.subr.bf16.mxu0 0
        %2574 = vmatpush1.bf16.msra.mxu0 0
        %2575 = vmatprep.subr.bf16.mxu0 0
        %2576 = vmatpush1.bf16.msra.mxu0 0
        %2577 = vmatprep.subr.bf16.mxu0 0
        %2578 = vmatpush1.bf16.msra.mxu0 0
        %2579 = vmatprep.subr.bf16.mxu0 0
        %2580 = vmatpush1.bf16.msra.mxu0 0
        %2581 = vmatprep.subr.bf16.mxu0 0
        %2582 = vmatpush1.bf16.msra.mxu0 0
        %2583 = vmatprep.subr.bf16.mxu0 0
        %2584 = vmatpush1.bf16.msra.mxu0 0
        %2585 = vmatprep.subr.bf16.mxu0 0
        %2586 = vmatpush1.bf16.msra.mxu0 0
        %2587 = vmatprep.subr.bf16.mxu0 0
        %2588 = vmatpush1.bf16.msra.mxu0 0
        %2589 = vmatprep.subr.bf16.mxu0 0
        %2590 = vmatpush1.bf16.msra.mxu0 0
        %2591 = vmatprep.subr.bf16.mxu0 0
        %2592 = vmatpush1.bf16.msra.mxu0 0
        %2593 = vmatprep.subr.bf16.mxu0 0
        %2594 = vmatpush1.bf16.msra.mxu0 0
        %2595 = vmatprep.mubr.bf16.mxu0 0
        %2596 = vmatmul.mubr.bf16.gmra.mrb[0].mxu0 %v2561
        %v2597 = vpop.f32.mrb[0].mxu0
        %v2598 = vadd.f32 0.0, %v2597
        %v2599 = vpop.f32.mrb[0].mxu0
        %v2600 = vadd.f32 0.0, %v2599
        %v2601 = vpop.f32.mrb[0].mxu0
        %v2602 = vadd.f32 0.0, %v2601
        %v2603 = vpop.f32.mrb[0].mxu0
        %v2604 = vadd.f32 0.0, %v2603
        %2605 = vdwg.mxu0
        %2606 = vmatprep.subr.bf16.mxu0 %v2554
        %2607 = vmatpush1.bf16.msra.mxu0 %v2553
        %2608 = vmatprep.subr.bf16.mxu0 0
        %2609 = vmatpush1.bf16.msra.mxu0 0
        %2610 = vmatprep.subr.bf16.mxu0 0
        %2611 = vmatpush1.bf16.msra.mxu0 0
        %2612 = vmatprep.subr.bf16.mxu0 0
        %2613 = vmatpush1.bf16.msra.mxu0 0
        %2614 = vmatprep.subr.bf16.mxu0 0
        %2615 = vmatpush1.bf16.msra.mxu0 0
        %2616 = vmatprep.subr.bf16.mxu0 0
        %2617 = vmatpush1.bf16.msra.mxu0 0
        %2618 = vmatprep.subr.bf16.mxu0 0
        %2619 = vmatpush1.bf16.msra.mxu0 0
        %2620 = vmatprep.subr.bf16.mxu0 0
        %2621 = vmatpush1.bf16.msra.mxu0 0
        %2622 = vmatprep.subr.bf16.mxu0 0
        %2623 = vmatpush1.bf16.msra.mxu0 0
        %2624 = vmatprep.subr.bf16.mxu0 0
        %2625 = vmatpush1.bf16.msra.mxu0 0
        %2626 = vmatprep.subr.bf16.mxu0 0
        %2627 = vmatpush1.bf16.msra.mxu0 0
        %2628 = vmatprep.subr.bf16.mxu0 0
        %2629 = vmatpush1.bf16.msra.mxu0 0
        %2630 = vmatprep.subr.bf16.mxu0 0
        %2631 = vmatpush1.bf16.msra.mxu0 0
        %2632 = vmatprep.subr.bf16.mxu0 0
        %2633 = vmatpush1.bf16.msra.mxu0 0
        %2634 = vmatprep.subr.bf16.mxu0 0
        %2635 = vmatpush1.bf16.msra.mxu0 0
        %2636 = vmatprep.subr.bf16.mxu0 0
        %2637 = vmatpush1.bf16.msra.mxu0 0
        %2638 = vmatprep.mubr.bf16.mxu0 0
        %2639 = vmatmul.mubr.bf16.gmra.mrb[0].mxu0 %v2561
        %v2640 = vpop.f32.mrb[0].mxu0
        %v2641 = vadd.f32 0.0, %v2640
        %v2642 = vpop.f32.mrb[0].mxu0
        %v2643 = vadd.f32 0.0, %v2642
        %v2644 = vpop.f32.mrb[0].mxu0
        %v2645 = vadd.f32 0.0, %v2644
        %v2646 = vpop.f32.mrb[0].mxu0
        %v2647 = vadd.f32 0.0, %v2646
        %2648 = vdwg.mxu0
        %v2649 = vmul.f32 %v2598, %v2286
        %v2650 = vmul.f32 %v2600, %v2286
        %v2651 = vmul.f32 %v2641, %v2295
        %v2652 = vmul.f32 %v2643, %v2295
        %v2653 = vmul.f32 %v2602, %v2291
        %v2654 = vmul.f32 %v2604, %v2291
        %v2655 = vmul.f32 %v2645, %v2299
        %v2656 = vmul.f32 %v2647, %v2299
        %v2657 = vld [vmem:[%s1370] sm:$0xff]
        %v2658 = vld [vmem:[%s1370 + $0x8] sm:$0xff]
        %2660 = vset.pattern.permute.xlu0 0
        %2661 = vperm.xlu0 %2660, %v2657
        %v2662 = vpop.permute.xlu0 %2661
        %2665 = vset.pattern.permute.xlu0 0
        %2666 = vperm.xlu0 %2665, %v2658
        %v2667 = vpop.permute.xlu0 %2666
        %v2669 = vadd.f32 %v2649, %v2662
        %v2670 = vadd.f32 %v2650, %v2662
        %v2671 = vadd.f32 %v2651, %v2662
        %v2672 = vadd.f32 %v2652, %v2662
        %v2673 = vadd.f32 %v2653, %v2667
        %v2674 = vadd.f32 %v2654, %v2667
        %v2675 = vadd.f32 %v2655, %v2667
        %v2676 = vadd.f32 %v2656, %v2667
        %v2677 = vlaneseq
        %v2678 = vshrl.u32 %v2677, 7
        %v2679 = vsub.s32 1, %v2678
        %v2680 = vrot.slane %v2465, %v2679
        %v2681 = vlaneseq
        %v2682 = vshrl.u32 %v2681, 7
        %v2683 = vsub.s32 3, %v2682
        %v2684 = vrot.slane %v2465, %v2683
        %v2685 = vlaneseq
        %v2686 = vshrl.u32 %v2685, 7
        %v2687 = vsub.s32 5, %v2686
        %v2688 = vrot.slane %v2465, %v2687
        %v2689 = vlaneseq
        %v2690 = vshrl.u32 %v2689, 7
        %v2691 = vsub.s32 7, %v2690
        %v2692 = vrot.slane %v2465, %v2691
        %v2697 = vlaneseq
        %v2698 = vshrl.u32 %v2697, 7
        %v2699 = vsub.s32 1, %v2698
        %v2700 = vrot.slane %v2680, %v2699
        %v2701 = vlaneseq
        %v2702 = vshrl.u32 %v2701, 7
        %v2703 = vsub.s32 1, %v2702
        %v2704 = vrot.slane %v2684, %v2703
        %v2705 = vlaneseq
        %v2706 = vshrl.u32 %v2705, 7
        %v2707 = vsub.s32 1, %v2706
        %v2708 = vrot.slane %v2688, %v2707
        %v2709 = vlaneseq
        %v2710 = vshrl.u32 %v2709, 7
        %v2711 = vsub.s32 1, %v2710
        %v2712 = vrot.slane %v2692, %v2711
        %v2713 = vadd.f32 %v2669, %v2700
        %v2714 = vadd.f32 %v2670, %v2704
        %v2715 = vadd.f32 %v2671, %v2708
        %v2716 = vadd.f32 %v2672, %v2712
        %v2717 = vadd.f32 %v2673, %v2700
        %v2718 = vadd.f32 %v2674, %v2704
        %v2719 = vadd.f32 %v2675, %v2708
        %v2720 = vadd.f32 %v2676, %v2712
        %vm2721 = vcmp.ge.f32.partialorder %v2713, 0.0
        %vm2722 = vcmp.ge.f32.partialorder %v2714, 0.0
        %vm2723 = vcmp.ge.f32.partialorder %v2715, 0.0
        %vm2724 = vcmp.ge.f32.partialorder %v2716, 0.0
        %vm2725 = vcmp.ge.f32.partialorder %v2717, 0.0
        %vm2726 = vcmp.ge.f32.partialorder %v2718, 0.0
        %vm2727 = vcmp.ge.f32.partialorder %v2719, 0.0
        %vm2728 = vcmp.ge.f32.partialorder %v2720, 0.0
        %v2729 = vmul.f32 %v2713, 0.2
        %v2730 = vmul.f32 %v2714, 0.2
        %v2731 = vmul.f32 %v2715, 0.2
        %v2732 = vmul.f32 %v2716, 0.2
        %v2733 = vmul.f32 %v2717, 0.2
        %v2734 = vmul.f32 %v2718, 0.2
        %v2735 = vmul.f32 %v2719, 0.2
        %v2736 = vmul.f32 %v2720, 0.2
        %v2737 = vsel %vm2721, %v2713, %v2729
        %v2738 = vsel %vm2722, %v2714, %v2730
        %v2739 = vsel %vm2723, %v2715, %v2731
        %v2740 = vsel %vm2724, %v2716, %v2732
        %v2741 = vsel %vm2725, %v2717, %v2733
        %v2742 = vsel %vm2726, %v2718, %v2734
        %v2743 = vsel %vm2727, %v2719, %v2735
        %v2744 = vsel %vm2728, %v2720, %v2736
        %v2745 = vmul.f32 %v2737, 1.4142135
        %v2746 = vmul.f32 %v2738, 1.4142135
        %v2747 = vmul.f32 %v2739, 1.4142135
        %v2748 = vmul.f32 %v2740, 1.4142135
        %v2749 = vmul.f32 %v2741, 1.4142135
        %v2750 = vmul.f32 %v2742, 1.4142135
        %v2751 = vmul.f32 %v2743, 1.4142135
        %v2752 = vmul.f32 %v2744, 1.4142135
        %v2753 = vmul.f32 %v2745, %v2304
        %v2754 = vmul.f32 %v2746, %v2304
        %v2755 = vmul.f32 %v2747, %v2313
        %v2756 = vmul.f32 %v2748, %v2313
        %v2757 = vmul.f32 %v2749, %v2309
        %v2758 = vmul.f32 %v2750, %v2309
        %v2759 = vmul.f32 %v2751, %v2317
        %v2760 = vmul.f32 %v2752, %v2317
        %v2761 = vpack.c.bf16 %v2757, %v2753
        %v2762 = vpack.c.bf16 %v2758, %v2754
        %v2763 = vpack.c.bf16 %v2759, %v2755
        %v2764 = vpack.c.bf16 %v2760, %v2756
        %v2765 = vld [vmem:[%s1176] sm:$0x7]
        %2767 = vset.pattern.permute.xlu0 0
        %2768 = vperm.xlu0 %2767, %v2765
        %v2769 = vpop.permute.xlu0 %2768
        %v2772 = vsel %vm1463, %v1886, 0
        %2774 = vmatprep.subr.bf16.mxu0 %v2762
        %2775 = vmatpush1.bf16.msra.mxu0 %v2761
        %2776 = vmatprep.subr.bf16.mxu0 0
        %2777 = vmatpush1.bf16.msra.mxu0 0
        %2778 = vmatprep.subr.bf16.mxu0 0
        %2779 = vmatpush1.bf16.msra.mxu0 0
        %2780 = vmatprep.subr.bf16.mxu0 0
        %2781 = vmatpush1.bf16.msra.mxu0 0
        %2782 = vmatprep.subr.bf16.mxu0 0
        %2783 = vmatpush1.bf16.msra.mxu0 0
        %2784 = vmatprep.subr.bf16.mxu0 0
        %2785 = vmatpush1.bf16.msra.mxu0 0
        %2786 = vmatprep.subr.bf16.mxu0 0
        %2787 = vmatpush1.bf16.msra.mxu0 0
        %2788 = vmatprep.subr.bf16.mxu0 0
        %2789 = vmatpush1.bf16.msra.mxu0 0
        %2790 = vmatprep.subr.bf16.mxu0 0
        %2791 = vmatpush1.bf16.msra.mxu0 0
        %2792 = vmatprep.subr.bf16.mxu0 0
        %2793 = vmatpush1.bf16.msra.mxu0 0
        %2794 = vmatprep.subr.bf16.mxu0 0
        %2795 = vmatpush1.bf16.msra.mxu0 0
        %2796 = vmatprep.subr.bf16.mxu0 0
        %2797 = vmatpush1.bf16.msra.mxu0 0
        %2798 = vmatprep.subr.bf16.mxu0 0
        %2799 = vmatpush1.bf16.msra.mxu0 0
        %2800 = vmatprep.subr.bf16.mxu0 0
        %2801 = vmatpush1.bf16.msra.mxu0 0
        %2802 = vmatprep.subr.bf16.mxu0 0
        %2803 = vmatpush1.bf16.msra.mxu0 0
        %2804 = vmatprep.subr.bf16.mxu0 0
        %2805 = vmatpush1.bf16.msra.mxu0 0
        %2806 = vmatprep.mubr.bf16.mxu0 0
        %2807 = vmatmul.mubr.bf16.gmra.mrb[0].mxu0 %v2772
        %v2808 = vpop.f32.mrb[0].mxu0
        %v2809 = vadd.f32 %v2769, %v2808
        %v2810 = vpop.f32.mrb[0].mxu0
        %v2811 = vadd.f32 %v2769, %v2810
        %v2812 = vpop.f32.mrb[0].mxu0
        %v2813 = vpop.f32.mrb[0].mxu0
        %2814 = vdwg.mxu0
        %2815 = vmatprep.subr.bf16.mxu0 %v2764
        %2816 = vmatpush1.bf16.msra.mxu0 %v2763
        %2817 = vmatprep.subr.bf16.mxu0 0
        %2818 = vmatpush1.bf16.msra.mxu0 0
        %2819 = vmatprep.subr.bf16.mxu0 0
        %2820 = vmatpush1.bf16.msra.mxu0 0
        %2821 = vmatprep.subr.bf16.mxu0 0
        %2822 = vmatpush1.bf16.msra.mxu0 0
        %2823 = vmatprep.subr.bf16.mxu0 0
        %2824 = vmatpush1.bf16.msra.mxu0 0
        %2825 = vmatprep.subr.bf16.mxu0 0
        %2826 = vmatpush1.bf16.msra.mxu0 0
        %2827 = vmatprep.subr.bf16.mxu0 0
        %2828 = vmatpush1.bf16.msra.mxu0 0
        %2829 = vmatprep.subr.bf16.mxu0 0
        %2830 = vmatpush1.bf16.msra.mxu0 0
        %2831 = vmatprep.subr.bf16.mxu0 0
        %2832 = vmatpush1.bf16.msra.mxu0 0
        %2833 = vmatprep.subr.bf16.mxu0 0
        %2834 = vmatpush1.bf16.msra.mxu0 0
        %2835 = vmatprep.subr.bf16.mxu0 0
        %2836 = vmatpush1.bf16.msra.mxu0 0
        %2837 = vmatprep.subr.bf16.mxu0 0
        %2838 = vmatpush1.bf16.msra.mxu0 0
        %2839 = vmatprep.subr.bf16.mxu0 0
        %2840 = vmatpush1.bf16.msra.mxu0 0
        %2841 = vmatprep.subr.bf16.mxu0 0
        %2842 = vmatpush1.bf16.msra.mxu0 0
        %2843 = vmatprep.subr.bf16.mxu0 0
        %2844 = vmatpush1.bf16.msra.mxu0 0
        %2845 = vmatprep.subr.bf16.mxu0 0
        %2846 = vmatpush1.bf16.msra.mxu0 0
        %2847 = vmatprep.mubr.bf16.mxu0 0
        %2848 = vmatmul.mubr.bf16.gmra.mrb[0].mxu0 %v2772
        %v2849 = vpop.f32.mrb[0].mxu0
        %v2850 = vadd.f32 %v2769, %v2849
        %v2851 = vpop.f32.mrb[0].mxu0
        %v2852 = vadd.f32 %v2769, %v2851
        %v2853 = vpop.f32.mrb[0].mxu0
        %v2854 = vpop.f32.mrb[0].mxu0
        %2855 = vdwg.mxu0
        %v2858 = vcombine.low %v2809, %v2811
        %2860 = vst [vmem:[%s1390] sm:$0x77] %v2858
        %v2863 = vcombine.low %v2850, %v2852
        %s2865 = scalar_lea.vmem %s1390, 8
        %2866 = vst [vmem:[%s2865] sm:$0x77] %v2863
        %v2867 = vrot.slane %v2809, 1
        %v2868 = vrot.slane %v2811, 1
        %v2871 = vrot.slane %v2809, 2
        %v2872 = vrot.slane %v2811, 2
        %v2875 = vrot.slane %v2850, 1
        %v2876 = vrot.slane %v2852, 1
        %v2877 = vrot.slane %v2850, 2
        %v2878 = vrot.slane %v2852, 2
        %v2879 = vrot.slane %v2850, 7
        %v2880 = vrot.slane %v2852, 7
        %v2881 = vrot.slane %v2875, 7
        %v2882 = vrot.slane %v2876, 7
        %v2883 = vrot.slane %v2877, 7
        %v2884 = vrot.slane %v2878, 7
        %vm2891 = vcmask 1040384
        %v2892 = vsel %vm2891, %v2809, %v2879
        %v2893 = vsel %vm2891, %v2811, %v2880
        %v2894 = vsel %vm2891, %v2867, %v2881
        %v2895 = vsel %vm2891, %v2868, %v2882
        %v2896 = vsel %vm2891, %v2871, %v2883
        %v2897 = vsel %vm2891, %v2872, %v2884
        %v2898 = vld [vmem:[#allocation12] sm:$0xf]
        %v2899 = vld [vmem:[#allocation12 + $0x4] sm:$0xf]
        %v2900 = vld [vmem:[#allocation12 + $0x8] sm:$0xf]
        %v2901 = vld [vmem:[#allocation12 + $0xc] sm:$0xf]
        %v2902 = vld [vmem:[#allocation12 + $0x10] sm:$0xf]
        %v2903 = vld [vmem:[#allocation12 + $0x14] sm:$0xf]
        %v2904 = vld [vmem:[#allocation12 + $0x18] sm:$0xf]
        %v2905 = vld [vmem:[#allocation12 + $0x1c] sm:$0xf]
        %v2906 = vld [vmem:[#allocation12 + $0x20] sm:$0xf]
        %v2907 = vld [vmem:[#allocation12 + $0x24] sm:$0xf]
        %v2908 = vld [vmem:[#allocation12 + $0x28] sm:$0xf]
        %v2909 = vld [vmem:[#allocation12 + $0x2c] sm:$0xf]
        %v2910 = vld [vmem:[#allocation12 + $0x30] sm:$0xf]
        %v2911 = vld [vmem:[#allocation12 + $0x34] sm:$0xf]
        %v2912 = vld [vmem:[#allocation12 + $0x38] sm:$0xf]
        %v2913 = vld [vmem:[#allocation12 + $0x3c] sm:$0xf]
        %v2914 = vld [vmem:[#allocation12 + $0x40] sm:$0xf]
        %v2915 = vld [vmem:[#allocation12 + $0x44] sm:$0xf]
        %v2916 = vld [vmem:[#allocation12 + $0x48] sm:$0xf]
        %v2917 = vld [vmem:[#allocation12 + $0x4c] sm:$0xf]
        %v2918 = vld [vmem:[#allocation12 + $0x50] sm:$0xf]
        %v2919 = vld [vmem:[#allocation12 + $0x54] sm:$0xf]
        %v2920 = vld [vmem:[#allocation12 + $0x58] sm:$0xf]
        %v2921 = vld [vmem:[#allocation12 + $0x5c] sm:$0xf]
        %v2922 = vld [vmem:[#allocation12 + $0x60] sm:$0xf]
        %v2923 = vld [vmem:[#allocation12 + $0x64] sm:$0xf]
        %v2924 = vld [vmem:[#allocation12 + $0x68] sm:$0xf]
        %v2925 = vld [vmem:[#allocation12 + $0x6c] sm:$0xf]
        %v2926 = vld [vmem:[#allocation12 + $0x70] sm:$0xf]
        %v2927 = vld [vmem:[#allocation12 + $0x74] sm:$0xf]
        %v2928 = vld [vmem:[#allocation12 + $0x78] sm:$0xf]
        %v2929 = vld [vmem:[#allocation12 + $0x7c] sm:$0xf]
        %v2930 = vld [vmem:[#allocation12 + $0x80] sm:$0xf]
        %v2931 = vld [vmem:[#allocation12 + $0x84] sm:$0xf]
        %v2932 = vld [vmem:[#allocation12 + $0x88] sm:$0xf]
        %v2933 = vld [vmem:[#allocation12 + $0x8c] sm:$0xf]
        %v2934 = vld [vmem:[#allocation12 + $0x90] sm:$0xf]
        %v2935 = vld [vmem:[#allocation12 + $0x94] sm:$0xf]
        %v2936 = vld [vmem:[#allocation12 + $0x98] sm:$0xf]
        %v2937 = vld [vmem:[#allocation12 + $0x9c] sm:$0xf]
        %v2938 = vld [vmem:[#allocation12 + $0xa0] sm:$0xf]
        %v2939 = vld [vmem:[#allocation12 + $0xa4] sm:$0xf]
        %v2940 = vld [vmem:[#allocation12 + $0xa8] sm:$0xf]
        %v2941 = vld [vmem:[#allocation12 + $0xac] sm:$0xf]
        %v2942 = vld [vmem:[#allocation12 + $0xb0] sm:$0xf]
        %v2943 = vld [vmem:[#allocation12 + $0xb4] sm:$0xf]
        %v2944 = vld [vmem:[#allocation12 + $0xb8] sm:$0xf]
        %v2945 = vld [vmem:[#allocation12 + $0xbc] sm:$0xf]
        %v2946 = vld [vmem:[#allocation12 + $0xc0] sm:$0xf]
        %v2947 = vld [vmem:[#allocation12 + $0xc4] sm:$0xf]
        %v2948 = vld [vmem:[#allocation12 + $0xc8] sm:$0xf]
        %v2949 = vld [vmem:[#allocation12 + $0xcc] sm:$0xf]
        %v2950 = vld [vmem:[#allocation12 + $0xd0] sm:$0xf]
        %v2951 = vld [vmem:[#allocation12 + $0xd4] sm:$0xf]
        %v2952 = vld [vmem:[#allocation12 + $0xd8] sm:$0xf]
        %v2953 = vld [vmem:[#allocation12 + $0xdc] sm:$0xf]
        %v2954 = vld [vmem:[#allocation12 + $0xe0] sm:$0xf]
        %v2955 = vld [vmem:[#allocation12 + $0xe4] sm:$0xf]
        %v2956 = vld [vmem:[#allocation12 + $0xe8] sm:$0xf]
        %v2957 = vld [vmem:[#allocation12 + $0xec] sm:$0xf]
        %v2958 = vld [vmem:[#allocation12 + $0xf0] sm:$0xf]
        %v2959 = vld [vmem:[#allocation12 + $0xf4] sm:$0xf]
        %v2960 = vld [vmem:[#allocation12 + $0xf8] sm:$0xf]
        %v2961 = vld [vmem:[#allocation12 + $0xfc] sm:$0xf]
        %v2962 = vld [vmem:[#allocation12 + $0x100] sm:$0xf]
        %v2963 = vld [vmem:[#allocation12 + $0x104] sm:$0xf]
        %v2964 = vld [vmem:[#allocation12 + $0x108] sm:$0xf]
        %v2965 = vld [vmem:[#allocation12 + $0x10c] sm:$0xf]
        %v2966 = vld [vmem:[#allocation12 + $0x110] sm:$0xf]
        %v2967 = vld [vmem:[#allocation12 + $0x114] sm:$0xf]
        %v2968 = vld [vmem:[#allocation12 + $0x118] sm:$0xf]
        %v2969 = vld [vmem:[#allocation12 + $0x11c] sm:$0xf]
        %v2970 = vld [vmem:[#allocation12 + $0x120] sm:$0xf]
        %v2971 = vld [vmem:[#allocation12 + $0x124] sm:$0xf]
        %v2972 = vld [vmem:[#allocation12 + $0x128] sm:$0xf]
        %v2973 = vld [vmem:[#allocation12 + $0x12c] sm:$0xf]
        %v2974 = vld [vmem:[#allocation12 + $0x130] sm:$0xf]
        %v2975 = vld [vmem:[#allocation12 + $0x134] sm:$0xf]
        %v2976 = vld [vmem:[#allocation12 + $0x138] sm:$0xf]
        %v2977 = vld [vmem:[#allocation12 + $0x13c] sm:$0xf]
        %v2978 = vld [vmem:[#allocation12 + $0x140] sm:$0xf]
        %v2979 = vld [vmem:[#allocation12 + $0x144] sm:$0xf]
        %v2980 = vld [vmem:[#allocation12 + $0x148] sm:$0xf]
        %v2981 = vld [vmem:[#allocation12 + $0x14c] sm:$0xf]
        %v2982 = vld [vmem:[#allocation12 + $0x150] sm:$0xf]
        %v2983 = vld [vmem:[#allocation12 + $0x154] sm:$0xf]
        %v2984 = vld [vmem:[#allocation12 + $0x158] sm:$0xf]
        %v2985 = vld [vmem:[#allocation12 + $0x15c] sm:$0xf]
        %v2986 = vld [vmem:[#allocation12 + $0x160] sm:$0xf]
        %v2987 = vld [vmem:[#allocation12 + $0x164] sm:$0xf]
        %v2988 = vld [vmem:[#allocation12 + $0x168] sm:$0xf]
        %v2989 = vld [vmem:[#allocation12 + $0x16c] sm:$0xf]
        %v2990 = vld [vmem:[#allocation12 + $0x170] sm:$0xf]
        %v2991 = vld [vmem:[#allocation12 + $0x174] sm:$0xf]
        %v2992 = vld [vmem:[#allocation12 + $0x178] sm:$0xf]
        %v2993 = vld [vmem:[#allocation12 + $0x17c] sm:$0xf]
        %v2994 = vpack.c.bf16 %v2892, %v2892
        %v2995 = vpack.c.bf16 %v2893, %v2893
        %v2996 = vpack.c.bf16 %v2894, %v2894
        %v2997 = vpack.c.bf16 %v2895, %v2895
        %v2998 = vpack.c.bf16 %v2896, %v2896
        %v2999 = vpack.c.bf16 %v2897, %v2897
        %v3096 = vunpack.c.l.b16 %v2898
        %v3097 = vunpack.c.l.b16 %v2899
        %v3098 = vunpack.c.l.b16 %v2900
        %v3099 = vunpack.c.l.b16 %v2901
        %v3100 = vunpack.c.l.b16 %v2902
        %v3101 = vunpack.c.l.b16 %v2903
        %v3102 = vunpack.c.l.b16 %v2904
        %v3103 = vunpack.c.l.b16 %v2905
        %v3104 = vunpack.c.l.b16 %v2906
        %v3105 = vunpack.c.l.b16 %v2907
        %v3106 = vunpack.c.l.b16 %v2908
        %v3107 = vunpack.c.l.b16 %v2909
        %v3108 = vunpack.c.l.b16 %v2910
        %v3109 = vunpack.c.l.b16 %v2911
        %v3110 = vunpack.c.l.b16 %v2912
        %v3111 = vunpack.c.l.b16 %v2913
        %v3112 = vunpack.c.l.b16 %v2914
        %v3113 = vunpack.c.l.b16 %v2915
        %v3114 = vunpack.c.l.b16 %v2916
        %v3115 = vunpack.c.l.b16 %v2917
        %v3116 = vunpack.c.l.b16 %v2918
        %v3117 = vunpack.c.l.b16 %v2919
        %v3118 = vunpack.c.l.b16 %v2920
        %v3119 = vunpack.c.l.b16 %v2921
        %v3120 = vunpack.c.l.b16 %v2922
        %v3121 = vunpack.c.l.b16 %v2923
        %v3122 = vunpack.c.l.b16 %v2924
        %v3123 = vunpack.c.l.b16 %v2925
        %v3124 = vunpack.c.l.b16 %v2926
        %v3125 = vunpack.c.l.b16 %v2927
        %v3126 = vunpack.c.l.b16 %v2928
        %v3127 = vunpack.c.l.b16 %v2929
        %v3128 = vunpack.c.l.b16 %v2930
        %v3129 = vunpack.c.l.b16 %v2931
        %v3130 = vunpack.c.l.b16 %v2932
        %v3131 = vunpack.c.l.b16 %v2933
        %v3132 = vunpack.c.l.b16 %v2934
        %v3133 = vunpack.c.l.b16 %v2935
        %v3134 = vunpack.c.l.b16 %v2936
        %v3135 = vunpack.c.l.b16 %v2937
        %v3136 = vunpack.c.l.b16 %v2938
        %v3137 = vunpack.c.l.b16 %v2939
        %v3138 = vunpack.c.l.b16 %v2940
        %v3139 = vunpack.c.l.b16 %v2941
        %v3140 = vunpack.c.l.b16 %v2942
        %v3141 = vunpack.c.l.b16 %v2943
        %v3142 = vunpack.c.l.b16 %v2944
        %v3143 = vunpack.c.l.b16 %v2945
        %v3144 = vunpack.c.l.b16 %v2946
        %v3145 = vunpack.c.l.b16 %v2947
        %v3146 = vunpack.c.l.b16 %v2948
        %v3147 = vunpack.c.l.b16 %v2949
        %v3148 = vunpack.c.l.b16 %v2950
        %v3149 = vunpack.c.l.b16 %v2951
        %v3150 = vunpack.c.l.b16 %v2952
        %v3151 = vunpack.c.l.b16 %v2953
        %v3152 = vunpack.c.l.b16 %v2954
        %v3153 = vunpack.c.l.b16 %v2955
        %v3154 = vunpack.c.l.b16 %v2956
        %v3155 = vunpack.c.l.b16 %v2957
        %v3156 = vunpack.c.l.b16 %v2958
        %v3157 = vunpack.c.l.b16 %v2959
        %v3158 = vunpack.c.l.b16 %v2960
        %v3159 = vunpack.c.l.b16 %v2961
        %v3160 = vunpack.c.l.b16 %v2962
        %v3161 = vunpack.c.l.b16 %v2963
        %v3162 = vunpack.c.l.b16 %v2964
        %v3163 = vunpack.c.l.b16 %v2965
        %v3164 = vunpack.c.l.b16 %v2966
        %v3165 = vunpack.c.l.b16 %v2967
        %v3166 = vunpack.c.l.b16 %v2968
        %v3167 = vunpack.c.l.b16 %v2969
        %v3168 = vunpack.c.l.b16 %v2970
        %v3169 = vunpack.c.l.b16 %v2971
        %v3170 = vunpack.c.l.b16 %v2972
        %v3171 = vunpack.c.l.b16 %v2973
        %v3172 = vunpack.c.l.b16 %v2974
        %v3173 = vunpack.c.l.b16 %v2975
        %v3174 = vunpack.c.l.b16 %v2976
        %v3175 = vunpack.c.l.b16 %v2977
        %v3176 = vunpack.c.l.b16 %v2978
        %v3177 = vunpack.c.l.b16 %v2979
        %v3178 = vunpack.c.l.b16 %v2980
        %v3179 = vunpack.c.l.b16 %v2981
        %v3180 = vunpack.c.l.b16 %v2982
        %v3181 = vunpack.c.l.b16 %v2983
        %v3182 = vunpack.c.l.b16 %v2984
        %v3183 = vunpack.c.l.b16 %v2985
        %v3184 = vunpack.c.l.b16 %v2986
        %v3185 = vunpack.c.l.b16 %v2987
        %v3186 = vunpack.c.l.b16 %v2988
        %v3187 = vunpack.c.l.b16 %v2989
        %v3188 = vunpack.c.l.b16 %v2990
        %v3189 = vunpack.c.l.b16 %v2991
        %v3190 = vunpack.c.l.b16 %v2992
        %v3191 = vunpack.c.l.b16 %v2993
        %v3192 = vpack.c.b16 %v3097, %v3096
        %v3193 = vpack.c.b16 %v3099, %v3098
        %v3194 = vpack.c.b16 %v3101, %v3100
        %v3195 = vpack.c.b16 %v3103, %v3102
        %v3196 = vpack.c.b16 %v3105, %v3104
        %v3197 = vpack.c.b16 %v3107, %v3106
        %v3198 = vpack.c.b16 %v3109, %v3108
        %v3199 = vpack.c.b16 %v3111, %v3110
        %v3200 = vpack.c.b16 %v3113, %v3112
        %v3201 = vpack.c.b16 %v3115, %v3114
        %v3202 = vpack.c.b16 %v3117, %v3116
        %v3203 = vpack.c.b16 %v3119, %v3118
        %v3204 = vpack.c.b16 %v3121, %v3120
        %v3205 = vpack.c.b16 %v3123, %v3122
        %v3206 = vpack.c.b16 %v3125, %v3124
        %v3207 = vpack.c.b16 %v3127, %v3126
        %v3208 = vpack.c.b16 %v3129, %v3128
        %v3209 = vpack.c.b16 %v3131, %v3130
        %v3210 = vpack.c.b16 %v3133, %v3132
        %v3211 = vpack.c.b16 %v3135, %v3134
        %v3212 = vpack.c.b16 %v3137, %v3136
        %v3213 = vpack.c.b16 %v3139, %v3138
        %v3214 = vpack.c.b16 %v3141, %v3140
        %v3215 = vpack.c.b16 %v3143, %v3142
        %v3216 = vpack.c.b16 %v3145, %v3144
        %v3217 = vpack.c.b16 %v3147, %v3146
        %v3218 = vpack.c.b16 %v3149, %v3148
        %v3219 = vpack.c.b16 %v3151, %v3150
        %v3220 = vpack.c.b16 %v3153, %v3152
        %v3221 = vpack.c.b16 %v3155, %v3154
        %v3222 = vpack.c.b16 %v3157, %v3156
        %v3223 = vpack.c.b16 %v3159, %v3158
        %v3224 = vpack.c.b16 %v3161, %v3160
        %v3225 = vpack.c.b16 %v3163, %v3162
        %v3226 = vpack.c.b16 %v3165, %v3164
        %v3227 = vpack.c.b16 %v3167, %v3166
        %v3228 = vpack.c.b16 %v3169, %v3168
        %v3229 = vpack.c.b16 %v3171, %v3170
        %v3230 = vpack.c.b16 %v3173, %v3172
        %v3231 = vpack.c.b16 %v3175, %v3174
        %v3232 = vpack.c.b16 %v3177, %v3176
        %v3233 = vpack.c.b16 %v3179, %v3178
        %v3234 = vpack.c.b16 %v3181, %v3180
        %v3235 = vpack.c.b16 %v3183, %v3182
        %v3236 = vpack.c.b16 %v3185, %v3184
        %v3237 = vpack.c.b16 %v3187, %v3186
        %v3238 = vpack.c.b16 %v3189, %v3188
        %v3239 = vpack.c.b16 %v3191, %v3190
        %3288 = vmatprep.subr.bf16.mxu0 0
        %3289 = vmatpush1.bf16.msra.mxu0 %v3192
        %3290 = vmatprep.subr.bf16.mxu0 0
        %3291 = vmatpush1.bf16.msra.mxu0 %v3193
        %3292 = vmatprep.subr.bf16.mxu0 0
        %3293 = vmatpush1.bf16.msra.mxu0 %v3194
        %3294 = vmatprep.subr.bf16.mxu0 0
        %3295 = vmatpush1.bf16.msra.mxu0 %v3195
        %3296 = vmatprep.subr.bf16.mxu0 0
        %3297 = vmatpush1.bf16.msra.mxu0 %v3196
        %3298 = vmatprep.subr.bf16.mxu0 0
        %3299 = vmatpush1.bf16.msra.mxu0 %v3197
        %3300 = vmatprep.subr.bf16.mxu0 0
        %3301 = vmatpush1.bf16.msra.mxu0 %v3198
        %3302 = vmatprep.subr.bf16.mxu0 0
        %3303 = vmatpush1.bf16.msra.mxu0 %v3199
        %3304 = vmatprep.subr.bf16.mxu0 0
        %3305 = vmatpush1.bf16.msra.mxu0 %v3200
        %3306 = vmatprep.subr.bf16.mxu0 0
        %3307 = vmatpush1.bf16.msra.mxu0 %v3201
        %3308 = vmatprep.subr.bf16.mxu0 0
        %3309 = vmatpush1.bf16.msra.mxu0 %v3202
        %3310 = vmatprep.subr.bf16.mxu0 0
        %3311 = vmatpush1.bf16.msra.mxu0 %v3203
        %3312 = vmatprep.subr.bf16.mxu0 0
        %3313 = vmatpush1.bf16.msra.mxu0 %v3204
        %3314 = vmatprep.subr.bf16.mxu0 0
        %3315 = vmatpush1.bf16.msra.mxu0 %v3205
        %3316 = vmatprep.subr.bf16.mxu0 0
        %3317 = vmatpush1.bf16.msra.mxu0 %v3206
        %3318 = vmatprep.subr.bf16.mxu0 0
        %3319 = vmatpush1.bf16.msra.mxu0 %v3207
        %3320 = vmatprep.mubr.bf16.mxu0 %v2995
        %3321 = vmatmul.mubr.bf16.gmra.mrb[0].mxu0 %v2994
        %v3322 = vpop.f32.mrb[0].mxu0
        %v3323 = vadd.f32 0.0, %v3322
        %v3324 = vpop.f32.mrb[0].mxu0
        %v3325 = vpop.f32.mrb[0].mxu0
        %v3326 = vpop.f32.mrb[0].mxu0
        %3327 = vdwg.mxu0
        %3328 = vmatprep.subr.bf16.mxu0 0
        %3329 = vmatpush1.bf16.msra.mxu0 %v3208
        %3330 = vmatprep.subr.bf16.mxu0 0
        %3331 = vmatpush1.bf16.msra.mxu0 %v3209
        %3332 = vmatprep.subr.bf16.mxu0 0
        %3333 = vmatpush1.bf16.msra.mxu0 %v3210
        %3334 = vmatprep.subr.bf16.mxu0 0
        %3335 = vmatpush1.bf16.msra.mxu0 %v3211
        %3336 = vmatprep.subr.bf16.mxu0 0
        %3337 = vmatpush1.bf16.msra.mxu0 %v3212
        %3338 = vmatprep.subr.bf16.mxu0 0
        %3339 = vmatpush1.bf16.msra.mxu0 %v3213
        %3340 = vmatprep.subr.bf16.mxu0 0
        %3341 = vmatpush1.bf16.msra.mxu0 %v3214
        %3342 = vmatprep.subr.bf16.mxu0 0
        %3343 = vmatpush1.bf16.msra.mxu0 %v3215
        %3344 = vmatprep.subr.bf16.mxu0 0
        %3345 = vmatpush1.bf16.msra.mxu0 %v3216
        %3346 = vmatprep.subr.bf16.mxu0 0
        %3347 = vmatpush1.bf16.msra.mxu0 %v3217
        %3348 = vmatprep.subr.bf16.mxu0 0
        %3349 = vmatpush1.bf16.msra.mxu0 %v3218
        %3350 = vmatprep.subr.bf16.mxu0 0
        %3351 = vmatpush1.bf16.msra.mxu0 %v3219
        %3352 = vmatprep.subr.bf16.mxu0 0
        %3353 = vmatpush1.bf16.msra.mxu0 %v3220
        %3354 = vmatprep.subr.bf16.mxu0 0
        %3355 = vmatpush1.bf16.msra.mxu0 %v3221
        %3356 = vmatprep.subr.bf16.mxu0 0
        %3357 = vmatpush1.bf16.msra.mxu0 %v3222
        %3358 = vmatprep.subr.bf16.mxu0 0
        %3359 = vmatpush1.bf16.msra.mxu0 %v3223
        %3360 = vmatprep.mubr.bf16.mxu0 %v2997
        %3361 = vmatmul.mubr.bf16.gmra.mrb[0].mxu0 %v2996
        %v3362 = vpop.f32.mrb[0].mxu0
        %v3363 = vadd.f32 %v3323, %v3362
        %v3364 = vpop.f32.mrb[0].mxu0
        %v3365 = vpop.f32.mrb[0].mxu0
        %v3366 = vpop.f32.mrb[0].mxu0
        %3367 = vdwg.mxu0
        %3368 = vmatprep.subr.bf16.mxu0 0
        %3369 = vmatpush1.bf16.msra.mxu0 %v3224
        %3370 = vmatprep.subr.bf16.mxu0 0
        %3371 = vmatpush1.bf16.msra.mxu0 %v3225
        %3372 = vmatprep.subr.bf16.mxu0 0
        %3373 = vmatpush1.bf16.msra.mxu0 %v3226
        %3374 = vmatprep.subr.bf16.mxu0 0
        %3375 = vmatpush1.bf16.msra.mxu0 %v3227
        %3376 = vmatprep.subr.bf16.mxu0 0
        %3377 = vmatpush1.bf16.msra.mxu0 %v3228
        %3378 = vmatprep.subr.bf16.mxu0 0
        %3379 = vmatpush1.bf16.msra.mxu0 %v3229
        %3380 = vmatprep.subr.bf16.mxu0 0
        %3381 = vmatpush1.bf16.msra.mxu0 %v3230
        %3382 = vmatprep.subr.bf16.mxu0 0
        %3383 = vmatpush1.bf16.msra.mxu0 %v3231
        %3384 = vmatprep.subr.bf16.mxu0 0
        %3385 = vmatpush1.bf16.msra.mxu0 %v3232
        %3386 = vmatprep.subr.bf16.mxu0 0
        %3387 = vmatpush1.bf16.msra.mxu0 %v3233
        %3388 = vmatprep.subr.bf16.mxu0 0
        %3389 = vmatpush1.bf16.msra.mxu0 %v3234
        %3390 = vmatprep.subr.bf16.mxu0 0
        %3391 = vmatpush1.bf16.msra.mxu0 %v3235
        %3392 = vmatprep.subr.bf16.mxu0 0
        %3393 = vmatpush1.bf16.msra.mxu0 %v3236
        %3394 = vmatprep.subr.bf16.mxu0 0
        %3395 = vmatpush1.bf16.msra.mxu0 %v3237
        %3396 = vmatprep.subr.bf16.mxu0 0
        %3397 = vmatpush1.bf16.msra.mxu0 %v3238
        %3398 = vmatprep.subr.bf16.mxu0 0
        %3399 = vmatpush1.bf16.msra.mxu0 %v3239
        %3400 = vmatprep.mubr.bf16.mxu0 %v2999
        %3401 = vmatmul.mubr.bf16.gmra.mrb[0].mxu0 %v2998
        %v3402 = vpop.f32.mrb[0].mxu0
        %v3403 = vadd.f32 %v3363, %v3402
        %v3404 = vpop.f32.mrb[0].mxu0
        %v3405 = vpop.f32.mrb[0].mxu0
        %v3406 = vpop.f32.mrb[0].mxu0
        %3407 = vdwg.mxu0
        %v3408 = vld [vmem:[%s53] sm:$0xf]
        %v3409 = vld [vmem:[%s53 + $0x4] sm:$0xf]
        %v3410 = vld [vmem:[%s53 + $0x8] sm:$0xf]
        %v3411 = vld [vmem:[%s53 + $0xc] sm:$0xf]
        %v3412 = vld [vmem:[%s53 + $0x10] sm:$0xf]
        %v3413 = vld [vmem:[%s53 + $0x14] sm:$0xf]
        %v3414 = vpack.c.bf16 %v3403, %v3403
        %v3415 = vld [vmem:[%s55] sm:$0x1]
        %v3417 = vlaneseq
        %v3418 = vshrl.u32 %v3417, 7
        %v3419 = vsub.s32 0, %v3418
        %v3420 = vrot.slane %v3415, %v3419
        %v3428 = vunpack.c.l.b16 %v3408
        %v3429 = vunpack.c.l.b16 %v3409
        %v3430 = vunpack.c.l.b16 %v3410
        %v3431 = vunpack.c.l.b16 %v3411
        %v3432 = vunpack.c.l.b16 %v3412
        %v3433 = vunpack.c.l.b16 %v3413
        %v3434 = vpack.c.b16 %v3429, %v3428
        %v3435 = vpack.c.b16 %v3431, %v3430
        %v3436 = vpack.c.b16 %v3433, %v3432
        %vm3440 = vcmask 392192
        %v3442 = vsel %vm3440, %v3414, 0
        %3444 = vmatprep.subr.bf16.mxu0 0
        %3445 = vmatpush1.bf16.msra.mxu0 %v3434
        %3446 = vmatprep.subr.bf16.mxu0 0
        %3447 = vmatpush1.bf16.msra.mxu0 %v3435
        %3448 = vmatprep.subr.bf16.mxu0 0
        %3449 = vmatpush1.bf16.msra.mxu0 %v3436
        %3450 = vmatprep.subr.bf16.mxu0 0
        %3451 = vmatpush1.bf16.msra.mxu0 0
        %3452 = vmatprep.subr.bf16.mxu0 0
        %3453 = vmatpush1.bf16.msra.mxu0 0
        %3454 = vmatprep.subr.bf16.mxu0 0
        %3455 = vmatpush1.bf16.msra.mxu0 0
        %3456 = vmatprep.subr.bf16.mxu0 0
        %3457 = vmatpush1.bf16.msra.mxu0 0
        %3458 = vmatprep.subr.bf16.mxu0 0
        %3459 = vmatpush1.bf16.msra.mxu0 0
        %3460 = vmatprep.subr.bf16.mxu0 0
        %3461 = vmatpush1.bf16.msra.mxu0 0
        %3462 = vmatprep.subr.bf16.mxu0 0
        %3463 = vmatpush1.bf16.msra.mxu0 0
        %3464 = vmatprep.subr.bf16.mxu0 0
        %3465 = vmatpush1.bf16.msra.mxu0 0
        %3466 = vmatprep.subr.bf16.mxu0 0
        %3467 = vmatpush1.bf16.msra.mxu0 0
        %3468 = vmatprep.subr.bf16.mxu0 0
        %3469 = vmatpush1.bf16.msra.mxu0 0
        %3470 = vmatprep.subr.bf16.mxu0 0
        %3471 = vmatpush1.bf16.msra.mxu0 0
        %3472 = vmatprep.subr.bf16.mxu0 0
        %3473 = vmatpush1.bf16.msra.mxu0 0
        %3474 = vmatprep.subr.bf16.mxu0 0
        %3475 = vmatpush1.bf16.msra.mxu0 0
        %3476 = vmatprep.mubr.bf16.mxu0 0
        %3477 = vmatmul.mubr.bf16.gmra.mrb[0].mxu0 %v3442
        %v3478 = vpop.f32.mrb[0].mxu0
        %v3479 = vadd.f32 %v3420, %v3478
        %v3480 = vpop.f32.mrb[0].mxu0
        %v3481 = vpop.f32.mrb[0].mxu0
        %v3482 = vpop.f32.mrb[0].mxu0
        %3483 = vdwg.mxu0
        %v3484 = vmul.f32 %v3479, %v3479
        %vm3485 = vcmask 254976
        %v3486 = vsel %vm3485, %v3484, 0.0
        %3487 = vadd.xlane.f32.xlu0 %v3486
        %v3488 = vpop.xlane.xlu0 %3487
        %v3489 = vadd.f32 %v3488, 1e-08
        %v3490 = vrsqrt.pop %v3489
        %v3491 = vmul.f32 %v3479, %v3490
        %v3492 = vld [vmem:[%s59] sm:$0xf]
        %v3493 = vld [vmem:[%s59 + $0x4] sm:$0xf]
        %v3494 = vld [vmem:[%s59 + $0x8] sm:$0xf]
        %v3495 = vld [vmem:[%s59 + $0xc] sm:$0xf]
        %v3496 = vld [vmem:[%s59 + $0x10] sm:$0xf]
        %v3497 = vld [vmem:[%s59 + $0x14] sm:$0xf]
        %v3498 = vld [vmem:[%s61] sm:$0x1]
        %v3500 = vlaneseq
        %v3501 = vshrl.u32 %v3500, 7
        %v3502 = vsub.s32 0, %v3501
        %v3503 = vrot.slane %v3498, %v3502
        %v3511 = vunpack.c.l.b16 %v3492
        %v3512 = vunpack.c.l.b16 %v3493
        %v3513 = vunpack.c.l.b16 %v3494
        %v3514 = vunpack.c.l.b16 %v3495
        %v3515 = vunpack.c.l.b16 %v3496
        %v3516 = vunpack.c.l.b16 %v3497
        %v3517 = vpack.c.b16 %v3512, %v3511
        %v3518 = vpack.c.b16 %v3514, %v3513
        %v3519 = vpack.c.b16 %v3516, %v3515
        %3523 = vmatprep.subr.bf16.mxu0 0
        %3524 = vmatpush1.bf16.msra.mxu0 %v3517
        %3525 = vmatprep.subr.bf16.mxu0 0
        %3526 = vmatpush1.bf16.msra.mxu0 %v3518
        %3527 = vmatprep.subr.bf16.mxu0 0
        %3528 = vmatpush1.bf16.msra.mxu0 %v3519
        %3529 = vmatprep.subr.bf16.mxu0 0
        %3530 = vmatpush1.bf16.msra.mxu0 0
        %3531 = vmatprep.subr.bf16.mxu0 0
        %3532 = vmatpush1.bf16.msra.mxu0 0
        %3533 = vmatprep.subr.bf16.mxu0 0
        %3534 = vmatpush1.bf16.msra.mxu0 0
        %3535 = vmatprep.subr.bf16.mxu0 0
        %3536 = vmatpush1.bf16.msra.mxu0 0
        %3537 = vmatprep.subr.bf16.mxu0 0
        %3538 = vmatpush1.bf16.msra.mxu0 0
        %3539 = vmatprep.subr.bf16.mxu0 0
        %3540 = vmatpush1.bf16.msra.mxu0 0
        %3541 = vmatprep.subr.bf16.mxu0 0
        %3542 = vmatpush1.bf16.msra.mxu0 0
        %3543 = vmatprep.subr.bf16.mxu0 0
        %3544 = vmatpush1.bf16.msra.mxu0 0
        %3545 = vmatprep.subr.bf16.mxu0 0
        %3546 = vmatpush1.bf16.msra.mxu0 0
        %3547 = vmatprep.subr.bf16.mxu0 0
        %3548 = vmatpush1.bf16.msra.mxu0 0
        %3549 = vmatprep.subr.bf16.mxu0 0
        %3550 = vmatpush1.bf16.msra.mxu0 0
        %3551 = vmatprep.subr.bf16.mxu0 0
        %3552 = vmatpush1.bf16.msra.mxu0 0
        %3553 = vmatprep.subr.bf16.mxu0 0
        %3554 = vmatpush1.bf16.msra.mxu0 0
        %3555 = vmatprep.mubr.bf16.mxu0 0
        %3556 = vmatmul.mubr.bf16.gmra.mrb[0].mxu0 %v3442
        %v3557 = vpop.f32.mrb[0].mxu0
        %v3558 = vadd.f32 %v3503, %v3557
        %v3559 = vpop.f32.mrb[0].mxu0
        %v3560 = vpop.f32.mrb[0].mxu0
        %v3561 = vpop.f32.mrb[0].mxu0
        %3562 = vdwg.mxu0
        %v3563 = vmul.f32 %v3558, %v3558
        %v3564 = vsel %vm3485, %v3563, 0.0
        %3565 = vadd.xlane.f32.xlu0 %v3564
        %v3566 = vpop.xlane.xlu0 %3565
        %v3567 = vadd.f32 %v3566, 1e-08
        %v3568 = vrsqrt.pop %v3567
        %v3569 = vmul.f32 %v3558, %v3568
        %p3570 = scmp.eq.s32.totalorder %s89, 0
        // Predicated region
        $region181: #{_lambda_.1} parent=147 // pred_check
          %p3571 = pneg %p3570
        $region182: #{_lambda_.1} parent=147 // pred_check_branch
          %3573 = sbr.rel (%p3571) target = $region184
        $region183: #{_lambda_.1} parent=147 // pred_region
          %3574 = vst.msk [vmem:[#allocation2] sm:$0x3] %vm3485, %v3491
          %s3575 = scalar_lea.vmem [#allocation2], 2
          %3576 = vst.msk [vmem:[%s3575] sm:$0x3] %vm3485, %v3569
          %vm3577 = vcmask 0
          %3578 = vst.msk [vmem:[#allocation17] sm:$0x1] %vm3577, 0.0
        $region184: #{_lambda_.1} parent=147 // pred_fallthru
          _
        %p3579 = scmp.eq.s32.totalorder %s89, 1
        // Predicated region
        $region185: #{_lambda_.1} parent=147 // pred_check
          %p3580 = pneg %p3579
        $region186: #{_lambda_.1} parent=147 // pred_check_branch
          %3582 = sbr.rel (%p3580) target = $region188
        $region187: #{_lambda_.1} parent=147 // pred_region
          %v3583 = vld [vmem:[#allocation2] sm:$0x3]
          %v3584 = vsub.f32 %v3491, %v3583
          %v3585 = vmul.f32 %v3584, %v3584
          %v3586 = vsel %vm3485, %v3585, 0.0
          %3587 = vadd.xlane.f32.xlu0 %v3586
          %v3588 = vpop.xlane.xlu0 %3587
          %v3589 = vadd.f32 %v3588, 1e-08
          %v3590 = vrsqrt.pop %v3589
          %v3591 = vmul.f32 %v3584, %v3590
          %v3592 = vld [vmem:[#allocation14] sm:$0x1]
          %v3594 = vlaneseq
          %v3595 = vshrl.u32 %v3594, 7
          %v3596 = vsub.s32 0, %v3595
          %v3597 = vrot.slane %v3592, %v3596
          %v3599 = vmul.f32 %v3591, %v3597
          %v3600 = vsel %vm3485, %v3599, 0.0
          %3601 = vadd.xlane.f32.xlu0 %v3600
          %v3602 = vpop.xlane.xlu0 %3601
          %v3603 = vsub.f32 1.0, %v3602
          %vm3604 = vcmask 1024
          %v3605 = vsel %vm3604, %v3603, 0.0
          %3606 = vadd.xlane.f32.xlu0 %v3605
          %v3607 = vpop.xlane.xlu0 %3606
          %v3608 = vrot.slane %v3607, 4
          %v3609 = vadd.f32 %v3607, %v3608
          %v3610 = vrot.slane %v3609, 2
          %v3611 = vadd.f32 %v3609, %v3610
          %v3612 = vrot.slane %v3611, 1
          %v3613 = vadd.f32 %v3611, %v3612
          %s3614 = vtos %v3613
          %v3615 = vstv %s3614
          %v3616 = vrcp.pop 2.0
          %v3617 = vmul.f32 %v3615, %v3616
          %v3618 = vadd.f32 %v3617, 0.0
          %s3619 = scalar_lea.vmem [#allocation2], 2
          %v3620 = vld [vmem:[%s3619] sm:$0x3]
          %v3621 = vsub.f32 %v3569, %v3620
          %v3622 = vmul.f32 %v3621, %v3621
          %v3623 = vsel %vm3485, %v3622, 0.0
          %3624 = vadd.xlane.f32.xlu0 %v3623
          %v3625 = vpop.xlane.xlu0 %3624
          %v3626 = vadd.f32 %v3625, 1e-08
          %v3627 = vrsqrt.pop %v3626
          %v3628 = vmul.f32 %v3621, %v3627
          %v3629 = vld [vmem:[#allocation15] sm:$0x1]
          %v3631 = vlaneseq
          %v3632 = vshrl.u32 %v3631, 7
          %v3633 = vsub.s32 0, %v3632
          %v3634 = vrot.slane %v3629, %v3633
          %v3636 = vmul.f32 %v3628, %v3634
          %v3637 = vsel %vm3485, %v3636, 0.0
          %3638 = vadd.xlane.f32.xlu0 %v3637
          %v3639 = vpop.xlane.xlu0 %3638
          %v3640 = vsub.f32 1.0, %v3639
          %v3641 = vsel %vm3604, %v3640, 0.0
          %3642 = vadd.xlane.f32.xlu0 %v3641
          %v3643 = vpop.xlane.xlu0 %3642
          %v3644 = vrot.slane %v3643, 4
          %v3645 = vadd.f32 %v3643, %v3644
          %v3646 = vrot.slane %v3645, 2
          %v3647 = vadd.f32 %v3645, %v3646
          %v3648 = vrot.slane %v3647, 1
          %v3649 = vadd.f32 %v3647, %v3648
          %s3650 = vtos %v3649
          %v3651 = vstv %s3650
          %v3652 = vmul.f32 %v3651, %v3616
          %v3653 = vmul.f32 %v3652, 0.5
          %v3654 = vadd.f32 %v3618, %v3653
          %vm3655 = vcmask 0
          %3656 = vst.msk [vmem:[#allocation17] sm:$0x1] %vm3655, %v3654
        $region188: #{_lambda_.1} parent=147 // pred_fallthru
          _
        %p3657 = scmp.lt.s32.totalorder %s89, 1
        %s3658 = scalar_select %p3657, %s89, 1
        %s3659 = smul.addr %s3658, 4
        %s3660 = smul.addr %s3659, 4
        %s3661 = scalar_lea.vmem %s65, %s3660
        // Predicated region
        $region189: #{_lambda_.1} parent=147 // pred_check
          %p3662 = pneg %p849
        $region190: #{_lambda_.1} parent=147 // pred_check_branch
          %3664 = sbr.rel (%p3662) target = $region192
        $region191: #{_lambda_.1} parent=147 // pred_region
          _
        $region192: #{_lambda_.1} parent=147 // pred_fallthru
          _
        // Predicated region
        $region193: #{_lambda_.1} parent=147 // pred_check
          %p3665 = pneg %p870
        $region194: #{_lambda_.1} parent=147 // pred_check_branch
          %3667 = sbr.rel (%p3665) target = $region196
        $region195: #{_lambda_.1} parent=147 // pred_region
          %s3669 = ssub.s32 16, 16
          %3670 = vsyncadd [#allocation5], %s3669
          %s3672 = sshll.u32 [#allocation17], 4
          %s3673 = int_to_ptr.vmem [resolvable:$true] %s3672
          %3675 = dma.vmem_to_hbm [thread:$0]  %s3673, 16, %s67, [#allocation5]
        $region196: #{_lambda_.1} parent=147 // pred_fallthru
          _
        // Predicated region
        $region197: #{_lambda_.1} parent=147 // pred_check
          %p3676 = pneg %p870
        $region198: #{_lambda_.1} parent=147 // pred_check_branch
          %3678 = sbr.rel (%p3676) target = $region200
        $region199: #{_lambda_.1} parent=147 // pred_region
          %3679 = dma.done [#allocation5], 16
        $region200: #{_lambda_.1} parent=147 // pred_fallthru
          _
      $region148: #{_lambda_.1} parent=5 // pred_fallthru
        _
      %p3680 = scmp.le.s32.totalorder 2, %s84
      // Predicated region
      $region201: #{_lambda_.1} parent=5 // pred_check
        %p3681 = pneg %p3680
      $region202: #{_lambda_.1} parent=5 // pred_check_branch
        %3683 = sbr.rel (%p3681) target = $region204
      $region203: #{_lambda_.1} parent=5 // pred_region
        %s3684 = ssub.s32 %s84, 2
        // Predicated region
        $region205: #{_lambda_.1} parent=203 // pred_check
          %p3685 = pneg %p855
        $region206: #{_lambda_.1} parent=203 // pred_check_branch
          %3687 = sbr.rel (%p3685) target = $region208
        $region207: #{_lambda_.1} parent=203 // pred_region
          %p3688 = scmp.lt.s32.totalorder %s90, 1
          %s3689 = scalar_select %p3688, %s90, 1
          %s3690 = smul.addr %s3689, 4
          %s3691 = smul.addr %s3690, 4
          %s3692 = scalar_lea.vmem %s65, %s3691
        $region208: #{_lambda_.1} parent=203 // pred_fallthru
          _
      $region204: #{_lambda_.1} parent=5 // pred_fallthru
        _
    $region6: #{_lambda_.1} parent=1 // loop_footer
      %s88 = sadd.s32 1, %s84
    $region7: #{_lambda_.1} parent=1 // loop_footer_branch
      %83 = sbr.rel target = $region3
    $region8: #{_lambda_.1} parent=1 // loop_exit
      _
    %3693 = vsyncpa [#allocation4], 1
    %s3694 = scalar_lea.sflag [#allocation4], 1
    %3695 = vsyncpa %s3694, 1
    %3696 = vsyncpa [#allocation7], 1
    %s3697 = scalar_lea.sflag [#allocation7], 1
    %3698 = vsyncpa %s3697, 1
    %3699 = vsyncpa [#allocation10], 1
    %s3700 = scalar_lea.sflag [#allocation10], 1
    %3701 = vsyncpa %s3700, 1
    %3702 = vsyncpa [#allocation13], 1
    %3703 = vsyncpa [#allocation16], 1
    %3704 = vsyncpa [#allocation5], 1
    %s3705 = scalar_lea.sflag [#allocation5], 1
    %3706 = vsyncpa %s3705, 1

</llo_original>
